<compile_context>
chip_gen: v7x
topology: tpu7x:2x2x1
jax: 0.10.0
libtpu: 0.0.40
codegen_flags: <defaults>
</compile_context>

<pallas_src>
import numpy as np
import jax
import jax.numpy as jnp
from jax.experimental import pallas as pl
from jax.experimental.pallas import tpu as pltpu

EMBED = 768
NUM_HEADS = 12
HEAD_DIM = EMBED // NUM_HEADS          # 64
KV_LEN = 512                           # fixed by the module's .view(..., 512, 768)
N_CONTEXT = 2                          # stand-in for opt.n_context


def _make_kernel(bblk, lq):
    """Kernel for one grid step holding `bblk` flattened-batch rows."""
    def kernel(encT_ref, qk_ref, wvT_ref, bfold_ref, out_ref):
        wvT = wvT_ref[...]                        # (12, 768) bf16 (already * 1/LQ)
        b_fold = bfold_ref[0, 0]                  # f32 scalar
        for i in range(bblk):                     # small static unrolled loop
            encT = encT_ref[i]                    # (768, 512) bf16  (enc^T)
            qk = qk_ref[i]                        # (12*LQ, 768) bf16

            # All-head attention scores in one MXU matmul: (96,768)@(768,512)
            s = jnp.dot(qk, encT, preferred_element_type=jnp.float32)  # (96,512)

            # Row softmax over the 512 keys (f32 on EUP/VPU).
            m = jnp.max(s, axis=-1, keepdims=True)
            e = jnp.exp(s - m)
            rs = jnp.sum(e, axis=-1, keepdims=True)
            p = e * pl.reciprocal(rs, approx=False)                    # (96,512)

            # Per-head sum over the LQ query rows -> (12, 512) (sublane reduce).
            g = jnp.sum(p.reshape(NUM_HEADS, lq, KV_LEN), axis=1)

            # Folded V / out-proj / pred path: (12,768)@(768,512) -> (12,512)
            vfoldT = jnp.dot(wvT, encT, preferred_element_type=jnp.float32)

            logit = jnp.sum(g * vfoldT) + b_fold
            pred = jax.nn.sigmoid(logit)
            out_ref[i] = jnp.full((8, 128), pred, dtype=out_ref.dtype)
    return kernel


def _pick_bblk(bn):
    """Batch rows per grid step, but keep >= 2 grid steps (v7x megacore)."""
    for b in (4, 3, 2):
        if bn % b == 0 and bn // b >= 2:
            return b
    return 1


def lca_forward(encoder_last_hidden_state, gen_tokens_embeddings, params,
                n_context=N_CONTEXT):
    B = encoder_last_hidden_state.shape[0]
    att = encoder_last_hidden_state.reshape(B * n_context, KV_LEN, EMBED)
    BN, LQ, _ = gen_tokens_embeddings.shape
    assert BN == B * n_context
    assert LQ % 8 == 0, "LQ must be a multiple of 8 for the in-kernel reshape"

    wq, wk, wv, bq, bk, bv, wo, bo, pw = params
    del bk  # cancels exactly under softmax (shift invariance along the KV index)

    f32 = jnp.float32
    gen = gen_tokens_embeddings.astype(f32)

    # ---- hoisted Q projection, K weights folded into per-head "QK" rows ----
    #   s_h[q,k] = scale * (q_h[q,:] + bq_h) . k_h[k,:]
    #            = (scale * (q_h + bq_h) @ wk_h) . enc[k,:]      (exact)
    q = gen @ wq.T + bq[0]                                       # (BN, LQ, 768)
    qh = q.reshape(BN, LQ, NUM_HEADS, HEAD_DIM)
    wkh = wk.reshape(NUM_HEADS, HEAD_DIM, EMBED)
    scale = 1.0 / float(np.sqrt(HEAD_DIM))
    qk = jnp.einsum('bqhd,hde->bhqe', qh, wkh) * scale           # (BN,12,LQ,768)
    qk = qk.reshape(BN, NUM_HEADS * LQ, EMBED).astype(jnp.bfloat16)

    # ---- fold V proj + out-proj + mean-pool + pred layer (all linear, exact) ----
    pw_vec = pw[0]                                               # (768,)
    w_fold = wo.T @ pw_vec                                       # (768,)
    wvfoldT = jnp.einsum('hd,hde->he',
                         w_fold.reshape(NUM_HEADS, HEAD_DIM),
                         wv.reshape(NUM_HEADS, HEAD_DIM, EMBED))  # (12, 768)
    wvfoldT = (wvfoldT * (1.0 / LQ)).astype(jnp.bfloat16)         # mean-pool folded
    b_fold = jnp.dot(bv[0], w_fold) + jnp.dot(bo[0], pw_vec)      # scalar (exact)
    b_fold_tile = jnp.full((1, 128), b_fold, f32)

    # enc pre-transposed so both in-kernel matmuls are plain NN matmuls.
    encT = jnp.transpose(att, (0, 2, 1)).astype(jnp.bfloat16)     # (BN, 768, 512)

    bblk = _pick_bblk(BN)
    grid = (BN // bblk,)

    out = pl.pallas_call(
        _make_kernel(bblk, LQ),
        out_shape=jax.ShapeDtypeStruct((BN, 8, 128), jnp.float32),
        grid_spec=pltpu.PrefetchScalarGridSpec(
            num_scalar_prefetch=0,
            grid=grid,
            in_specs=[
                pl.BlockSpec((bblk, EMBED, KV_LEN), lambda b: (b, 0, 0)),          # enc^T
                pl.BlockSpec((bblk, NUM_HEADS * LQ, EMBED), lambda b: (b, 0, 0)),  # QK
                pl.BlockSpec((NUM_HEADS, EMBED), lambda b: (0, 0)),                # wvfoldT
                pl.BlockSpec((1, 128), lambda b: (0, 0)),                          # b_fold
            ],
            out_specs=pl.BlockSpec((bblk, 8, 128), lambda b: (b, 0, 0)),
        ),
        compiler_params=pltpu.CompilerParams(
            dimension_semantics=("parallel",),        # megacore-shardable on v7x
        ),
    )(encT, qk, wvfoldT, b_fold_tile)

    # sigmoid(logit).squeeze() — one scalar per flattened-batch row
    return jnp.squeeze(out[:, 0, 0])


def lca_reference(encoder_last_hidden_state, gen_tokens_embeddings, params,
                  n_context=N_CONTEXT):
    """Pure-JAX f32 reference (mirrors torch.nn.MultiheadAttention math)."""
    wq, wk, wv, bq, bk, bv, wo, bo, pw = params
    B = encoder_last_hidden_state.shape[0]
    att = encoder_last_hidden_state.reshape(B * n_context, KV_LEN, EMBED)
    BN, LQ, _ = gen_tokens_embeddings.shape
    q = gen_tokens_embeddings @ wq.T + bq[0]
    k = att @ wk.T + bk[0]
    v = att @ wv.T + bv[0]
    qh = q.reshape(BN, LQ, NUM_HEADS, HEAD_DIM).transpose(0, 2, 1, 3)
    kh = k.reshape(BN, KV_LEN, NUM_HEADS, HEAD_DIM).transpose(0, 2, 1, 3)
    vh = v.reshape(BN, KV_LEN, NUM_HEADS, HEAD_DIM).transpose(0, 2, 1, 3)
    s = jnp.einsum('bhqd,bhkd->bhqk', qh, kh) / np.sqrt(HEAD_DIM)
    p = jax.nn.softmax(s, axis=-1)
    ctx = jnp.einsum('bhqk,bhkd->bhqd', p, vh).transpose(0, 2, 1, 3).reshape(BN, LQ, EMBED)
    attn_out = ctx @ wo.T + bo[0]
    pooled = attn_out.mean(axis=1)                       # (BN, EMBED)
    logit = pooled @ pw.T                                # (BN, 1)
    return jnp.squeeze(jax.nn.sigmoid(logit))


def make_params(key):
    ks = jax.random.split(key, 9)
    scale = 0.02
    wq = scale * jax.random.normal(ks[0], (EMBED, EMBED), jnp.float32)
    wk = scale * jax.random.normal(ks[1], (EMBED, EMBED), jnp.float32)
    wv = scale * jax.random.normal(ks[2], (EMBED, EMBED), jnp.float32)
    bq = scale * jax.random.normal(ks[3], (1, EMBED), jnp.float32)
    bk = scale * jax.random.normal(ks[4], (1, EMBED), jnp.float32)
    bv = scale * jax.random.normal(ks[5], (1, EMBED), jnp.float32)
    wo = scale * jax.random.normal(ks[6], (EMBED, EMBED), jnp.float32)
    bo = scale * jax.random.normal(ks[7], (1, EMBED), jnp.float32)
    pw = scale * jax.random.normal(ks[8], (1, EMBED), jnp.float32)   # Linear(768,1,bias=False)
    return (wq, wk, wv, bq, bk, bv, wo, bo, pw)


if __name__ == "__main__":
    key = jax.random.PRNGKey(0)
    k_enc, k_gen, k_par = jax.random.split(key, 3)

    B = 2                                # outer batch  -> BN = 4, Bblk = 2, grid = 2
    LQ = 8                               # generated-token sequence length
    # encoder_last_hidden_state: (B, n_context * 512, 768)
    enc = jax.random.normal(k_enc, (B, N_CONTEXT * KV_LEN, EMBED), jnp.float32)
    # gen_tokens_embeddings: (B * n_context, LQ, 768)
    gen = jax.random.normal(k_gen, (B * N_CONTEXT, LQ, EMBED), jnp.float32)
    params = make_params(k_par)

    out = jax.block_until_ready(lca_forward(enc, gen, params))
    ref = jax.block_until_ready(lca_reference(enc, gen, params))
    # bf16 MXU operands (enc^T, QK, wvfoldT) -> loosened tolerance.
    np.testing.assert_allclose(np.asarray(out), np.asarray(ref),
                               atol=1e-2, rtol=1e-2)
    print("KERNEL_OK")
</pallas_src>

<mosaic_0001>
module attributes {stable_mosaic.version = 11 : i64} {
  func.func @kernel(%arg0: i32, %arg1: memref<2x768x512xbf16, #tpu.memory_space<vmem>>, %arg2: memref<2x96x768xbf16, #tpu.memory_space<vmem>>, %arg3: memref<12x768xbf16, #tpu.memory_space<vmem>>, %arg4: memref<1x128xf32, #tpu.memory_space<vmem>>, %arg5: memref<2x8x128xf32, #tpu.memory_space<vmem>>) attributes {dimension_semantics = [#tpu.dimension_semantics<parallel>], iteration_bounds = array<i64: 2>, scalar_prefetch = 0 : i64, scratch_operands = 0 : i64, tpu.core_type = #tpu.core_type<tc>, window_params = [{transform_indices = @transform_0, window_bounds = array<i64: 2, 768, 512>}, {transform_indices = @transform_1, window_bounds = array<i64: 2, 96, 768>}, {pipeline_mode = #tpu.pipeline_mode<synchronous>, transform_indices = @transform_2, window_bounds = array<i64: 12, 768>}, {pipeline_mode = #tpu.pipeline_mode<synchronous>, transform_indices = @transform_3, window_bounds = array<i64: 1, 128>}, {transform_indices = @transform_4, window_bounds = array<i64: 2, 8, 128>}]} {
    %c0 = arith.constant 0 : index
    %c0_0 = arith.constant 0 : index
    %0 = vector.load %arg3[%c0, %c0_0] : memref<12x768xbf16, #tpu.memory_space<vmem>>, vector<12x768xbf16>
    %c0_1 = arith.constant 0 : index
    %c0_2 = arith.constant 0 : index
    %1 = vector.load %arg4[%c0_1, %c0_2] : memref<1x128xf32, #tpu.memory_space<vmem>>, vector<1x1xf32>
    %2 = vector.extract %1[0, 0] : f32 from vector<1x1xf32>
    %c0_3 = arith.constant 0 : index
    %c0_4 = arith.constant 0 : index
    %c0_5 = arith.constant 0 : index
    %3 = vector.load %arg1[%c0_3, %c0_4, %c0_5] : memref<2x768x512xbf16, #tpu.memory_space<vmem>>, vector<1x768x512xbf16>
    %4 = vector.shape_cast %3 : vector<1x768x512xbf16> to vector<768x512xbf16>
    %c0_6 = arith.constant 0 : index
    %c0_7 = arith.constant 0 : index
    %c0_8 = arith.constant 0 : index
    %5 = vector.load %arg2[%c0_6, %c0_7, %c0_8] : memref<2x96x768xbf16, #tpu.memory_space<vmem>>, vector<1x96x768xbf16>
    %6 = vector.shape_cast %5 : vector<1x96x768xbf16> to vector<96x768xbf16>
    %cst = arith.constant dense<0.000000e+00> : vector<96x512xf32>
    %7 = tpu.matmul %6, %4, %cst {dimension_numbers = #tpu.dot_dimension_numbers<[1], [0], [0], [1], [0, 0, 1, 1], [], []>} : vector<96x768xbf16>, vector<768x512xbf16>, vector<96x512xf32> -> vector<96x512xf32>
    %cst_9 = arith.constant dense<0xFF800000> : vector<96xf32>
    %8 = vector.multi_reduction <maximumf>, %7, %cst_9 [1] : vector<96x512xf32> to vector<96xf32>
    %9 = vector.shape_cast %8 : vector<96xf32> to vector<96x1xf32>
    %10 = vector.broadcast %9 : vector<96x1xf32> to vector<96x512xf32>
    %11 = arith.subf %7, %10 : vector<96x512xf32>
    %12 = math.exp %11 : vector<96x512xf32>
    %cst_10 = arith.constant dense<0.000000e+00> : vector<96xf32>
    %13 = vector.multi_reduction <add>, %12, %cst_10 [1] : vector<96x512xf32> to vector<96xf32>
    %14 = vector.shape_cast %13 : vector<96xf32> to vector<96x1xf32>
    %15 = tpu.reciprocal %14 : vector<96x1xf32> -> vector<96x1xf32>
    %16 = vector.broadcast %15 : vector<96x1xf32> to vector<96x512xf32>
    %17 = arith.mulf %12, %16 : vector<96x512xf32>
    %18 = vector.shape_cast %17 : vector<96x512xf32> to vector<12x8x512xf32>
    %cst_11 = arith.constant dense<0.000000e+00> : vector<12x512xf32>
    %19 = vector.multi_reduction <add>, %18, %cst_11 [1] : vector<12x8x512xf32> to vector<12x512xf32>
    %cst_12 = arith.constant dense<0.000000e+00> : vector<12x512xf32>
    %20 = tpu.matmul %0, %4, %cst_12 {dimension_numbers = #tpu.dot_dimension_numbers<[1], [0], [0], [1], [0, 0, 1, 1], [], []>} : vector<12x768xbf16>, vector<768x512xbf16>, vector<12x512xf32> -> vector<12x512xf32>
    %21 = arith.mulf %19, %20 : vector<12x512xf32>
    %22 = vector.shape_cast %21 : vector<12x512xf32> to vector<1x12x512xf32>
    %cst_13 = arith.constant dense<0.000000e+00> : vector<1xf32>
    %23 = vector.multi_reduction <add>, %22, %cst_13 [1, 2] : vector<1x12x512xf32> to vector<1xf32>
    %24 = vector.shape_cast %23 : vector<1xf32> to vector<1x1x1xf32>
    %25 = vector.extract %24[0, 0, 0] : f32 from vector<1x1x1xf32>
    %26 = arith.addf %25, %2 : f32
    %27 = arith.negf %26 : f32
    %28 = math.exp %27 : f32
    %cst_14 = arith.constant 1.000000e+00 : f32
    %29 = arith.addf %cst_14, %28 : f32
    %30 = arith.divf %cst_14, %29 : f32
    %31 = vector.broadcast %30 : f32 to vector<8x128xf32>
    %c0_15 = arith.constant 0 : index
    %c0_16 = arith.constant 0 : index
    %c0_17 = arith.constant 0 : index
    %32 = vector.load %arg5[%c0_15, %c0_16, %c0_17] : memref<2x8x128xf32, #tpu.memory_space<vmem>>, vector<1x8x128xf32>
    %33 = vector.shape_cast %32 : vector<1x8x128xf32> to vector<8x128xf32>
    %34 = vector.shape_cast %31 : vector<8x128xf32> to vector<1x8x128xf32>
    tpu.vector_store %arg5[%c0_15, %c0_16, %c0_17], %34 {strides = array<i32>} : memref<2x8x128xf32, #tpu.memory_space<vmem>>, vector<1x8x128xf32>,
    %c1 = arith.constant 1 : index
    %c0_18 = arith.constant 0 : index
    %c0_19 = arith.constant 0 : index
    %35 = vector.load %arg1[%c1, %c0_18, %c0_19] : memref<2x768x512xbf16, #tpu.memory_space<vmem>>, vector<1x768x512xbf16>
    %36 = vector.shape_cast %35 : vector<1x768x512xbf16> to vector<768x512xbf16>
    %c1_20 = arith.constant 1 : index
    %c0_21 = arith.constant 0 : index
    %c0_22 = arith.constant 0 : index
    %37 = vector.load %arg2[%c1_20, %c0_21, %c0_22] : memref<2x96x768xbf16, #tpu.memory_space<vmem>>, vector<1x96x768xbf16>
    %38 = vector.shape_cast %37 : vector<1x96x768xbf16> to vector<96x768xbf16>
    %cst_23 = arith.constant dense<0.000000e+00> : vector<96x512xf32>
    %39 = tpu.matmul %38, %36, %cst_23 {dimension_numbers = #tpu.dot_dimension_numbers<[1], [0], [0], [1], [0, 0, 1, 1], [], []>} : vector<96x768xbf16>, vector<768x512xbf16>, vector<96x512xf32> -> vector<96x512xf32>
    %cst_24 = arith.constant dense<0xFF800000> : vector<96xf32>
    %40 = vector.multi_reduction <maximumf>, %39, %cst_24 [1] : vector<96x512xf32> to vector<96xf32>
    %41 = vector.shape_cast %40 : vector<96xf32> to vector<96x1xf32>
    %42 = vector.broadcast %41 : vector<96x1xf32> to vector<96x512xf32>
    %43 = arith.subf %39, %42 : vector<96x512xf32>
    %44 = math.exp %43 : vector<96x512xf32>
    %cst_25 = arith.constant dense<0.000000e+00> : vector<96xf32>
    %45 = vector.multi_reduction <add>, %44, %cst_25 [1] : vector<96x512xf32> to vector<96xf32>
    %46 = vector.shape_cast %45 : vector<96xf32> to vector<96x1xf32>
    %47 = tpu.reciprocal %46 : vector<96x1xf32> -> vector<96x1xf32>
    %48 = vector.broadcast %47 : vector<96x1xf32> to vector<96x512xf32>
    %49 = arith.mulf %44, %48 : vector<96x512xf32>
    %50 = vector.shape_cast %49 : vector<96x512xf32> to vector<12x8x512xf32>
    %cst_26 = arith.constant dense<0.000000e+00> : vector<12x512xf32>
    %51 = vector.multi_reduction <add>, %50, %cst_26 [1] : vector<12x8x512xf32> to vector<12x512xf32>
    %cst_27 = arith.constant dense<0.000000e+00> : vector<12x512xf32>
    %52 = tpu.matmul %0, %36, %cst_27 {dimension_numbers = #tpu.dot_dimension_numbers<[1], [0], [0], [1], [0, 0, 1, 1], [], []>} : vector<12x768xbf16>, vector<768x512xbf16>, vector<12x512xf32> -> vector<12x512xf32>
    %53 = arith.mulf %51, %52 : vector<12x512xf32>
    %54 = vector.shape_cast %53 : vector<12x512xf32> to vector<1x12x512xf32>
    %cst_28 = arith.constant dense<0.000000e+00> : vector<1xf32>
    %55 = vector.multi_reduction <add>, %54, %cst_28 [1, 2] : vector<1x12x512xf32> to vector<1xf32>
    %56 = vector.shape_cast %55 : vector<1xf32> to vector<1x1x1xf32>
    %57 = vector.extract %56[0, 0, 0] : f32 from vector<1x1x1xf32>
    %58 = arith.addf %57, %2 : f32
    %59 = arith.negf %58 : f32
    %60 = math.exp %59 : f32
    %cst_29 = arith.constant 1.000000e+00 : f32
    %61 = arith.addf %cst_29, %60 : f32
    %62 = arith.divf %cst_29, %61 : f32
    %63 = vector.broadcast %62 : f32 to vector<8x128xf32>
    %c1_30 = arith.constant 1 : index
    %c0_31 = arith.constant 0 : index
    %c0_32 = arith.constant 0 : index
    %64 = vector.load %arg5[%c1_30, %c0_31, %c0_32] : memref<2x8x128xf32, #tpu.memory_space<vmem>>, vector<1x8x128xf32>
    %65 = vector.shape_cast %64 : vector<1x8x128xf32> to vector<8x128xf32>
    %66 = vector.shape_cast %63 : vector<8x128xf32> to vector<1x8x128xf32>
    tpu.vector_store %arg5[%c1_30, %c0_31, %c0_32], %66 {strides = array<i32>} : memref<2x8x128xf32, #tpu.memory_space<vmem>>, vector<1x8x128xf32>,
    return
  }
  func.func @transform_0(%arg0: i32) -> (i32, i32, i32) {
    %c0_i32 = arith.constant 0 : i32
    %c0_i32_0 = arith.constant 0 : i32
    %c0_i32_1 = arith.constant 0 : i32
    return %arg0, %c0_i32, %c0_i32_0 : i32, i32, i32
  }
  func.func @transform_1(%arg0: i32) -> (i32, i32, i32) {
    %c0_i32 = arith.constant 0 : i32
    %c0_i32_0 = arith.constant 0 : i32
    %c0_i32_1 = arith.constant 0 : i32
    return %arg0, %c0_i32, %c0_i32_0 : i32, i32, i32
  }
  func.func @transform_2(%arg0: i32) -> (i32, i32) {
    %c0_i32 = arith.constant 0 : i32
    %c0_i32_0 = arith.constant 0 : i32
    %c0_i32_1 = arith.constant 0 : i32
    return %c0_i32, %c0_i32_0 : i32, i32
  }
  func.func @transform_3(%arg0: i32) -> (i32, i32) {
    %c0_i32 = arith.constant 0 : i32
    %c0_i32_0 = arith.constant 0 : i32
    %c0_i32_1 = arith.constant 0 : i32
    return %c0_i32, %c0_i32_0 : i32, i32
  }
  func.func @transform_4(%arg0: i32) -> (i32, i32, i32) {
    %c0_i32 = arith.constant 0 : i32
    %c0_i32_0 = arith.constant 0 : i32
    %c0_i32_1 = arith.constant 0 : i32
    return %arg0, %c0_i32, %c0_i32_0 : i32, i32, i32
  }
}

</mosaic_0001>

<llo_original>
// kernel: tpu_custom_call.1
$region0: #{tpu_custom_call.1}
  #allocation0 [shape = 'u32[]', space=smem, size = 0x4, offset = 0x4, fixed_abs, tag = 'smem constant byte address 0x4 - core index']
  #allocation1 [shape = 'u32[144,128]{1,0:T(1,128)}', space=vmem, size = 0x12000, scoped, tag = 'internal scratch']
  %s0 = inlined_call_operand.hbm [shape: bf16[4,768,512], index: 0, kind: input, shape index: {}]
  %s1 = inlined_call_operand.hbm [shape: bf16[4,96,768], index: 1, kind: input, shape index: {}]
  %s2 = inlined_call_operand.hbm [shape: bf16[12,768], index: 2, kind: input, shape index: {}]
  %s3 = inlined_call_operand.hbm [shape: f32[1,128], index: 3, kind: input, shape index: {}]
  %s4 = inlined_call_operand.hbm [shape: f32[4,8,128], index: 4, kind: output, shape index: {}]
  %s5 = sld [smem:[#allocation0]]
  $region65: #{tpu_custom_call.1} parent=0
    _
  %s7 = ssub.s32 1, %s5
  %s8 = scalar_select 0, %s7, %s5
  $region1: #{tpu_custom_call.1} parent=0
    #allocation2 [shape = 'u8[3145728]{0}', space=vmem, size = 0x300000, scoped, tag = 'input window, operand 0']
    #allocation3 [shape = 's32[2]{0}', space=sflag, size = 0x8, scoped, tag = 'scoped memory for tpu_custom_call.1']
    #allocation4 [shape = 's32[2]{0}', space=sflag, size = 0x8, scoped, tag = 'scoped memory for tpu_custom_call.1']
    #allocation5 [shape = 'u8[589824]{0}', space=vmem, size = 0x90000, scoped, tag = 'input window, operand 1']
    #allocation6 [shape = 's32[2]{0}', space=sflag, size = 0x8, scoped, tag = 'scoped memory for tpu_custom_call.1']
    #allocation7 [shape = 'u8[24576]{0}', space=vmem, size = 0x6000, scoped, tag = 'input window, operand 2, single buffered']
    #allocation8 [shape = 'u8[512]{0}', space=vmem, size = 0x400, scoped, tag = 'input window, operand 3, single buffered']
    #allocation9 [shape = 's32[1]{0}', space=sflag, size = 0x4, scoped, tag = 'scoped memory for tpu_custom_call.1']
    #allocation10 [shape = 'u8[16384]{0}', space=vmem, size = 0x4000, scoped, tag = 'output window, operand 0']
    %9 = vsyncpa [#allocation3], 0
    %s10 = scalar_lea.sflag [#allocation3], 1
    %11 = vsyncpa %s10, 0
    %12 = vsyncpa [#allocation6], 0
    %s13 = scalar_lea.sflag [#allocation6], 1
    %14 = vsyncpa %s13, 0
    %15 = vsyncpa [#allocation9], 0
    %16 = vsyncpa [#allocation4], 0
    %s17 = scalar_lea.sflag [#allocation4], 1
    %18 = vsyncpa %s17, 0
    loop: start=0, step=1, limit=4
    $region2: #{tpu_custom_call.1} parent=1 // loop_pre_header
      _
    $region3: #{tpu_custom_call.1} parent=1 // loop_header
      %s20 = sphi 0, %s24
      %p21 = scmp.ge.s32.totalorder %s20, 4
      %s30 = sphi 0, %s32
      %s33 = sphi 0, %s30
      %s34 = sphi 0, %s33
      %s50 = sphi 0, %s34
      %s56 = sphi 0, %s58
      %s59 = sphi 0, %s56
      %s60 = sphi 0, %s59
      %s76 = sphi 0, %s60
      %s80 = sphi 0, %s80
      %s82 = sphi 0, %s80
      %s83 = sphi 0, %s82
      %s97 = sphi 0, %s83
      %s101 = sphi 0, %s101
      %s103 = sphi 0, %s101
      %s104 = sphi 0, %s103
      %s118 = sphi 0, %s104
      %s124 = sphi 0, %s126
      %s127 = sphi 0, %s124
      %s128 = sphi 0, %s127
      %s144 = sphi 0, %s128
    $region4: #{tpu_custom_call.1} parent=1 // loop_header_branch
      %23 = sbr.rel (%p21) target = $region8
    $region5: #{tpu_custom_call.1} parent=1 // loop_body
      %s25 = ssub.s32 %s20, 1
      %s26 = ssub.s32 %s20, 2
      %s27 = sadd.s32 %s20, 1
      %s28 = ssub.s32 %s20, %s27
      %p29 = scmp.eq.s32.totalorder %s28, 0
      %s31 = sadd.s32 %s30, 1
      %s32 = scalar_select %p29, %s30, %s31
      %p35 = pneg %p29
      %p36 = scmp.eq.s32.totalorder %s20, 1
      %p37 = por %p35, %p36
      %p38 = scmp.ne.s32.totalorder %s30, %s33
      %p39 = scmp.eq.s32.totalorder %s20, 0
      %p40 = por %p38, %p39
      %p41 = scmp.ne.s32.totalorder %s30, %s33
      %p42 = scmp.eq.s32.totalorder %s25, 1
      %p43 = por %p41, %p42
      %p44 = scmp.ne.s32.totalorder %s33, %s34
      %p45 = scmp.eq.s32.totalorder %s25, 0
      %p46 = por %p44, %p45
      %p47 = scmp.ne.s32.totalorder %s33, %s34
      %p48 = scmp.eq.s32.totalorder %s26, 1
      %p49 = por %p47, %p48
      %p51 = scmp.ne.s32.totalorder %s34, %s50
      %p52 = scmp.eq.s32.totalorder %s26, 0
      %p53 = por %p51, %p52
      %s54 = ssub.s32 %s20, %s27
      %p55 = scmp.eq.s32.totalorder %s54, 0
      %s57 = sadd.s32 %s56, 1
      %s58 = scalar_select %p55, %s56, %s57
      %p61 = pneg %p55
      %p62 = scmp.eq.s32.totalorder %s20, 1
      %p63 = por %p61, %p62
      %p64 = scmp.ne.s32.totalorder %s56, %s59
      %p65 = scmp.eq.s32.totalorder %s20, 0
      %p66 = por %p64, %p65
      %p67 = scmp.ne.s32.totalorder %s56, %s59
      %p68 = scmp.eq.s32.totalorder %s25, 1
      %p69 = por %p67, %p68
      %p70 = scmp.ne.s32.totalorder %s59, %s60
      %p71 = scmp.eq.s32.totalorder %s25, 0
      %p72 = por %p70, %p71
      %p73 = scmp.ne.s32.totalorder %s59, %s60
      %p74 = scmp.eq.s32.totalorder %s26, 1
      %p75 = por %p73, %p74
      %p77 = scmp.ne.s32.totalorder %s60, %s76
      %p78 = scmp.eq.s32.totalorder %s26, 0
      %p79 = por %p77, %p78
      %s81 = sadd.s32 %s80, 1
      %p84 = scmp.eq.s32.totalorder %s20, 1
      %p85 = scmp.ne.s32.totalorder %s80, %s82
      %p86 = scmp.eq.s32.totalorder %s20, 0
      %p87 = por %p85, %p86
      %p88 = scmp.ne.s32.totalorder %s80, %s82
      %p89 = scmp.eq.s32.totalorder %s25, 1
      %p90 = por %p88, %p89
      %p91 = scmp.ne.s32.totalorder %s82, %s83
      %p92 = scmp.eq.s32.totalorder %s25, 0
      %p93 = por %p91, %p92
      %p94 = scmp.ne.s32.totalorder %s82, %s83
      %p95 = scmp.eq.s32.totalorder %s26, 1
      %p96 = por %p94, %p95
      %p98 = scmp.ne.s32.totalorder %s83, %s97
      %p99 = scmp.eq.s32.totalorder %s26, 0
      %p100 = por %p98, %p99
      %s102 = sadd.s32 %s101, 1
      %p105 = scmp.eq.s32.totalorder %s20, 1
      %p106 = scmp.ne.s32.totalorder %s101, %s103
      %p107 = scmp.eq.s32.totalorder %s20, 0
      %p108 = por %p106, %p107
      %p109 = scmp.ne.s32.totalorder %s101, %s103
      %p110 = scmp.eq.s32.totalorder %s25, 1
      %p111 = por %p109, %p110
      %p112 = scmp.ne.s32.totalorder %s103, %s104
      %p113 = scmp.eq.s32.totalorder %s25, 0
      %p114 = por %p112, %p113
      %p115 = scmp.ne.s32.totalorder %s103, %s104
      %p116 = scmp.eq.s32.totalorder %s26, 1
      %p117 = por %p115, %p116
      %p119 = scmp.ne.s32.totalorder %s104, %s118
      %p120 = scmp.eq.s32.totalorder %s26, 0
      %p121 = por %p119, %p120
      %s122 = ssub.s32 %s20, %s27
      %p123 = scmp.eq.s32.totalorder %s122, 0
      %s125 = sadd.s32 %s124, 1
      %s126 = scalar_select %p123, %s124, %s125
      %p129 = pneg %p123
      %p130 = scmp.eq.s32.totalorder %s20, 1
      %p131 = por %p129, %p130
      %p132 = scmp.ne.s32.totalorder %s124, %s127
      %p133 = scmp.eq.s32.totalorder %s20, 0
      %p134 = por %p132, %p133
      %p135 = scmp.ne.s32.totalorder %s124, %s127
      %p136 = scmp.eq.s32.totalorder %s25, 1
      %p137 = por %p135, %p136
      %p138 = scmp.ne.s32.totalorder %s127, %s128
      %p139 = scmp.eq.s32.totalorder %s25, 0
      %p140 = por %p138, %p139
      %p141 = scmp.ne.s32.totalorder %s127, %s128
      %p142 = scmp.eq.s32.totalorder %s26, 1
      %p143 = por %p141, %p142
      %p145 = scmp.ne.s32.totalorder %s128, %s144
      %p146 = scmp.eq.s32.totalorder %s26, 0
      %p147 = por %p145, %p146
      %p148 = scmp.le.s32.totalorder 1, %s20
      %p149 = scmp.lt.s32.totalorder %s20, 3
      %p150 = pnand %p148, %p149
      %p151 = pneg %p150
      // Predicated region
      $region9: #{tpu_custom_call.1} parent=5 // pred_check
        _
      $region10: #{tpu_custom_call.1} parent=5 // pred_check_branch
        %153 = sbr.rel (%p150) target = $region12
      $region11: #{tpu_custom_call.1} parent=5 // pred_region
        %s154 = ssub.s32 %s20, 1
        // Predicated region
        $region13: #{tpu_custom_call.1} parent=11 // pred_check
          %p155 = pneg %p93
        $region14: #{tpu_custom_call.1} parent=11 // pred_check_branch
          %157 = sbr.rel (%p155) target = $region16
        $region15: #{tpu_custom_call.1} parent=11 // pred_region
          %s159 = ssub.s32 768, 768
          %160 = vsyncadd [#allocation6], %s159
          %s161 = sshll.u32 [#allocation7], 4
          %s162 = int_to_ptr.vmem [resolvable:$true] %s161
          %167 = dma.hbm_to_vmem [thread:$0]  %s2, 768, %s162, [#allocation6], 384, 384, 24
        $region16: #{tpu_custom_call.1} parent=11 // pred_fallthru
          _
        // Predicated region
        $region17: #{tpu_custom_call.1} parent=11 // pred_check
          %p168 = pneg %p114
        $region18: #{tpu_custom_call.1} parent=11 // pred_check_branch
          %170 = sbr.rel (%p168) target = $region20
        $region19: #{tpu_custom_call.1} parent=11 // pred_region
          %s172 = ssub.s32 16, 16
          %173 = vsyncadd [#allocation9], %s172
          %s175 = sshll.u32 [#allocation8], 4
          %s176 = int_to_ptr.vmem [resolvable:$true] %s175
          %178 = dma.hbm_to_vmem [thread:$0]  %s3, 16, %s176, [#allocation9]
        $region20: #{tpu_custom_call.1} parent=11 // pred_fallthru
          _
      $region12: #{tpu_custom_call.1} parent=5 // pred_fallthru
        _
      %p179 = scmp.lt.s32.totalorder %s20, 2
      // Predicated region
      $region21: #{tpu_custom_call.1} parent=5 // pred_check
        %p180 = pneg %p179
      $region22: #{tpu_custom_call.1} parent=5 // pred_check_branch
        %182 = sbr.rel (%p180) target = $region24
      $region23: #{tpu_custom_call.1} parent=5 // pred_region
        // Predicated region
        $region25: #{tpu_custom_call.1} parent=23 // pred_check
          %p183 = pneg %p40
        $region26: #{tpu_custom_call.1} parent=23 // pred_check_branch
          %185 = sbr.rel (%p183) target = $region28
        $region27: #{tpu_custom_call.1} parent=23 // pred_region
          %s186 = sand.u32 %s30, 1
          %s187 = scalar_lea.sflag [#allocation3], %s186
          %s188 = sand.u32 %s30, 1
          %s189 = smul.addr %s188, 3072
          %s190 = scalar_lea.vmem [#allocation2], %s189
          %s191 = smul.u32 2, %s20
          %s193 = ssub.s32 49152, 49152
          %194 = vsyncadd %s187, %s193
          %s195 = smul.addr %s191, 384
          %s196 = smul.addr %s195, 64
          %s197 = scalar_lea.hbm %s0, %s196
          %s198 = sshll.u32 %s190, 4
          %s199 = int_to_ptr.vmem [resolvable:$true] %s198
          %204 = dma.hbm_to_vmem [thread:$0]  %s197, 49152, %s199, %s187, 256, 256, 16
        $region28: #{tpu_custom_call.1} parent=23 // pred_fallthru
          _
        // Predicated region
        $region29: #{tpu_custom_call.1} parent=23 // pred_check
          %p205 = pneg %p66
        $region30: #{tpu_custom_call.1} parent=23 // pred_check_branch
          %207 = sbr.rel (%p205) target = $region32
        $region31: #{tpu_custom_call.1} parent=23 // pred_region
          %s208 = sand.u32 %s20, 1
          %s209 = scalar_lea.sflag [#allocation6], %s208
          %s210 = sand.u32 %s56, 1
          %s211 = smul.addr %s210, 576
          %s212 = scalar_lea.vmem [#allocation5], %s211
          %s213 = smul.u32 2, %s20
          %s215 = ssub.s32 9216, 9216
          %216 = vsyncadd %s209, %s215
          %s217 = smul.addr %s213, 72
          %s218 = smul.addr %s217, 64
          %s219 = scalar_lea.hbm %s1, %s218
          %s220 = sshll.u32 %s212, 4
          %s221 = int_to_ptr.vmem [resolvable:$true] %s220
          %226 = dma.hbm_to_vmem [thread:$0]  %s219, 9216, %s221, %s209, 384, 384, 24
        $region32: #{tpu_custom_call.1} parent=23 // pred_fallthru
          _
      $region24: #{tpu_custom_call.1} parent=5 // pred_fallthru
        _
      %p227 = scmp.le.s32.totalorder 1, %s20
      %p228 = scmp.lt.s32.totalorder %s20, 3
      %p229 = pnand %p227, %p228
      %p230 = pneg %p229
      // Predicated region
      $region33: #{tpu_custom_call.1} parent=5 // pred_check
        _
      $region34: #{tpu_custom_call.1} parent=5 // pred_check_branch
        %232 = sbr.rel (%p229) target = $region36
      $region35: #{tpu_custom_call.1} parent=5 // pred_region
        %s233 = ssub.s32 %s20, 1
        %s234 = sand.u32 %s33, 1
        %s235 = scalar_lea.sflag [#allocation3], %s234
        %s236 = sand.u32 %s33, 1
        %s237 = smul.addr %s236, 3072
        %s238 = scalar_lea.vmem [#allocation2], %s237
        // Predicated region
        $region37: #{tpu_custom_call.1} parent=35 // pred_check
          %p239 = pneg %p46
        $region38: #{tpu_custom_call.1} parent=35 // pred_check_branch
          %241 = sbr.rel (%p239) target = $region40
        $region39: #{tpu_custom_call.1} parent=35 // pred_region
          %242 = dma.done %s235, 49152
        $region40: #{tpu_custom_call.1} parent=35 // pred_fallthru
          _
        %s243 = sand.u32 %s25, 1
        %s244 = scalar_lea.sflag [#allocation6], %s243
        %s245 = sand.u32 %s59, 1
        %s246 = smul.addr %s245, 576
        %s247 = scalar_lea.vmem [#allocation5], %s246
        // Predicated region
        $region41: #{tpu_custom_call.1} parent=35 // pred_check
          %p248 = pneg %p72
        $region42: #{tpu_custom_call.1} parent=35 // pred_check_branch
          %250 = sbr.rel (%p248) target = $region44
        $region43: #{tpu_custom_call.1} parent=35 // pred_region
          %251 = dma.done %s244, 9216
        $region44: #{tpu_custom_call.1} parent=35 // pred_fallthru
          _
        // Predicated region
        $region45: #{tpu_custom_call.1} parent=35 // pred_check
          %p252 = pneg %p93
        $region46: #{tpu_custom_call.1} parent=35 // pred_check_branch
          %254 = sbr.rel (%p252) target = $region48
        $region47: #{tpu_custom_call.1} parent=35 // pred_region
          %255 = dma.done [#allocation6], 768
        $region48: #{tpu_custom_call.1} parent=35 // pred_fallthru
          _
        // Predicated region
        $region49: #{tpu_custom_call.1} parent=35 // pred_check
          %p256 = pneg %p114
        $region50: #{tpu_custom_call.1} parent=35 // pred_check_branch
          %258 = sbr.rel (%p256) target = $region52
        $region51: #{tpu_custom_call.1} parent=35 // pred_region
          %259 = dma.done [#allocation9], 16
        $region52: #{tpu_custom_call.1} parent=35 // pred_fallthru
          _
        %s260 = sand.u32 %s33, 1
        %s261 = scalar_lea.sflag [#allocation3], %s260
        %s262 = sand.u32 %s33, 1
        %s263 = smul.addr %s262, 3072
        %s264 = scalar_lea.vmem [#allocation2], %s263
        %p265 = pneg %p46
        %p266 = pneg %p43
        %s267 = sand.u32 %s25, 1
        %s268 = scalar_lea.sflag [#allocation6], %s267
        %s269 = sand.u32 %s59, 1
        %s270 = smul.addr %s269, 576
        %s271 = scalar_lea.vmem [#allocation5], %s270
        %p272 = pneg %p72
        %p273 = pneg %p69
        %p274 = pneg %p93
        %p275 = pneg %p90
        %p276 = pneg %p114
        %p277 = pneg %p111
        %p278 = pneg %p140
        %p279 = pneg %p137
        %s280 = sand.u32 %s127, 1
        %s281 = scalar_lea.sflag [#allocation4], %s280
        %s282 = sand.u32 %s127, 1
        %s283 = smul.addr %s282, 16
        %s284 = scalar_lea.vmem [#allocation10], %s283
        %s285 = smul.u32 2, %s25
        %s286 = smul.u32 2, %s25
        %s287 = smul.u32 2, %s25
        %v288 = vld [vmem:[#allocation7] sm:$0xff]
        %v289 = vld [vmem:[#allocation7 + $0x8] sm:$0xff]
        %v290 = vld [vmem:[#allocation7 + $0x10] sm:$0xff]
        %v291 = vld [vmem:[#allocation7 + $0x18] sm:$0x33]
        %v292 = vld [vmem:[#allocation7 + $0x20] sm:$0x33]
        %v293 = vld [vmem:[#allocation7 + $0x28] sm:$0x33]
        %v294 = vld [vmem:[#allocation8] sm:$0x1]
        %s295 = vtos %v294
        %v296 = vld [vmem:[%s238] sm:$0xff]
        %v297 = vld [vmem:[%s238 + $0x8] sm:$0xff]
        %v298 = vld [vmem:[%s238 + $0x10] sm:$0xff]
        %v299 = vld [vmem:[%s238 + $0x18] sm:$0xff]
        %v300 = vld [vmem:[%s238 + $0x20] sm:$0xff]
        %v301 = vld [vmem:[%s238 + $0x28] sm:$0xff]
        %v302 = vld [vmem:[%s238 + $0x30] sm:$0xff]
        %v303 = vld [vmem:[%s238 + $0x38] sm:$0xff]
        %v304 = vld [vmem:[%s238 + $0x40] sm:$0xff]
        %v305 = vld [vmem:[%s238 + $0x48] sm:$0xff]
        %v306 = vld [vmem:[%s238 + $0x50] sm:$0xff]
        %v307 = vld [vmem:[%s238 + $0x58] sm:$0xff]
        %v308 = vld [vmem:[%s238 + $0x60] sm:$0xff]
        %v309 = vld [vmem:[%s238 + $0x68] sm:$0xff]
        %v310 = vld [vmem:[%s238 + $0x70] sm:$0xff]
        %v311 = vld [vmem:[%s238 + $0x78] sm:$0xff]
        %v312 = vld [vmem:[%s238 + $0x80] sm:$0xff]
        %v313 = vld [vmem:[%s238 + $0x88] sm:$0xff]
        %v314 = vld [vmem:[%s238 + $0x90] sm:$0xff]
        %v315 = vld [vmem:[%s238 + $0x98] sm:$0xff]
        %v316 = vld [vmem:[%s238 + $0xa0] sm:$0xff]
        %v317 = vld [vmem:[%s238 + $0xa8] sm:$0xff]
        %v318 = vld [vmem:[%s238 + $0xb0] sm:$0xff]
        %v319 = vld [vmem:[%s238 + $0xb8] sm:$0xff]
        %v320 = vld [vmem:[%s238 + $0xc0] sm:$0xff]
        %v321 = vld [vmem:[%s238 + $0xc8] sm:$0xff]
        %v322 = vld [vmem:[%s238 + $0xd0] sm:$0xff]
        %v323 = vld [vmem:[%s238 + $0xd8] sm:$0xff]
        %v324 = vld [vmem:[%s238 + $0xe0] sm:$0xff]
        %v325 = vld [vmem:[%s238 + $0xe8] sm:$0xff]
        %v326 = vld [vmem:[%s238 + $0xf0] sm:$0xff]
        %v327 = vld [vmem:[%s238 + $0xf8] sm:$0xff]
        %v328 = vld [vmem:[%s238 + $0x100] sm:$0xff]
        %v329 = vld [vmem:[%s238 + $0x108] sm:$0xff]
        %v330 = vld [vmem:[%s238 + $0x110] sm:$0xff]
        %v331 = vld [vmem:[%s238 + $0x118] sm:$0xff]
        %v332 = vld [vmem:[%s238 + $0x120] sm:$0xff]
        %v333 = vld [vmem:[%s238 + $0x128] sm:$0xff]
        %v334 = vld [vmem:[%s238 + $0x130] sm:$0xff]
        %v335 = vld [vmem:[%s238 + $0x138] sm:$0xff]
        %v336 = vld [vmem:[%s238 + $0x140] sm:$0xff]
        %v337 = vld [vmem:[%s238 + $0x148] sm:$0xff]
        %v338 = vld [vmem:[%s238 + $0x150] sm:$0xff]
        %v339 = vld [vmem:[%s238 + $0x158] sm:$0xff]
        %v340 = vld [vmem:[%s238 + $0x160] sm:$0xff]
        %v341 = vld [vmem:[%s238 + $0x168] sm:$0xff]
        %v342 = vld [vmem:[%s238 + $0x170] sm:$0xff]
        %v343 = vld [vmem:[%s238 + $0x178] sm:$0xff]
        %v344 = vld [vmem:[%s238 + $0x180] sm:$0xff]
        %v345 = vld [vmem:[%s238 + $0x188] sm:$0xff]
        %v346 = vld [vmem:[%s238 + $0x190] sm:$0xff]
        %v347 = vld [vmem:[%s238 + $0x198] sm:$0xff]
        %v348 = vld [vmem:[%s238 + $0x1a0] sm:$0xff]
        %v349 = vld [vmem:[%s238 + $0x1a8] sm:$0xff]
        %v350 = vld [vmem:[%s238 + $0x1b0] sm:$0xff]
        %v351 = vld [vmem:[%s238 + $0x1b8] sm:$0xff]
        %v352 = vld [vmem:[%s238 + $0x1c0] sm:$0xff]
        %v353 = vld [vmem:[%s238 + $0x1c8] sm:$0xff]
        %v354 = vld [vmem:[%s238 + $0x1d0] sm:$0xff]
        %v355 = vld [vmem:[%s238 + $0x1d8] sm:$0xff]
        %v356 = vld [vmem:[%s238 + $0x1e0] sm:$0xff]
        %v357 = vld [vmem:[%s238 + $0x1e8] sm:$0xff]
        %v358 = vld [vmem:[%s238 + $0x1f0] sm:$0xff]
        %v359 = vld [vmem:[%s238 + $0x1f8] sm:$0xff]
        %v360 = vld [vmem:[%s238 + $0x200] sm:$0xff]
        %v361 = vld [vmem:[%s238 + $0x208] sm:$0xff]
        %v362 = vld [vmem:[%s238 + $0x210] sm:$0xff]
        %v363 = vld [vmem:[%s238 + $0x218] sm:$0xff]
        %v364 = vld [vmem:[%s238 + $0x220] sm:$0xff]
        %v365 = vld [vmem:[%s238 + $0x228] sm:$0xff]
        %v366 = vld [vmem:[%s238 + $0x230] sm:$0xff]
        %v367 = vld [vmem:[%s238 + $0x238] sm:$0xff]
        %v368 = vld [vmem:[%s238 + $0x240] sm:$0xff]
        %v369 = vld [vmem:[%s238 + $0x248] sm:$0xff]
        %v370 = vld [vmem:[%s238 + $0x250] sm:$0xff]
        %v371 = vld [vmem:[%s238 + $0x258] sm:$0xff]
        %v372 = vld [vmem:[%s238 + $0x260] sm:$0xff]
        %v373 = vld [vmem:[%s238 + $0x268] sm:$0xff]
        %v374 = vld [vmem:[%s238 + $0x270] sm:$0xff]
        %v375 = vld [vmem:[%s238 + $0x278] sm:$0xff]
        %v376 = vld [vmem:[%s238 + $0x280] sm:$0xff]
        %v377 = vld [vmem:[%s238 + $0x288] sm:$0xff]
        %v378 = vld [vmem:[%s238 + $0x290] sm:$0xff]
        %v379 = vld [vmem:[%s238 + $0x298] sm:$0xff]
        %v380 = vld [vmem:[%s238 + $0x2a0] sm:$0xff]
        %v381 = vld [vmem:[%s238 + $0x2a8] sm:$0xff]
        %v382 = vld [vmem:[%s238 + $0x2b0] sm:$0xff]
        %v383 = vld [vmem:[%s238 + $0x2b8] sm:$0xff]
        %v384 = vld [vmem:[%s238 + $0x2c0] sm:$0xff]
        %v385 = vld [vmem:[%s238 + $0x2c8] sm:$0xff]
        %v386 = vld [vmem:[%s238 + $0x2d0] sm:$0xff]
        %v387 = vld [vmem:[%s238 + $0x2d8] sm:$0xff]
        %v388 = vld [vmem:[%s238 + $0x2e0] sm:$0xff]
        %v389 = vld [vmem:[%s238 + $0x2e8] sm:$0xff]
        %v390 = vld [vmem:[%s238 + $0x2f0] sm:$0xff]
        %v391 = vld [vmem:[%s238 + $0x2f8] sm:$0xff]
        %v392 = vld [vmem:[%s238 + $0x300] sm:$0xff]
        %v393 = vld [vmem:[%s238 + $0x308] sm:$0xff]
        %v394 = vld [vmem:[%s238 + $0x310] sm:$0xff]
        %v395 = vld [vmem:[%s238 + $0x318] sm:$0xff]
        %v396 = vld [vmem:[%s238 + $0x320] sm:$0xff]
        %v397 = vld [vmem:[%s238 + $0x328] sm:$0xff]
        %v398 = vld [vmem:[%s238 + $0x330] sm:$0xff]
        %v399 = vld [vmem:[%s238 + $0x338] sm:$0xff]
        %v400 = vld [vmem:[%s238 + $0x340] sm:$0xff]
        %v401 = vld [vmem:[%s238 + $0x348] sm:$0xff]
        %v402 = vld [vmem:[%s238 + $0x350] sm:$0xff]
        %v403 = vld [vmem:[%s238 + $0x358] sm:$0xff]
        %v404 = vld [vmem:[%s238 + $0x360] sm:$0xff]
        %v405 = vld [vmem:[%s238 + $0x368] sm:$0xff]
        %v406 = vld [vmem:[%s238 + $0x370] sm:$0xff]
        %v407 = vld [vmem:[%s238 + $0x378] sm:$0xff]
        %v408 = vld [vmem:[%s238 + $0x380] sm:$0xff]
        %v409 = vld [vmem:[%s238 + $0x388] sm:$0xff]
        %v410 = vld [vmem:[%s238 + $0x390] sm:$0xff]
        %v411 = vld [vmem:[%s238 + $0x398] sm:$0xff]
        %v412 = vld [vmem:[%s238 + $0x3a0] sm:$0xff]
        %v413 = vld [vmem:[%s238 + $0x3a8] sm:$0xff]
        %v414 = vld [vmem:[%s238 + $0x3b0] sm:$0xff]
        %v415 = vld [vmem:[%s238 + $0x3b8] sm:$0xff]
        %v416 = vld [vmem:[%s238 + $0x3c0] sm:$0xff]
        %v417 = vld [vmem:[%s238 + $0x3c8] sm:$0xff]
        %v418 = vld [vmem:[%s238 + $0x3d0] sm:$0xff]
        %v419 = vld [vmem:[%s238 + $0x3d8] sm:$0xff]
        %v420 = vld [vmem:[%s238 + $0x3e0] sm:$0xff]
        %v421 = vld [vmem:[%s238 + $0x3e8] sm:$0xff]
        %v422 = vld [vmem:[%s238 + $0x3f0] sm:$0xff]
        %v423 = vld [vmem:[%s238 + $0x3f8] sm:$0xff]
        %v424 = vld [vmem:[%s238 + $0x400] sm:$0xff]
        %v425 = vld [vmem:[%s238 + $0x408] sm:$0xff]
        %v426 = vld [vmem:[%s238 + $0x410] sm:$0xff]
        %v427 = vld [vmem:[%s238 + $0x418] sm:$0xff]
        %v428 = vld [vmem:[%s238 + $0x420] sm:$0xff]
        %v429 = vld [vmem:[%s238 + $0x428] sm:$0xff]
        %v430 = vld [vmem:[%s238 + $0x430] sm:$0xff]
        %v431 = vld [vmem:[%s238 + $0x438] sm:$0xff]
        %v432 = vld [vmem:[%s238 + $0x440] sm:$0xff]
        %v433 = vld [vmem:[%s238 + $0x448] sm:$0xff]
        %v434 = vld [vmem:[%s238 + $0x450] sm:$0xff]
        %v435 = vld [vmem:[%s238 + $0x458] sm:$0xff]
        %v436 = vld [vmem:[%s238 + $0x460] sm:$0xff]
        %v437 = vld [vmem:[%s238 + $0x468] sm:$0xff]
        %v438 = vld [vmem:[%s238 + $0x470] sm:$0xff]
        %v439 = vld [vmem:[%s238 + $0x478] sm:$0xff]
        %v440 = vld [vmem:[%s238 + $0x480] sm:$0xff]
        %v441 = vld [vmem:[%s238 + $0x488] sm:$0xff]
        %v442 = vld [vmem:[%s238 + $0x490] sm:$0xff]
        %v443 = vld [vmem:[%s238 + $0x498] sm:$0xff]
        %v444 = vld [vmem:[%s238 + $0x4a0] sm:$0xff]
        %v445 = vld [vmem:[%s238 + $0x4a8] sm:$0xff]
        %v446 = vld [vmem:[%s238 + $0x4b0] sm:$0xff]
        %v447 = vld [vmem:[%s238 + $0x4b8] sm:$0xff]
        %v448 = vld [vmem:[%s238 + $0x4c0] sm:$0xff]
        %v449 = vld [vmem:[%s238 + $0x4c8] sm:$0xff]
        %v450 = vld [vmem:[%s238 + $0x4d0] sm:$0xff]
        %v451 = vld [vmem:[%s238 + $0x4d8] sm:$0xff]
        %v452 = vld [vmem:[%s238 + $0x4e0] sm:$0xff]
        %v453 = vld [vmem:[%s238 + $0x4e8] sm:$0xff]
        %v454 = vld [vmem:[%s238 + $0x4f0] sm:$0xff]
        %v455 = vld [vmem:[%s238 + $0x4f8] sm:$0xff]
        %v456 = vld [vmem:[%s238 + $0x500] sm:$0xff]
        %v457 = vld [vmem:[%s238 + $0x508] sm:$0xff]
        %v458 = vld [vmem:[%s238 + $0x510] sm:$0xff]
        %v459 = vld [vmem:[%s238 + $0x518] sm:$0xff]
        %v460 = vld [vmem:[%s238 + $0x520] sm:$0xff]
        %v461 = vld [vmem:[%s238 + $0x528] sm:$0xff]
        %v462 = vld [vmem:[%s238 + $0x530] sm:$0xff]
        %v463 = vld [vmem:[%s238 + $0x538] sm:$0xff]
        %v464 = vld [vmem:[%s238 + $0x540] sm:$0xff]
        %v465 = vld [vmem:[%s238 + $0x548] sm:$0xff]
        %v466 = vld [vmem:[%s238 + $0x550] sm:$0xff]
        %v467 = vld [vmem:[%s238 + $0x558] sm:$0xff]
        %v468 = vld [vmem:[%s238 + $0x560] sm:$0xff]
        %v469 = vld [vmem:[%s238 + $0x568] sm:$0xff]
        %v470 = vld [vmem:[%s238 + $0x570] sm:$0xff]
        %v471 = vld [vmem:[%s238 + $0x578] sm:$0xff]
        %v472 = vld [vmem:[%s238 + $0x580] sm:$0xff]
        %v473 = vld [vmem:[%s238 + $0x588] sm:$0xff]
        %v474 = vld [vmem:[%s238 + $0x590] sm:$0xff]
        %v475 = vld [vmem:[%s238 + $0x598] sm:$0xff]
        %v476 = vld [vmem:[%s238 + $0x5a0] sm:$0xff]
        %v477 = vld [vmem:[%s238 + $0x5a8] sm:$0xff]
        %v478 = vld [vmem:[%s238 + $0x5b0] sm:$0xff]
        %v479 = vld [vmem:[%s238 + $0x5b8] sm:$0xff]
        %v480 = vld [vmem:[%s238 + $0x5c0] sm:$0xff]
        %v481 = vld [vmem:[%s238 + $0x5c8] sm:$0xff]
        %v482 = vld [vmem:[%s238 + $0x5d0] sm:$0xff]
        %v483 = vld [vmem:[%s238 + $0x5d8] sm:$0xff]
        %v484 = vld [vmem:[%s238 + $0x5e0] sm:$0xff]
        %v485 = vld [vmem:[%s238 + $0x5e8] sm:$0xff]
        %v486 = vld [vmem:[%s238 + $0x5f0] sm:$0xff]
        %v487 = vld [vmem:[%s238 + $0x5f8] sm:$0xff]
        %v488 = vld [vmem:[%s247] sm:$0xff]
        %v489 = vld [vmem:[%s247 + $0x8] sm:$0xff]
        %v490 = vld [vmem:[%s247 + $0x10] sm:$0xff]
        %v491 = vld [vmem:[%s247 + $0x18] sm:$0xff]
        %v492 = vld [vmem:[%s247 + $0x20] sm:$0xff]
        %v493 = vld [vmem:[%s247 + $0x28] sm:$0xff]
        %v494 = vld [vmem:[%s247 + $0x30] sm:$0xff]
        %v495 = vld [vmem:[%s247 + $0x38] sm:$0xff]
        %v496 = vld [vmem:[%s247 + $0x40] sm:$0xff]
        %v497 = vld [vmem:[%s247 + $0x48] sm:$0xff]
        %v498 = vld [vmem:[%s247 + $0x50] sm:$0xff]
        %v499 = vld [vmem:[%s247 + $0x58] sm:$0xff]
        %v500 = vld [vmem:[%s247 + $0x60] sm:$0xff]
        %v501 = vld [vmem:[%s247 + $0x68] sm:$0xff]
        %v502 = vld [vmem:[%s247 + $0x70] sm:$0xff]
        %v503 = vld [vmem:[%s247 + $0x78] sm:$0xff]
        %v504 = vld [vmem:[%s247 + $0x80] sm:$0xff]
        %v505 = vld [vmem:[%s247 + $0x88] sm:$0xff]
        %v506 = vld [vmem:[%s247 + $0x90] sm:$0xff]
        %v507 = vld [vmem:[%s247 + $0x98] sm:$0xff]
        %v508 = vld [vmem:[%s247 + $0xa0] sm:$0xff]
        %v509 = vld [vmem:[%s247 + $0xa8] sm:$0xff]
        %v510 = vld [vmem:[%s247 + $0xb0] sm:$0xff]
        %v511 = vld [vmem:[%s247 + $0xb8] sm:$0xff]
        %v512 = vld [vmem:[%s247 + $0xc0] sm:$0xff]
        %v513 = vld [vmem:[%s247 + $0xc8] sm:$0xff]
        %v514 = vld [vmem:[%s247 + $0xd0] sm:$0xff]
        %v515 = vld [vmem:[%s247 + $0xd8] sm:$0xff]
        %v516 = vld [vmem:[%s247 + $0xe0] sm:$0xff]
        %v517 = vld [vmem:[%s247 + $0xe8] sm:$0xff]
        %v518 = vld [vmem:[%s247 + $0xf0] sm:$0xff]
        %v519 = vld [vmem:[%s247 + $0xf8] sm:$0xff]
        %v520 = vld [vmem:[%s247 + $0x100] sm:$0xff]
        %v521 = vld [vmem:[%s247 + $0x108] sm:$0xff]
        %v522 = vld [vmem:[%s247 + $0x110] sm:$0xff]
        %v523 = vld [vmem:[%s247 + $0x118] sm:$0xff]
        %v560 = vunpack.c.l.b16 %v488
        %v561 = vunpack.c.h.b16 %v488
        %v562 = vunpack.c.l.b16 %v489
        %v563 = vunpack.c.h.b16 %v489
        %v564 = vunpack.c.l.b16 %v490
        %v565 = vunpack.c.h.b16 %v490
        %v566 = vunpack.c.l.b16 %v491
        %v567 = vunpack.c.h.b16 %v491
        %v568 = vunpack.c.l.b16 %v492
        %v569 = vunpack.c.h.b16 %v492
        %v570 = vunpack.c.l.b16 %v493
        %v571 = vunpack.c.h.b16 %v493
        %v572 = vunpack.c.l.b16 %v494
        %v573 = vunpack.c.h.b16 %v494
        %v574 = vunpack.c.l.b16 %v495
        %v575 = vunpack.c.h.b16 %v495
        %v576 = vunpack.c.l.b16 %v496
        %v577 = vunpack.c.h.b16 %v496
        %v578 = vunpack.c.l.b16 %v497
        %v579 = vunpack.c.h.b16 %v497
        %v580 = vunpack.c.l.b16 %v498
        %v581 = vunpack.c.h.b16 %v498
        %v582 = vunpack.c.l.b16 %v499
        %v583 = vunpack.c.h.b16 %v499
        %v584 = vunpack.c.l.b16 %v500
        %v585 = vunpack.c.h.b16 %v500
        %v586 = vunpack.c.l.b16 %v501
        %v587 = vunpack.c.h.b16 %v501
        %v588 = vunpack.c.l.b16 %v502
        %v589 = vunpack.c.h.b16 %v502
        %v590 = vunpack.c.l.b16 %v503
        %v591 = vunpack.c.h.b16 %v503
        %v592 = vunpack.c.l.b16 %v504
        %v593 = vunpack.c.h.b16 %v504
        %v594 = vunpack.c.l.b16 %v505
        %v595 = vunpack.c.h.b16 %v505
        %v596 = vunpack.c.l.b16 %v506
        %v597 = vunpack.c.h.b16 %v506
        %v598 = vunpack.c.l.b16 %v507
        %v599 = vunpack.c.h.b16 %v507
        %v600 = vunpack.c.l.b16 %v508
        %v601 = vunpack.c.h.b16 %v508
        %v602 = vunpack.c.l.b16 %v509
        %v603 = vunpack.c.h.b16 %v509
        %v604 = vunpack.c.l.b16 %v510
        %v605 = vunpack.c.h.b16 %v510
        %v606 = vunpack.c.l.b16 %v511
        %v607 = vunpack.c.h.b16 %v511
        %v608 = vunpack.c.l.b16 %v512
        %v609 = vunpack.c.h.b16 %v512
        %v610 = vunpack.c.l.b16 %v513
        %v611 = vunpack.c.h.b16 %v513
        %v612 = vunpack.c.l.b16 %v514
        %v613 = vunpack.c.h.b16 %v514
        %v614 = vunpack.c.l.b16 %v515
        %v615 = vunpack.c.h.b16 %v515
        %v616 = vunpack.c.l.b16 %v516
        %v617 = vunpack.c.h.b16 %v516
        %v618 = vunpack.c.l.b16 %v517
        %v619 = vunpack.c.h.b16 %v517
        %v620 = vunpack.c.l.b16 %v518
        %v621 = vunpack.c.h.b16 %v518
        %v622 = vunpack.c.l.b16 %v519
        %v623 = vunpack.c.h.b16 %v519
        %v624 = vunpack.c.l.b16 %v520
        %v625 = vunpack.c.h.b16 %v520
        %v626 = vunpack.c.l.b16 %v521
        %v627 = vunpack.c.h.b16 %v521
        %v628 = vunpack.c.l.b16 %v522
        %v629 = vunpack.c.h.b16 %v522
        %v630 = vunpack.c.l.b16 %v523
        %v631 = vunpack.c.h.b16 %v523
        %v632 = vpack.c.b16 %v566, %v560
        %v633 = vpack.c.b16 %v567, %v561
        %v634 = vpack.c.b16 %v568, %v562
        %v635 = vpack.c.b16 %v569, %v563
        %v636 = vpack.c.b16 %v570, %v564
        %v637 = vpack.c.b16 %v571, %v565
        %v638 = vpack.c.b16 %v578, %v572
        %v639 = vpack.c.b16 %v579, %v573
        %v640 = vpack.c.b16 %v580, %v574
        %v641 = vpack.c.b16 %v581, %v575
        %v642 = vpack.c.b16 %v582, %v576
        %v643 = vpack.c.b16 %v583, %v577
        %v644 = vpack.c.b16 %v590, %v584
        %v645 = vpack.c.b16 %v591, %v585
        %v646 = vpack.c.b16 %v592, %v586
        %v647 = vpack.c.b16 %v593, %v587
        %v648 = vpack.c.b16 %v594, %v588
        %v649 = vpack.c.b16 %v595, %v589
        %v650 = vpack.c.b16 %v602, %v596
        %v651 = vpack.c.b16 %v603, %v597
        %v652 = vpack.c.b16 %v604, %v598
        %v653 = vpack.c.b16 %v605, %v599
        %v654 = vpack.c.b16 %v606, %v600
        %v655 = vpack.c.b16 %v607, %v601
        %v656 = vpack.c.b16 %v614, %v608
        %v657 = vpack.c.b16 %v615, %v609
        %v658 = vpack.c.b16 %v616, %v610
        %v659 = vpack.c.b16 %v617, %v611
        %v660 = vpack.c.b16 %v618, %v612
        %v661 = vpack.c.b16 %v619, %v613
        %v662 = vpack.c.b16 %v626, %v620
        %v663 = vpack.c.b16 %v627, %v621
        %v664 = vpack.c.b16 %v628, %v622
        %v665 = vpack.c.b16 %v629, %v623
        %v666 = vpack.c.b16 %v630, %v624
        %v667 = vpack.c.b16 %v631, %v625
        %v896 = vunpack.c.l.b16 %v296
        %v897 = vunpack.c.h.b16 %v296
        %v898 = vunpack.c.l.b16 %v297
        %v899 = vunpack.c.h.b16 %v297
        %v900 = vunpack.c.l.b16 %v298
        %v901 = vunpack.c.h.b16 %v298
        %v902 = vunpack.c.l.b16 %v299
        %v903 = vunpack.c.h.b16 %v299
        %v904 = vunpack.c.l.b16 %v300
        %v905 = vunpack.c.h.b16 %v300
        %v906 = vunpack.c.l.b16 %v301
        %v907 = vunpack.c.h.b16 %v301
        %v908 = vunpack.c.l.b16 %v302
        %v909 = vunpack.c.h.b16 %v302
        %v910 = vunpack.c.l.b16 %v303
        %v911 = vunpack.c.h.b16 %v303
        %v912 = vunpack.c.l.b16 %v304
        %v913 = vunpack.c.h.b16 %v304
        %v914 = vunpack.c.l.b16 %v305
        %v915 = vunpack.c.h.b16 %v305
        %v916 = vunpack.c.l.b16 %v306
        %v917 = vunpack.c.h.b16 %v306
        %v918 = vunpack.c.l.b16 %v307
        %v919 = vunpack.c.h.b16 %v307
        %v920 = vunpack.c.l.b16 %v308
        %v921 = vunpack.c.h.b16 %v308
        %v922 = vunpack.c.l.b16 %v309
        %v923 = vunpack.c.h.b16 %v309
        %v924 = vunpack.c.l.b16 %v310
        %v925 = vunpack.c.h.b16 %v310
        %v926 = vunpack.c.l.b16 %v311
        %v927 = vunpack.c.h.b16 %v311
        %v928 = vunpack.c.l.b16 %v312
        %v929 = vunpack.c.h.b16 %v312
        %v930 = vunpack.c.l.b16 %v313
        %v931 = vunpack.c.h.b16 %v313
        %v932 = vunpack.c.l.b16 %v314
        %v933 = vunpack.c.h.b16 %v314
        %v934 = vunpack.c.l.b16 %v315
        %v935 = vunpack.c.h.b16 %v315
        %v936 = vunpack.c.l.b16 %v316
        %v937 = vunpack.c.h.b16 %v316
        %v938 = vunpack.c.l.b16 %v317
        %v939 = vunpack.c.h.b16 %v317
        %v940 = vunpack.c.l.b16 %v318
        %v941 = vunpack.c.h.b16 %v318
        %v942 = vunpack.c.l.b16 %v319
        %v943 = vunpack.c.h.b16 %v319
        %v944 = vunpack.c.l.b16 %v320
        %v945 = vunpack.c.h.b16 %v320
        %v946 = vunpack.c.l.b16 %v321
        %v947 = vunpack.c.h.b16 %v321
        %v948 = vunpack.c.l.b16 %v322
        %v949 = vunpack.c.h.b16 %v322
        %v950 = vunpack.c.l.b16 %v323
        %v951 = vunpack.c.h.b16 %v323
        %v952 = vunpack.c.l.b16 %v324
        %v953 = vunpack.c.h.b16 %v324
        %v954 = vunpack.c.l.b16 %v325
        %v955 = vunpack.c.h.b16 %v325
        %v956 = vunpack.c.l.b16 %v326
        %v957 = vunpack.c.h.b16 %v326
        %v958 = vunpack.c.l.b16 %v327
        %v959 = vunpack.c.h.b16 %v327
        %v960 = vunpack.c.l.b16 %v328
        %v961 = vunpack.c.h.b16 %v328
        %v962 = vunpack.c.l.b16 %v329
        %v963 = vunpack.c.h.b16 %v329
        %v964 = vunpack.c.l.b16 %v330
        %v965 = vunpack.c.h.b16 %v330
        %v966 = vunpack.c.l.b16 %v331
        %v967 = vunpack.c.h.b16 %v331
        %v968 = vunpack.c.l.b16 %v332
        %v969 = vunpack.c.h.b16 %v332
        %v970 = vunpack.c.l.b16 %v333
        %v971 = vunpack.c.h.b16 %v333
        %v972 = vunpack.c.l.b16 %v334
        %v973 = vunpack.c.h.b16 %v334
        %v974 = vunpack.c.l.b16 %v335
        %v975 = vunpack.c.h.b16 %v335
        %v976 = vunpack.c.l.b16 %v336
        %v977 = vunpack.c.h.b16 %v336
        %v978 = vunpack.c.l.b16 %v337
        %v979 = vunpack.c.h.b16 %v337
        %v980 = vunpack.c.l.b16 %v338
        %v981 = vunpack.c.h.b16 %v338
        %v982 = vunpack.c.l.b16 %v339
        %v983 = vunpack.c.h.b16 %v339
        %v984 = vunpack.c.l.b16 %v340
        %v985 = vunpack.c.h.b16 %v340
        %v986 = vunpack.c.l.b16 %v341
        %v987 = vunpack.c.h.b16 %v341
        %v988 = vunpack.c.l.b16 %v342
        %v989 = vunpack.c.h.b16 %v342
        %v990 = vunpack.c.l.b16 %v343
        %v991 = vunpack.c.h.b16 %v343
        %v992 = vunpack.c.l.b16 %v344
        %v993 = vunpack.c.h.b16 %v344
        %v994 = vunpack.c.l.b16 %v345
        %v995 = vunpack.c.h.b16 %v345
        %v996 = vunpack.c.l.b16 %v346
        %v997 = vunpack.c.h.b16 %v346
        %v998 = vunpack.c.l.b16 %v347
        %v999 = vunpack.c.h.b16 %v347
        %v1000 = vunpack.c.l.b16 %v348
        %v1001 = vunpack.c.h.b16 %v348
        %v1002 = vunpack.c.l.b16 %v349
        %v1003 = vunpack.c.h.b16 %v349
        %v1004 = vunpack.c.l.b16 %v350
        %v1005 = vunpack.c.h.b16 %v350
        %v1006 = vunpack.c.l.b16 %v351
        %v1007 = vunpack.c.h.b16 %v351
        %v1008 = vunpack.c.l.b16 %v352
        %v1009 = vunpack.c.h.b16 %v352
        %v1010 = vunpack.c.l.b16 %v353
        %v1011 = vunpack.c.h.b16 %v353
        %v1012 = vunpack.c.l.b16 %v354
        %v1013 = vunpack.c.h.b16 %v354
        %v1014 = vunpack.c.l.b16 %v355
        %v1015 = vunpack.c.h.b16 %v355
        %v1016 = vunpack.c.l.b16 %v356
        %v1017 = vunpack.c.h.b16 %v356
        %v1018 = vunpack.c.l.b16 %v357
        %v1019 = vunpack.c.h.b16 %v357
        %v1020 = vunpack.c.l.b16 %v358
        %v1021 = vunpack.c.h.b16 %v358
        %v1022 = vunpack.c.l.b16 %v359
        %v1023 = vunpack.c.h.b16 %v359
        %v1024 = vunpack.c.l.b16 %v360
        %v1025 = vunpack.c.h.b16 %v360
        %v1026 = vunpack.c.l.b16 %v361
        %v1027 = vunpack.c.h.b16 %v361
        %v1028 = vunpack.c.l.b16 %v362
        %v1029 = vunpack.c.h.b16 %v362
        %v1030 = vunpack.c.l.b16 %v363
        %v1031 = vunpack.c.h.b16 %v363
        %v1032 = vunpack.c.l.b16 %v364
        %v1033 = vunpack.c.h.b16 %v364
        %v1034 = vunpack.c.l.b16 %v365
        %v1035 = vunpack.c.h.b16 %v365
        %v1036 = vunpack.c.l.b16 %v366
        %v1037 = vunpack.c.h.b16 %v366
        %v1038 = vunpack.c.l.b16 %v367
        %v1039 = vunpack.c.h.b16 %v367
        %v1040 = vunpack.c.l.b16 %v368
        %v1041 = vunpack.c.h.b16 %v368
        %v1042 = vunpack.c.l.b16 %v369
        %v1043 = vunpack.c.h.b16 %v369
        %v1044 = vunpack.c.l.b16 %v370
        %v1045 = vunpack.c.h.b16 %v370
        %v1046 = vunpack.c.l.b16 %v371
        %v1047 = vunpack.c.h.b16 %v371
        %v1048 = vunpack.c.l.b16 %v372
        %v1049 = vunpack.c.h.b16 %v372
        %v1050 = vunpack.c.l.b16 %v373
        %v1051 = vunpack.c.h.b16 %v373
        %v1052 = vunpack.c.l.b16 %v374
        %v1053 = vunpack.c.h.b16 %v374
        %v1054 = vunpack.c.l.b16 %v375
        %v1055 = vunpack.c.h.b16 %v375
        %v1056 = vunpack.c.l.b16 %v376
        %v1057 = vunpack.c.h.b16 %v376
        %v1058 = vunpack.c.l.b16 %v377
        %v1059 = vunpack.c.h.b16 %v377
        %v1060 = vunpack.c.l.b16 %v378
        %v1061 = vunpack.c.h.b16 %v378
        %v1062 = vunpack.c.l.b16 %v379
        %v1063 = vunpack.c.h.b16 %v379
        %v1064 = vunpack.c.l.b16 %v380
        %v1065 = vunpack.c.h.b16 %v380
        %v1066 = vunpack.c.l.b16 %v381
        %v1067 = vunpack.c.h.b16 %v381
        %v1068 = vunpack.c.l.b16 %v382
        %v1069 = vunpack.c.h.b16 %v382
        %v1070 = vunpack.c.l.b16 %v383
        %v1071 = vunpack.c.h.b16 %v383
        %v1072 = vunpack.c.l.b16 %v384
        %v1073 = vunpack.c.h.b16 %v384
        %v1074 = vunpack.c.l.b16 %v385
        %v1075 = vunpack.c.h.b16 %v385
        %v1076 = vunpack.c.l.b16 %v386
        %v1077 = vunpack.c.h.b16 %v386
        %v1078 = vunpack.c.l.b16 %v387
        %v1079 = vunpack.c.h.b16 %v387
        %v1080 = vunpack.c.l.b16 %v388
        %v1081 = vunpack.c.h.b16 %v388
        %v1082 = vunpack.c.l.b16 %v389
        %v1083 = vunpack.c.h.b16 %v389
        %v1084 = vunpack.c.l.b16 %v390
        %v1085 = vunpack.c.h.b16 %v390
        %v1086 = vunpack.c.l.b16 %v391
        %v1087 = vunpack.c.h.b16 %v391
        %v1088 = vunpack.c.l.b16 %v392
        %v1089 = vunpack.c.h.b16 %v392
        %v1090 = vunpack.c.l.b16 %v393
        %v1091 = vunpack.c.h.b16 %v393
        %v1092 = vunpack.c.l.b16 %v394
        %v1093 = vunpack.c.h.b16 %v394
        %v1094 = vunpack.c.l.b16 %v395
        %v1095 = vunpack.c.h.b16 %v395
        %v1096 = vunpack.c.l.b16 %v396
        %v1097 = vunpack.c.h.b16 %v396
        %v1098 = vunpack.c.l.b16 %v397
        %v1099 = vunpack.c.h.b16 %v397
        %v1100 = vunpack.c.l.b16 %v398
        %v1101 = vunpack.c.h.b16 %v398
        %v1102 = vunpack.c.l.b16 %v399
        %v1103 = vunpack.c.h.b16 %v399
        %v1104 = vunpack.c.l.b16 %v400
        %v1105 = vunpack.c.h.b16 %v400
        %v1106 = vunpack.c.l.b16 %v401
        %v1107 = vunpack.c.h.b16 %v401
        %v1108 = vunpack.c.l.b16 %v402
        %v1109 = vunpack.c.h.b16 %v402
        %v1110 = vunpack.c.l.b16 %v403
        %v1111 = vunpack.c.h.b16 %v403
        %v1112 = vunpack.c.l.b16 %v404
        %v1113 = vunpack.c.h.b16 %v404
        %v1114 = vunpack.c.l.b16 %v405
        %v1115 = vunpack.c.h.b16 %v405
        %v1116 = vunpack.c.l.b16 %v406
        %v1117 = vunpack.c.h.b16 %v406
        %v1118 = vunpack.c.l.b16 %v407
        %v1119 = vunpack.c.h.b16 %v407
        %v1120 = vunpack.c.l.b16 %v408
        %v1121 = vunpack.c.h.b16 %v408
        %v1122 = vunpack.c.l.b16 %v409
        %v1123 = vunpack.c.h.b16 %v409
        %v1124 = vunpack.c.l.b16 %v410
        %v1125 = vunpack.c.h.b16 %v410
        %v1126 = vunpack.c.l.b16 %v411
        %v1127 = vunpack.c.h.b16 %v411
        %v1128 = vunpack.c.l.b16 %v412
        %v1129 = vunpack.c.h.b16 %v412
        %v1130 = vunpack.c.l.b16 %v413
        %v1131 = vunpack.c.h.b16 %v413
        %v1132 = vunpack.c.l.b16 %v414
        %v1133 = vunpack.c.h.b16 %v414
        %v1134 = vunpack.c.l.b16 %v415
        %v1135 = vunpack.c.h.b16 %v415
        %v1136 = vunpack.c.l.b16 %v416
        %v1137 = vunpack.c.h.b16 %v416
        %v1138 = vunpack.c.l.b16 %v417
        %v1139 = vunpack.c.h.b16 %v417
        %v1140 = vunpack.c.l.b16 %v418
        %v1141 = vunpack.c.h.b16 %v418
        %v1142 = vunpack.c.l.b16 %v419
        %v1143 = vunpack.c.h.b16 %v419
        %v1144 = vunpack.c.l.b16 %v420
        %v1145 = vunpack.c.h.b16 %v420
        %v1146 = vunpack.c.l.b16 %v421
        %v1147 = vunpack.c.h.b16 %v421
        %v1148 = vunpack.c.l.b16 %v422
        %v1149 = vunpack.c.h.b16 %v422
        %v1150 = vunpack.c.l.b16 %v423
        %v1151 = vunpack.c.h.b16 %v423
        %v1152 = vunpack.c.l.b16 %v424
        %v1153 = vunpack.c.h.b16 %v424
        %v1154 = vunpack.c.l.b16 %v425
        %v1155 = vunpack.c.h.b16 %v425
        %v1156 = vunpack.c.l.b16 %v426
        %v1157 = vunpack.c.h.b16 %v426
        %v1158 = vunpack.c.l.b16 %v427
        %v1159 = vunpack.c.h.b16 %v427
        %v1160 = vunpack.c.l.b16 %v428
        %v1161 = vunpack.c.h.b16 %v428
        %v1162 = vunpack.c.l.b16 %v429
        %v1163 = vunpack.c.h.b16 %v429
        %v1164 = vunpack.c.l.b16 %v430
        %v1165 = vunpack.c.h.b16 %v430
        %v1166 = vunpack.c.l.b16 %v431
        %v1167 = vunpack.c.h.b16 %v431
        %v1168 = vunpack.c.l.b16 %v432
        %v1169 = vunpack.c.h.b16 %v432
        %v1170 = vunpack.c.l.b16 %v433
        %v1171 = vunpack.c.h.b16 %v433
        %v1172 = vunpack.c.l.b16 %v434
        %v1173 = vunpack.c.h.b16 %v434
        %v1174 = vunpack.c.l.b16 %v435
        %v1175 = vunpack.c.h.b16 %v435
        %v1176 = vunpack.c.l.b16 %v436
        %v1177 = vunpack.c.h.b16 %v436
        %v1178 = vunpack.c.l.b16 %v437
        %v1179 = vunpack.c.h.b16 %v437
        %v1180 = vunpack.c.l.b16 %v438
        %v1181 = vunpack.c.h.b16 %v438
        %v1182 = vunpack.c.l.b16 %v439
        %v1183 = vunpack.c.h.b16 %v439
        %v1184 = vunpack.c.l.b16 %v440
        %v1185 = vunpack.c.h.b16 %v440
        %v1186 = vunpack.c.l.b16 %v441
        %v1187 = vunpack.c.h.b16 %v441
        %v1188 = vunpack.c.l.b16 %v442
        %v1189 = vunpack.c.h.b16 %v442
        %v1190 = vunpack.c.l.b16 %v443
        %v1191 = vunpack.c.h.b16 %v443
        %v1192 = vunpack.c.l.b16 %v444
        %v1193 = vunpack.c.h.b16 %v444
        %v1194 = vunpack.c.l.b16 %v445
        %v1195 = vunpack.c.h.b16 %v445
        %v1196 = vunpack.c.l.b16 %v446
        %v1197 = vunpack.c.h.b16 %v446
        %v1198 = vunpack.c.l.b16 %v447
        %v1199 = vunpack.c.h.b16 %v447
        %v1200 = vunpack.c.l.b16 %v448
        %v1201 = vunpack.c.h.b16 %v448
        %v1202 = vunpack.c.l.b16 %v449
        %v1203 = vunpack.c.h.b16 %v449
        %v1204 = vunpack.c.l.b16 %v450
        %v1205 = vunpack.c.h.b16 %v450
        %v1206 = vunpack.c.l.b16 %v451
        %v1207 = vunpack.c.h.b16 %v451
        %v1208 = vunpack.c.l.b16 %v452
        %v1209 = vunpack.c.h.b16 %v452
        %v1210 = vunpack.c.l.b16 %v453
        %v1211 = vunpack.c.h.b16 %v453
        %v1212 = vunpack.c.l.b16 %v454
        %v1213 = vunpack.c.h.b16 %v454
        %v1214 = vunpack.c.l.b16 %v455
        %v1215 = vunpack.c.h.b16 %v455
        %v1216 = vunpack.c.l.b16 %v456
        %v1217 = vunpack.c.h.b16 %v456
        %v1218 = vunpack.c.l.b16 %v457
        %v1219 = vunpack.c.h.b16 %v457
        %v1220 = vunpack.c.l.b16 %v458
        %v1221 = vunpack.c.h.b16 %v458
        %v1222 = vunpack.c.l.b16 %v459
        %v1223 = vunpack.c.h.b16 %v459
        %v1224 = vunpack.c.l.b16 %v460
        %v1225 = vunpack.c.h.b16 %v460
        %v1226 = vunpack.c.l.b16 %v461
        %v1227 = vunpack.c.h.b16 %v461
        %v1228 = vunpack.c.l.b16 %v462
        %v1229 = vunpack.c.h.b16 %v462
        %v1230 = vunpack.c.l.b16 %v463
        %v1231 = vunpack.c.h.b16 %v463
        %v1232 = vunpack.c.l.b16 %v464
        %v1233 = vunpack.c.h.b16 %v464
        %v1234 = vunpack.c.l.b16 %v465
        %v1235 = vunpack.c.h.b16 %v465
        %v1236 = vunpack.c.l.b16 %v466
        %v1237 = vunpack.c.h.b16 %v466
        %v1238 = vunpack.c.l.b16 %v467
        %v1239 = vunpack.c.h.b16 %v467
        %v1240 = vunpack.c.l.b16 %v468
        %v1241 = vunpack.c.h.b16 %v468
        %v1242 = vunpack.c.l.b16 %v469
        %v1243 = vunpack.c.h.b16 %v469
        %v1244 = vunpack.c.l.b16 %v470
        %v1245 = vunpack.c.h.b16 %v470
        %v1246 = vunpack.c.l.b16 %v471
        %v1247 = vunpack.c.h.b16 %v471
        %v1248 = vunpack.c.l.b16 %v472
        %v1249 = vunpack.c.h.b16 %v472
        %v1250 = vunpack.c.l.b16 %v473
        %v1251 = vunpack.c.h.b16 %v473
        %v1252 = vunpack.c.l.b16 %v474
        %v1253 = vunpack.c.h.b16 %v474
        %v1254 = vunpack.c.l.b16 %v475
        %v1255 = vunpack.c.h.b16 %v475
        %v1256 = vunpack.c.l.b16 %v476
        %v1257 = vunpack.c.h.b16 %v476
        %v1258 = vunpack.c.l.b16 %v477
        %v1259 = vunpack.c.h.b16 %v477
        %v1260 = vunpack.c.l.b16 %v478
        %v1261 = vunpack.c.h.b16 %v478
        %v1262 = vunpack.c.l.b16 %v479
        %v1263 = vunpack.c.h.b16 %v479
        %v1264 = vunpack.c.l.b16 %v480
        %v1265 = vunpack.c.h.b16 %v480
        %v1266 = vunpack.c.l.b16 %v481
        %v1267 = vunpack.c.h.b16 %v481
        %v1268 = vunpack.c.l.b16 %v482
        %v1269 = vunpack.c.h.b16 %v482
        %v1270 = vunpack.c.l.b16 %v483
        %v1271 = vunpack.c.h.b16 %v483
        %v1272 = vunpack.c.l.b16 %v484
        %v1273 = vunpack.c.h.b16 %v484
        %v1274 = vunpack.c.l.b16 %v485
        %v1275 = vunpack.c.h.b16 %v485
        %v1276 = vunpack.c.l.b16 %v486
        %v1277 = vunpack.c.h.b16 %v486
        %v1278 = vunpack.c.l.b16 %v487
        %v1279 = vunpack.c.h.b16 %v487
        %v1280 = vpack.c.b16 %v900, %v896
        %v1281 = vpack.c.b16 %v901, %v897
        %v1282 = vpack.c.b16 %v902, %v898
        %v1283 = vpack.c.b16 %v903, %v899
        %v1284 = vpack.c.b16 %v908, %v904
        %v1285 = vpack.c.b16 %v909, %v905
        %v1286 = vpack.c.b16 %v910, %v906
        %v1287 = vpack.c.b16 %v911, %v907
        %v1288 = vpack.c.b16 %v916, %v912
        %v1289 = vpack.c.b16 %v917, %v913
        %v1290 = vpack.c.b16 %v918, %v914
        %v1291 = vpack.c.b16 %v919, %v915
        %v1292 = vpack.c.b16 %v924, %v920
        %v1293 = vpack.c.b16 %v925, %v921
        %v1294 = vpack.c.b16 %v926, %v922
        %v1295 = vpack.c.b16 %v927, %v923
        %v1296 = vpack.c.b16 %v932, %v928
        %v1297 = vpack.c.b16 %v933, %v929
        %v1298 = vpack.c.b16 %v934, %v930
        %v1299 = vpack.c.b16 %v935, %v931
        %v1300 = vpack.c.b16 %v940, %v936
        %v1301 = vpack.c.b16 %v941, %v937
        %v1302 = vpack.c.b16 %v942, %v938
        %v1303 = vpack.c.b16 %v943, %v939
        %v1304 = vpack.c.b16 %v948, %v944
        %v1305 = vpack.c.b16 %v949, %v945
        %v1306 = vpack.c.b16 %v950, %v946
        %v1307 = vpack.c.b16 %v951, %v947
        %v1308 = vpack.c.b16 %v956, %v952
        %v1309 = vpack.c.b16 %v957, %v953
        %v1310 = vpack.c.b16 %v958, %v954
        %v1311 = vpack.c.b16 %v959, %v955
        %v1312 = vpack.c.b16 %v964, %v960
        %v1313 = vpack.c.b16 %v965, %v961
        %v1314 = vpack.c.b16 %v966, %v962
        %v1315 = vpack.c.b16 %v967, %v963
        %v1316 = vpack.c.b16 %v972, %v968
        %v1317 = vpack.c.b16 %v973, %v969
        %v1318 = vpack.c.b16 %v974, %v970
        %v1319 = vpack.c.b16 %v975, %v971
        %v1320 = vpack.c.b16 %v980, %v976
        %v1321 = vpack.c.b16 %v981, %v977
        %v1322 = vpack.c.b16 %v982, %v978
        %v1323 = vpack.c.b16 %v983, %v979
        %v1324 = vpack.c.b16 %v988, %v984
        %v1325 = vpack.c.b16 %v989, %v985
        %v1326 = vpack.c.b16 %v990, %v986
        %v1327 = vpack.c.b16 %v991, %v987
        %v1328 = vpack.c.b16 %v996, %v992
        %v1329 = vpack.c.b16 %v997, %v993
        %v1330 = vpack.c.b16 %v998, %v994
        %v1331 = vpack.c.b16 %v999, %v995
        %v1332 = vpack.c.b16 %v1004, %v1000
        %v1333 = vpack.c.b16 %v1005, %v1001
        %v1334 = vpack.c.b16 %v1006, %v1002
        %v1335 = vpack.c.b16 %v1007, %v1003
        %v1336 = vpack.c.b16 %v1012, %v1008
        %v1337 = vpack.c.b16 %v1013, %v1009
        %v1338 = vpack.c.b16 %v1014, %v1010
        %v1339 = vpack.c.b16 %v1015, %v1011
        %v1340 = vpack.c.b16 %v1020, %v1016
        %v1341 = vpack.c.b16 %v1021, %v1017
        %v1342 = vpack.c.b16 %v1022, %v1018
        %v1343 = vpack.c.b16 %v1023, %v1019
        %v1344 = vpack.c.b16 %v1028, %v1024
        %v1345 = vpack.c.b16 %v1029, %v1025
        %v1346 = vpack.c.b16 %v1030, %v1026
        %v1347 = vpack.c.b16 %v1031, %v1027
        %v1348 = vpack.c.b16 %v1036, %v1032
        %v1349 = vpack.c.b16 %v1037, %v1033
        %v1350 = vpack.c.b16 %v1038, %v1034
        %v1351 = vpack.c.b16 %v1039, %v1035
        %v1352 = vpack.c.b16 %v1044, %v1040
        %v1353 = vpack.c.b16 %v1045, %v1041
        %v1354 = vpack.c.b16 %v1046, %v1042
        %v1355 = vpack.c.b16 %v1047, %v1043
        %v1356 = vpack.c.b16 %v1052, %v1048
        %v1357 = vpack.c.b16 %v1053, %v1049
        %v1358 = vpack.c.b16 %v1054, %v1050
        %v1359 = vpack.c.b16 %v1055, %v1051
        %v1360 = vpack.c.b16 %v1060, %v1056
        %v1361 = vpack.c.b16 %v1061, %v1057
        %v1362 = vpack.c.b16 %v1062, %v1058
        %v1363 = vpack.c.b16 %v1063, %v1059
        %v1364 = vpack.c.b16 %v1068, %v1064
        %v1365 = vpack.c.b16 %v1069, %v1065
        %v1366 = vpack.c.b16 %v1070, %v1066
        %v1367 = vpack.c.b16 %v1071, %v1067
        %v1368 = vpack.c.b16 %v1076, %v1072
        %v1369 = vpack.c.b16 %v1077, %v1073
        %v1370 = vpack.c.b16 %v1078, %v1074
        %v1371 = vpack.c.b16 %v1079, %v1075
        %v1372 = vpack.c.b16 %v1084, %v1080
        %v1373 = vpack.c.b16 %v1085, %v1081
        %v1374 = vpack.c.b16 %v1086, %v1082
        %v1375 = vpack.c.b16 %v1087, %v1083
        %v1376 = vpack.c.b16 %v1092, %v1088
        %v1377 = vpack.c.b16 %v1093, %v1089
        %v1378 = vpack.c.b16 %v1094, %v1090
        %v1379 = vpack.c.b16 %v1095, %v1091
        %v1380 = vpack.c.b16 %v1100, %v1096
        %v1381 = vpack.c.b16 %v1101, %v1097
        %v1382 = vpack.c.b16 %v1102, %v1098
        %v1383 = vpack.c.b16 %v1103, %v1099
        %v1384 = vpack.c.b16 %v1108, %v1104
        %v1385 = vpack.c.b16 %v1109, %v1105
        %v1386 = vpack.c.b16 %v1110, %v1106
        %v1387 = vpack.c.b16 %v1111, %v1107
        %v1388 = vpack.c.b16 %v1116, %v1112
        %v1389 = vpack.c.b16 %v1117, %v1113
        %v1390 = vpack.c.b16 %v1118, %v1114
        %v1391 = vpack.c.b16 %v1119, %v1115
        %v1392 = vpack.c.b16 %v1124, %v1120
        %v1393 = vpack.c.b16 %v1125, %v1121
        %v1394 = vpack.c.b16 %v1126, %v1122
        %v1395 = vpack.c.b16 %v1127, %v1123
        %v1396 = vpack.c.b16 %v1132, %v1128
        %v1397 = vpack.c.b16 %v1133, %v1129
        %v1398 = vpack.c.b16 %v1134, %v1130
        %v1399 = vpack.c.b16 %v1135, %v1131
        %v1400 = vpack.c.b16 %v1140, %v1136
        %v1401 = vpack.c.b16 %v1141, %v1137
        %v1402 = vpack.c.b16 %v1142, %v1138
        %v1403 = vpack.c.b16 %v1143, %v1139
        %v1404 = vpack.c.b16 %v1148, %v1144
        %v1405 = vpack.c.b16 %v1149, %v1145
        %v1406 = vpack.c.b16 %v1150, %v1146
        %v1407 = vpack.c.b16 %v1151, %v1147
        %v1408 = vpack.c.b16 %v1156, %v1152
        %v1409 = vpack.c.b16 %v1157, %v1153
        %v1410 = vpack.c.b16 %v1158, %v1154
        %v1411 = vpack.c.b16 %v1159, %v1155
        %v1412 = vpack.c.b16 %v1164, %v1160
        %v1413 = vpack.c.b16 %v1165, %v1161
        %v1414 = vpack.c.b16 %v1166, %v1162
        %v1415 = vpack.c.b16 %v1167, %v1163
        %v1416 = vpack.c.b16 %v1172, %v1168
        %v1417 = vpack.c.b16 %v1173, %v1169
        %v1418 = vpack.c.b16 %v1174, %v1170
        %v1419 = vpack.c.b16 %v1175, %v1171
        %v1420 = vpack.c.b16 %v1180, %v1176
        %v1421 = vpack.c.b16 %v1181, %v1177
        %v1422 = vpack.c.b16 %v1182, %v1178
        %v1423 = vpack.c.b16 %v1183, %v1179
        %v1424 = vpack.c.b16 %v1188, %v1184
        %v1425 = vpack.c.b16 %v1189, %v1185
        %v1426 = vpack.c.b16 %v1190, %v1186
        %v1427 = vpack.c.b16 %v1191, %v1187
        %v1428 = vpack.c.b16 %v1196, %v1192
        %v1429 = vpack.c.b16 %v1197, %v1193
        %v1430 = vpack.c.b16 %v1198, %v1194
        %v1431 = vpack.c.b16 %v1199, %v1195
        %v1432 = vpack.c.b16 %v1204, %v1200
        %v1433 = vpack.c.b16 %v1205, %v1201
        %v1434 = vpack.c.b16 %v1206, %v1202
        %v1435 = vpack.c.b16 %v1207, %v1203
        %v1436 = vpack.c.b16 %v1212, %v1208
        %v1437 = vpack.c.b16 %v1213, %v1209
        %v1438 = vpack.c.b16 %v1214, %v1210
        %v1439 = vpack.c.b16 %v1215, %v1211
        %v1440 = vpack.c.b16 %v1220, %v1216
        %v1441 = vpack.c.b16 %v1221, %v1217
        %v1442 = vpack.c.b16 %v1222, %v1218
        %v1443 = vpack.c.b16 %v1223, %v1219
        %v1444 = vpack.c.b16 %v1228, %v1224
        %v1445 = vpack.c.b16 %v1229, %v1225
        %v1446 = vpack.c.b16 %v1230, %v1226
        %v1447 = vpack.c.b16 %v1231, %v1227
        %v1448 = vpack.c.b16 %v1236, %v1232
        %v1449 = vpack.c.b16 %v1237, %v1233
        %v1450 = vpack.c.b16 %v1238, %v1234
        %v1451 = vpack.c.b16 %v1239, %v1235
        %v1452 = vpack.c.b16 %v1244, %v1240
        %v1453 = vpack.c.b16 %v1245, %v1241
        %v1454 = vpack.c.b16 %v1246, %v1242
        %v1455 = vpack.c.b16 %v1247, %v1243
        %v1456 = vpack.c.b16 %v1252, %v1248
        %v1457 = vpack.c.b16 %v1253, %v1249
        %v1458 = vpack.c.b16 %v1254, %v1250
        %v1459 = vpack.c.b16 %v1255, %v1251
        %v1460 = vpack.c.b16 %v1260, %v1256
        %v1461 = vpack.c.b16 %v1261, %v1257
        %v1462 = vpack.c.b16 %v1262, %v1258
        %v1463 = vpack.c.b16 %v1263, %v1259
        %v1464 = vpack.c.b16 %v1268, %v1264
        %v1465 = vpack.c.b16 %v1269, %v1265
        %v1466 = vpack.c.b16 %v1270, %v1266
        %v1467 = vpack.c.b16 %v1271, %v1267
        %v1468 = vpack.c.b16 %v1276, %v1272
        %v1469 = vpack.c.b16 %v1277, %v1273
        %v1470 = vpack.c.b16 %v1278, %v1274
        %v1471 = vpack.c.b16 %v1279, %v1275
        %1664 = vmatprep.subr.bf16.mxu0 %v1281
        %1665 = vmatpush1.bf16.msra.mxu0 %v1280
        %1666 = vmatprep.subr.bf16.mxu0 %v1285
        %1667 = vmatpush1.bf16.msra.mxu0 %v1284
        %1668 = vmatprep.subr.bf16.mxu0 %v1289
        %1669 = vmatpush1.bf16.msra.mxu0 %v1288
        %1670 = vmatprep.subr.bf16.mxu0 %v1293
        %1671 = vmatpush1.bf16.msra.mxu0 %v1292
        %1672 = vmatprep.subr.bf16.mxu0 %v1297
        %1673 = vmatpush1.bf16.msra.mxu0 %v1296
        %1674 = vmatprep.subr.bf16.mxu0 %v1301
        %1675 = vmatpush1.bf16.msra.mxu0 %v1300
        %1676 = vmatprep.subr.bf16.mxu0 %v1305
        %1677 = vmatpush1.bf16.msra.mxu0 %v1304
        %1678 = vmatprep.subr.bf16.mxu0 %v1309
        %1679 = vmatpush1.bf16.msra.mxu0 %v1308
        %1680 = vmatprep.subr.bf16.mxu0 %v1313
        %1681 = vmatpush1.bf16.msra.mxu0 %v1312
        %1682 = vmatprep.subr.bf16.mxu0 %v1317
        %1683 = vmatpush1.bf16.msra.mxu0 %v1316
        %1684 = vmatprep.subr.bf16.mxu0 %v1321
        %1685 = vmatpush1.bf16.msra.mxu0 %v1320
        %1686 = vmatprep.subr.bf16.mxu0 %v1325
        %1687 = vmatpush1.bf16.msra.mxu0 %v1324
        %1688 = vmatprep.subr.bf16.mxu0 %v1329
        %1689 = vmatpush1.bf16.msra.mxu0 %v1328
        %1690 = vmatprep.subr.bf16.mxu0 %v1333
        %1691 = vmatpush1.bf16.msra.mxu0 %v1332
        %1692 = vmatprep.subr.bf16.mxu0 %v1337
        %1693 = vmatpush1.bf16.msra.mxu0 %v1336
        %1694 = vmatprep.subr.bf16.mxu0 %v1341
        %1695 = vmatpush1.bf16.msra.mxu0 %v1340
        %1696 = vmatprep.mubr.bf16.mxu0 %v633
        %1697 = vmatmul.mubr.bf16.gmra.mrb[0].mxu0 %v632
        %v1698 = vpop.f32.mrb[0].mxu0
        %v1699 = vadd.f32 0.0, %v1698
        %v1700 = vpop.f32.mrb[0].mxu0
        %v1701 = vadd.f32 0.0, %v1700
        %v1702 = vpop.f32.mrb[0].mxu0
        %v1703 = vadd.f32 0.0, %v1702
        %v1704 = vpop.f32.mrb[0].mxu0
        %v1705 = vadd.f32 0.0, %v1704
        %1706 = vmatprep.mubr.bf16.mxu0 %v639
        %1707 = vmatmul.mubr.bf16.gmra.mrb[0].mxu0 %v638
        %v1708 = vpop.f32.mrb[0].mxu0
        %v1709 = vadd.f32 0.0, %v1708
        %v1710 = vpop.f32.mrb[0].mxu0
        %v1711 = vadd.f32 0.0, %v1710
        %v1712 = vpop.f32.mrb[0].mxu0
        %v1713 = vadd.f32 0.0, %v1712
        %v1714 = vpop.f32.mrb[0].mxu0
        %v1715 = vadd.f32 0.0, %v1714
        %1716 = vmatprep.mubr.bf16.mxu0 %v645
        %1717 = vmatmul.mubr.bf16.gmra.mrb[0].mxu0 %v644
        %v1718 = vpop.f32.mrb[0].mxu0
        %v1719 = vadd.f32 0.0, %v1718
        %v1720 = vpop.f32.mrb[0].mxu0
        %v1721 = vadd.f32 0.0, %v1720
        %v1722 = vpop.f32.mrb[0].mxu0
        %v1723 = vadd.f32 0.0, %v1722
        %v1724 = vpop.f32.mrb[0].mxu0
        %v1725 = vadd.f32 0.0, %v1724
        %1726 = vmatprep.mubr.bf16.mxu0 %v651
        %1727 = vmatmul.mubr.bf16.gmra.mrb[0].mxu0 %v650
        %v1728 = vpop.f32.mrb[0].mxu0
        %v1729 = vadd.f32 0.0, %v1728
        %v1730 = vpop.f32.mrb[0].mxu0
        %v1731 = vadd.f32 0.0, %v1730
        %v1732 = vpop.f32.mrb[0].mxu0
        %v1733 = vadd.f32 0.0, %v1732
        %v1734 = vpop.f32.mrb[0].mxu0
        %v1735 = vadd.f32 0.0, %v1734
        %1736 = vmatprep.mubr.bf16.mxu0 %v657
        %1737 = vmatmul.mubr.bf16.gmra.mrb[0].mxu0 %v656
        %v1738 = vpop.f32.mrb[0].mxu0
        %v1739 = vadd.f32 0.0, %v1738
        %v1740 = vpop.f32.mrb[0].mxu0
        %v1741 = vadd.f32 0.0, %v1740
        %v1742 = vpop.f32.mrb[0].mxu0
        %v1743 = vadd.f32 0.0, %v1742
        %v1744 = vpop.f32.mrb[0].mxu0
        %v1745 = vadd.f32 0.0, %v1744
        %1746 = vmatprep.mubr.bf16.mxu0 %v663
        %1747 = vmatmul.mubr.bf16.gmra.mrb[0].mxu0 %v662
        %v1748 = vpop.f32.mrb[0].mxu0
        %v1749 = vadd.f32 0.0, %v1748
        %v1750 = vpop.f32.mrb[0].mxu0
        %v1751 = vadd.f32 0.0, %v1750
        %v1752 = vpop.f32.mrb[0].mxu0
        %v1753 = vadd.f32 0.0, %v1752
        %v1754 = vpop.f32.mrb[0].mxu0
        %v1755 = vadd.f32 0.0, %v1754
        %1756 = vdwg.mxu0
        %1757 = vmatprep.subr.bf16.mxu0 %v1345
        %1758 = vmatpush1.bf16.msra.mxu0 %v1344
        %1759 = vmatprep.subr.bf16.mxu0 %v1349
        %1760 = vmatpush1.bf16.msra.mxu0 %v1348
        %1761 = vmatprep.subr.bf16.mxu0 %v1353
        %1762 = vmatpush1.bf16.msra.mxu0 %v1352
        %1763 = vmatprep.subr.bf16.mxu0 %v1357
        %1764 = vmatpush1.bf16.msra.mxu0 %v1356
        %1765 = vmatprep.subr.bf16.mxu0 %v1361
        %1766 = vmatpush1.bf16.msra.mxu0 %v1360
        %1767 = vmatprep.subr.bf16.mxu0 %v1365
        %1768 = vmatpush1.bf16.msra.mxu0 %v1364
        %1769 = vmatprep.subr.bf16.mxu0 %v1369
        %1770 = vmatpush1.bf16.msra.mxu0 %v1368
        %1771 = vmatprep.subr.bf16.mxu0 %v1373
        %1772 = vmatpush1.bf16.msra.mxu0 %v1372
        %1773 = vmatprep.subr.bf16.mxu0 %v1377
        %1774 = vmatpush1.bf16.msra.mxu0 %v1376
        %1775 = vmatprep.subr.bf16.mxu0 %v1381
        %1776 = vmatpush1.bf16.msra.mxu0 %v1380
        %1777 = vmatprep.subr.bf16.mxu0 %v1385
        %1778 = vmatpush1.bf16.msra.mxu0 %v1384
        %1779 = vmatprep.subr.bf16.mxu0 %v1389
        %1780 = vmatpush1.bf16.msra.mxu0 %v1388
        %1781 = vmatprep.subr.bf16.mxu0 %v1393
        %1782 = vmatpush1.bf16.msra.mxu0 %v1392
        %1783 = vmatprep.subr.bf16.mxu0 %v1397
        %1784 = vmatpush1.bf16.msra.mxu0 %v1396
        %1785 = vmatprep.subr.bf16.mxu0 %v1401
        %1786 = vmatpush1.bf16.msra.mxu0 %v1400
        %1787 = vmatprep.subr.bf16.mxu0 %v1405
        %1788 = vmatpush1.bf16.msra.mxu0 %v1404
        %1789 = vmatprep.mubr.bf16.mxu0 %v635
        %1790 = vmatmul.mubr.bf16.gmra.mrb[0].mxu0 %v634
        %v1791 = vpop.f32.mrb[0].mxu0
        %v1792 = vadd.f32 %v1699, %v1791
        %v1793 = vpop.f32.mrb[0].mxu0
        %v1794 = vadd.f32 %v1701, %v1793
        %v1795 = vpop.f32.mrb[0].mxu0
        %v1796 = vadd.f32 %v1703, %v1795
        %v1797 = vpop.f32.mrb[0].mxu0
        %v1798 = vadd.f32 %v1705, %v1797
        %1799 = vmatprep.mubr.bf16.mxu0 %v641
        %1800 = vmatmul.mubr.bf16.gmra.mrb[0].mxu0 %v640
        %v1801 = vpop.f32.mrb[0].mxu0
        %v1802 = vadd.f32 %v1709, %v1801
        %v1803 = vpop.f32.mrb[0].mxu0
        %v1804 = vadd.f32 %v1711, %v1803
        %v1805 = vpop.f32.mrb[0].mxu0
        %v1806 = vadd.f32 %v1713, %v1805
        %v1807 = vpop.f32.mrb[0].mxu0
        %v1808 = vadd.f32 %v1715, %v1807
        %1809 = vmatprep.mubr.bf16.mxu0 %v647
        %1810 = vmatmul.mubr.bf16.gmra.mrb[0].mxu0 %v646
        %v1811 = vpop.f32.mrb[0].mxu0
        %v1812 = vadd.f32 %v1719, %v1811
        %v1813 = vpop.f32.mrb[0].mxu0
        %v1814 = vadd.f32 %v1721, %v1813
        %v1815 = vpop.f32.mrb[0].mxu0
        %v1816 = vadd.f32 %v1723, %v1815
        %v1817 = vpop.f32.mrb[0].mxu0
        %v1818 = vadd.f32 %v1725, %v1817
        %1819 = vmatprep.mubr.bf16.mxu0 %v653
        %1820 = vmatmul.mubr.bf16.gmra.mrb[0].mxu0 %v652
        %v1821 = vpop.f32.mrb[0].mxu0
        %v1822 = vadd.f32 %v1729, %v1821
        %v1823 = vpop.f32.mrb[0].mxu0
        %v1824 = vadd.f32 %v1731, %v1823
        %v1825 = vpop.f32.mrb[0].mxu0
        %v1826 = vadd.f32 %v1733, %v1825
        %v1827 = vpop.f32.mrb[0].mxu0
        %v1828 = vadd.f32 %v1735, %v1827
        %1829 = vmatprep.mubr.bf16.mxu0 %v659
        %1830 = vmatmul.mubr.bf16.gmra.mrb[0].mxu0 %v658
        %v1831 = vpop.f32.mrb[0].mxu0
        %v1832 = vadd.f32 %v1739, %v1831
        %v1833 = vpop.f32.mrb[0].mxu0
        %v1834 = vadd.f32 %v1741, %v1833
        %v1835 = vpop.f32.mrb[0].mxu0
        %v1836 = vadd.f32 %v1743, %v1835
        %v1837 = vpop.f32.mrb[0].mxu0
        %v1838 = vadd.f32 %v1745, %v1837
        %1839 = vmatprep.mubr.bf16.mxu0 %v665
        %1840 = vmatmul.mubr.bf16.gmra.mrb[0].mxu0 %v664
        %v1841 = vpop.f32.mrb[0].mxu0
        %v1842 = vadd.f32 %v1749, %v1841
        %v1843 = vpop.f32.mrb[0].mxu0
        %v1844 = vadd.f32 %v1751, %v1843
        %v1845 = vpop.f32.mrb[0].mxu0
        %v1846 = vadd.f32 %v1753, %v1845
        %v1847 = vpop.f32.mrb[0].mxu0
        %v1848 = vadd.f32 %v1755, %v1847
        %1849 = vdwg.mxu0
        %1850 = vmatprep.subr.bf16.mxu0 %v1409
        %1851 = vmatpush1.bf16.msra.mxu0 %v1408
        %1852 = vmatprep.subr.bf16.mxu0 %v1413
        %1853 = vmatpush1.bf16.msra.mxu0 %v1412
        %1854 = vmatprep.subr.bf16.mxu0 %v1417
        %1855 = vmatpush1.bf16.msra.mxu0 %v1416
        %1856 = vmatprep.subr.bf16.mxu0 %v1421
        %1857 = vmatpush1.bf16.msra.mxu0 %v1420
        %1858 = vmatprep.subr.bf16.mxu0 %v1425
        %1859 = vmatpush1.bf16.msra.mxu0 %v1424
        %1860 = vmatprep.subr.bf16.mxu0 %v1429
        %1861 = vmatpush1.bf16.msra.mxu0 %v1428
        %1862 = vmatprep.subr.bf16.mxu0 %v1433
        %1863 = vmatpush1.bf16.msra.mxu0 %v1432
        %1864 = vmatprep.subr.bf16.mxu0 %v1437
        %1865 = vmatpush1.bf16.msra.mxu0 %v1436
        %1866 = vmatprep.subr.bf16.mxu0 %v1441
        %1867 = vmatpush1.bf16.msra.mxu0 %v1440
        %1868 = vmatprep.subr.bf16.mxu0 %v1445
        %1869 = vmatpush1.bf16.msra.mxu0 %v1444
        %1870 = vmatprep.subr.bf16.mxu0 %v1449
        %1871 = vmatpush1.bf16.msra.mxu0 %v1448
        %1872 = vmatprep.subr.bf16.mxu0 %v1453
        %1873 = vmatpush1.bf16.msra.mxu0 %v1452
        %1874 = vmatprep.subr.bf16.mxu0 %v1457
        %1875 = vmatpush1.bf16.msra.mxu0 %v1456
        %1876 = vmatprep.subr.bf16.mxu0 %v1461
        %1877 = vmatpush1.bf16.msra.mxu0 %v1460
        %1878 = vmatprep.subr.bf16.mxu0 %v1465
        %1879 = vmatpush1.bf16.msra.mxu0 %v1464
        %1880 = vmatprep.subr.bf16.mxu0 %v1469
        %1881 = vmatpush1.bf16.msra.mxu0 %v1468
        %1882 = vmatprep.mubr.bf16.mxu0 %v637
        %1883 = vmatmul.mubr.bf16.gmra.mrb[0].mxu0 %v636
        %v1884 = vpop.f32.mrb[0].mxu0
        %v1885 = vadd.f32 %v1792, %v1884
        %v1886 = vpop.f32.mrb[0].mxu0
        %v1887 = vadd.f32 %v1794, %v1886
        %v1888 = vpop.f32.mrb[0].mxu0
        %v1889 = vadd.f32 %v1796, %v1888
        %v1890 = vpop.f32.mrb[0].mxu0
        %v1891 = vadd.f32 %v1798, %v1890
        %1892 = vmatprep.mubr.bf16.mxu0 %v643
        %1893 = vmatmul.mubr.bf16.gmra.mrb[0].mxu0 %v642
        %v1894 = vpop.f32.mrb[0].mxu0
        %v1895 = vadd.f32 %v1802, %v1894
        %v1896 = vpop.f32.mrb[0].mxu0
        %v1897 = vadd.f32 %v1804, %v1896
        %v1898 = vpop.f32.mrb[0].mxu0
        %v1899 = vadd.f32 %v1806, %v1898
        %v1900 = vpop.f32.mrb[0].mxu0
        %v1901 = vadd.f32 %v1808, %v1900
        %1902 = vmatprep.mubr.bf16.mxu0 %v649
        %1903 = vmatmul.mubr.bf16.gmra.mrb[0].mxu0 %v648
        %v1904 = vpop.f32.mrb[0].mxu0
        %v1905 = vadd.f32 %v1812, %v1904
        %v1906 = vpop.f32.mrb[0].mxu0
        %v1907 = vadd.f32 %v1814, %v1906
        %v1908 = vpop.f32.mrb[0].mxu0
        %v1909 = vadd.f32 %v1816, %v1908
        %v1910 = vpop.f32.mrb[0].mxu0
        %v1911 = vadd.f32 %v1818, %v1910
        %1912 = vmatprep.mubr.bf16.mxu0 %v655
        %1913 = vmatmul.mubr.bf16.gmra.mrb[0].mxu0 %v654
        %v1914 = vpop.f32.mrb[0].mxu0
        %v1915 = vadd.f32 %v1822, %v1914
        %v1916 = vpop.f32.mrb[0].mxu0
        %v1917 = vadd.f32 %v1824, %v1916
        %v1918 = vpop.f32.mrb[0].mxu0
        %v1919 = vadd.f32 %v1826, %v1918
        %v1920 = vpop.f32.mrb[0].mxu0
        %v1921 = vadd.f32 %v1828, %v1920
        %1922 = vmatprep.mubr.bf16.mxu0 %v661
        %1923 = vmatmul.mubr.bf16.gmra.mrb[0].mxu0 %v660
        %v1924 = vpop.f32.mrb[0].mxu0
        %v1925 = vadd.f32 %v1832, %v1924
        %v1926 = vpop.f32.mrb[0].mxu0
        %v1927 = vadd.f32 %v1834, %v1926
        %v1928 = vpop.f32.mrb[0].mxu0
        %v1929 = vadd.f32 %v1836, %v1928
        %v1930 = vpop.f32.mrb[0].mxu0
        %v1931 = vadd.f32 %v1838, %v1930
        %1932 = vmatprep.mubr.bf16.mxu0 %v667
        %1933 = vmatmul.mubr.bf16.gmra.mrb[0].mxu0 %v666
        %v1934 = vpop.f32.mrb[0].mxu0
        %v1935 = vadd.f32 %v1842, %v1934
        %v1936 = vpop.f32.mrb[0].mxu0
        %v1937 = vadd.f32 %v1844, %v1936
        %v1938 = vpop.f32.mrb[0].mxu0
        %v1939 = vadd.f32 %v1846, %v1938
        %v1940 = vpop.f32.mrb[0].mxu0
        %v1941 = vadd.f32 %v1848, %v1940
        %1942 = vdwg.mxu0
        %1943 = vmatprep.subr.bf16.mxu0 %v1283
        %1944 = vmatpush1.bf16.msra.mxu0 %v1282
        %1945 = vmatprep.subr.bf16.mxu0 %v1287
        %1946 = vmatpush1.bf16.msra.mxu0 %v1286
        %1947 = vmatprep.subr.bf16.mxu0 %v1291
        %1948 = vmatpush1.bf16.msra.mxu0 %v1290
        %1949 = vmatprep.subr.bf16.mxu0 %v1295
        %1950 = vmatpush1.bf16.msra.mxu0 %v1294
        %1951 = vmatprep.subr.bf16.mxu0 %v1299
        %1952 = vmatpush1.bf16.msra.mxu0 %v1298
        %1953 = vmatprep.subr.bf16.mxu0 %v1303
        %1954 = vmatpush1.bf16.msra.mxu0 %v1302
        %1955 = vmatprep.subr.bf16.mxu0 %v1307
        %1956 = vmatpush1.bf16.msra.mxu0 %v1306
        %1957 = vmatprep.subr.bf16.mxu0 %v1311
        %1958 = vmatpush1.bf16.msra.mxu0 %v1310
        %1959 = vmatprep.subr.bf16.mxu0 %v1315
        %1960 = vmatpush1.bf16.msra.mxu0 %v1314
        %1961 = vmatprep.subr.bf16.mxu0 %v1319
        %1962 = vmatpush1.bf16.msra.mxu0 %v1318
        %1963 = vmatprep.subr.bf16.mxu0 %v1323
        %1964 = vmatpush1.bf16.msra.mxu0 %v1322
        %1965 = vmatprep.subr.bf16.mxu0 %v1327
        %1966 = vmatpush1.bf16.msra.mxu0 %v1326
        %1967 = vmatprep.subr.bf16.mxu0 %v1331
        %1968 = vmatpush1.bf16.msra.mxu0 %v1330
        %1969 = vmatprep.subr.bf16.mxu0 %v1335
        %1970 = vmatpush1.bf16.msra.mxu0 %v1334
        %1971 = vmatprep.subr.bf16.mxu0 %v1339
        %1972 = vmatpush1.bf16.msra.mxu0 %v1338
        %1973 = vmatprep.subr.bf16.mxu0 %v1343
        %1974 = vmatpush1.bf16.msra.mxu0 %v1342
        %1975 = vmatprep.mubr.bf16.mxu0 %v633
        %1976 = vmatmul.mubr.bf16.gmra.mrb[0].mxu0 %v632
        %v1977 = vpop.f32.mrb[0].mxu0
        %v1978 = vadd.f32 0.0, %v1977
        %v1979 = vpop.f32.mrb[0].mxu0
        %v1980 = vadd.f32 0.0, %v1979
        %v1981 = vpop.f32.mrb[0].mxu0
        %v1982 = vadd.f32 0.0, %v1981
        %v1983 = vpop.f32.mrb[0].mxu0
        %v1984 = vadd.f32 0.0, %v1983
        %1985 = vmatprep.mubr.bf16.mxu0 %v639
        %1986 = vmatmul.mubr.bf16.gmra.mrb[0].mxu0 %v638
        %v1987 = vpop.f32.mrb[0].mxu0
        %v1988 = vadd.f32 0.0, %v1987
        %v1989 = vpop.f32.mrb[0].mxu0
        %v1990 = vadd.f32 0.0, %v1989
        %v1991 = vpop.f32.mrb[0].mxu0
        %v1992 = vadd.f32 0.0, %v1991
        %v1993 = vpop.f32.mrb[0].mxu0
        %v1994 = vadd.f32 0.0, %v1993
        %1995 = vmatprep.mubr.bf16.mxu0 %v645
        %1996 = vmatmul.mubr.bf16.gmra.mrb[0].mxu0 %v644
        %v1997 = vpop.f32.mrb[0].mxu0
        %v1998 = vadd.f32 0.0, %v1997
        %v1999 = vpop.f32.mrb[0].mxu0
        %v2000 = vadd.f32 0.0, %v1999
        %v2001 = vpop.f32.mrb[0].mxu0
        %v2002 = vadd.f32 0.0, %v2001
        %v2003 = vpop.f32.mrb[0].mxu0
        %v2004 = vadd.f32 0.0, %v2003
        %2005 = vmatprep.mubr.bf16.mxu0 %v651
        %2006 = vmatmul.mubr.bf16.gmra.mrb[0].mxu0 %v650
        %v2007 = vpop.f32.mrb[0].mxu0
        %v2008 = vadd.f32 0.0, %v2007
        %v2009 = vpop.f32.mrb[0].mxu0
        %v2010 = vadd.f32 0.0, %v2009
        %v2011 = vpop.f32.mrb[0].mxu0
        %v2012 = vadd.f32 0.0, %v2011
        %v2013 = vpop.f32.mrb[0].mxu0
        %v2014 = vadd.f32 0.0, %v2013
        %2015 = vmatprep.mubr.bf16.mxu0 %v657
        %2016 = vmatmul.mubr.bf16.gmra.mrb[0].mxu0 %v656
        %v2017 = vpop.f32.mrb[0].mxu0
        %v2018 = vadd.f32 0.0, %v2017
        %v2019 = vpop.f32.mrb[0].mxu0
        %v2020 = vadd.f32 0.0, %v2019
        %v2021 = vpop.f32.mrb[0].mxu0
        %v2022 = vadd.f32 0.0, %v2021
        %v2023 = vpop.f32.mrb[0].mxu0
        %v2024 = vadd.f32 0.0, %v2023
        %2025 = vmatprep.mubr.bf16.mxu0 %v663
        %2026 = vmatmul.mubr.bf16.gmra.mrb[0].mxu0 %v662
        %v2027 = vpop.f32.mrb[0].mxu0
        %v2028 = vadd.f32 0.0, %v2027
        %v2029 = vpop.f32.mrb[0].mxu0
        %v2030 = vadd.f32 0.0, %v2029
        %v2031 = vpop.f32.mrb[0].mxu0
        %v2032 = vadd.f32 0.0, %v2031
        %v2033 = vpop.f32.mrb[0].mxu0
        %v2034 = vadd.f32 0.0, %v2033
        %2035 = vdwg.mxu0
        %2036 = vmatprep.subr.bf16.mxu0 %v1347
        %2037 = vmatpush1.bf16.msra.mxu0 %v1346
        %2038 = vmatprep.subr.bf16.mxu0 %v1351
        %2039 = vmatpush1.bf16.msra.mxu0 %v1350
        %2040 = vmatprep.subr.bf16.mxu0 %v1355
        %2041 = vmatpush1.bf16.msra.mxu0 %v1354
        %2042 = vmatprep.subr.bf16.mxu0 %v1359
        %2043 = vmatpush1.bf16.msra.mxu0 %v1358
        %2044 = vmatprep.subr.bf16.mxu0 %v1363
        %2045 = vmatpush1.bf16.msra.mxu0 %v1362
        %2046 = vmatprep.subr.bf16.mxu0 %v1367
        %2047 = vmatpush1.bf16.msra.mxu0 %v1366
        %2048 = vmatprep.subr.bf16.mxu0 %v1371
        %2049 = vmatpush1.bf16.msra.mxu0 %v1370
        %2050 = vmatprep.subr.bf16.mxu0 %v1375
        %2051 = vmatpush1.bf16.msra.mxu0 %v1374
        %2052 = vmatprep.subr.bf16.mxu0 %v1379
        %2053 = vmatpush1.bf16.msra.mxu0 %v1378
        %2054 = vmatprep.subr.bf16.mxu0 %v1383
        %2055 = vmatpush1.bf16.msra.mxu0 %v1382
        %2056 = vmatprep.subr.bf16.mxu0 %v1387
        %2057 = vmatpush1.bf16.msra.mxu0 %v1386
        %2058 = vmatprep.subr.bf16.mxu0 %v1391
        %2059 = vmatpush1.bf16.msra.mxu0 %v1390
        %2060 = vmatprep.subr.bf16.mxu0 %v1395
        %2061 = vmatpush1.bf16.msra.mxu0 %v1394
        %2062 = vmatprep.subr.bf16.mxu0 %v1399
        %2063 = vmatpush1.bf16.msra.mxu0 %v1398
        %2064 = vmatprep.subr.bf16.mxu0 %v1403
        %2065 = vmatpush1.bf16.msra.mxu0 %v1402
        %2066 = vmatprep.subr.bf16.mxu0 %v1407
        %2067 = vmatpush1.bf16.msra.mxu0 %v1406
        %2068 = vmatprep.mubr.bf16.mxu0 %v635
        %2069 = vmatmul.mubr.bf16.gmra.mrb[0].mxu0 %v634
        %v2070 = vpop.f32.mrb[0].mxu0
        %v2071 = vadd.f32 %v1978, %v2070
        %v2072 = vpop.f32.mrb[0].mxu0
        %v2073 = vadd.f32 %v1980, %v2072
        %v2074 = vpop.f32.mrb[0].mxu0
        %v2075 = vadd.f32 %v1982, %v2074
        %v2076 = vpop.f32.mrb[0].mxu0
        %v2077 = vadd.f32 %v1984, %v2076
        %2078 = vmatprep.mubr.bf16.mxu0 %v641
        %2079 = vmatmul.mubr.bf16.gmra.mrb[0].mxu0 %v640
        %v2080 = vpop.f32.mrb[0].mxu0
        %v2081 = vadd.f32 %v1988, %v2080
        %v2082 = vpop.f32.mrb[0].mxu0
        %v2083 = vadd.f32 %v1990, %v2082
        %v2084 = vpop.f32.mrb[0].mxu0
        %v2085 = vadd.f32 %v1992, %v2084
        %v2086 = vpop.f32.mrb[0].mxu0
        %v2087 = vadd.f32 %v1994, %v2086
        %2088 = vmatprep.mubr.bf16.mxu0 %v647
        %2089 = vmatmul.mubr.bf16.gmra.mrb[0].mxu0 %v646
        %v2090 = vpop.f32.mrb[0].mxu0
        %v2091 = vadd.f32 %v1998, %v2090
        %v2092 = vpop.f32.mrb[0].mxu0
        %v2093 = vadd.f32 %v2000, %v2092
        %v2094 = vpop.f32.mrb[0].mxu0
        %v2095 = vadd.f32 %v2002, %v2094
        %v2096 = vpop.f32.mrb[0].mxu0
        %v2097 = vadd.f32 %v2004, %v2096
        %2098 = vmatprep.mubr.bf16.mxu0 %v653
        %2099 = vmatmul.mubr.bf16.gmra.mrb[0].mxu0 %v652
        %v2100 = vpop.f32.mrb[0].mxu0
        %v2101 = vadd.f32 %v2008, %v2100
        %v2102 = vpop.f32.mrb[0].mxu0
        %v2103 = vadd.f32 %v2010, %v2102
        %v2104 = vpop.f32.mrb[0].mxu0
        %v2105 = vadd.f32 %v2012, %v2104
        %v2106 = vpop.f32.mrb[0].mxu0
        %v2107 = vadd.f32 %v2014, %v2106
        %2108 = vmatprep.mubr.bf16.mxu0 %v659
        %2109 = vmatmul.mubr.bf16.gmra.mrb[0].mxu0 %v658
        %v2110 = vpop.f32.mrb[0].mxu0
        %v2111 = vadd.f32 %v2018, %v2110
        %v2112 = vpop.f32.mrb[0].mxu0
        %v2113 = vadd.f32 %v2020, %v2112
        %v2114 = vpop.f32.mrb[0].mxu0
        %v2115 = vadd.f32 %v2022, %v2114
        %v2116 = vpop.f32.mrb[0].mxu0
        %v2117 = vadd.f32 %v2024, %v2116
        %2118 = vmatprep.mubr.bf16.mxu0 %v665
        %2119 = vmatmul.mubr.bf16.gmra.mrb[0].mxu0 %v664
        %v2120 = vpop.f32.mrb[0].mxu0
        %v2121 = vadd.f32 %v2028, %v2120
        %v2122 = vpop.f32.mrb[0].mxu0
        %v2123 = vadd.f32 %v2030, %v2122
        %v2124 = vpop.f32.mrb[0].mxu0
        %v2125 = vadd.f32 %v2032, %v2124
        %v2126 = vpop.f32.mrb[0].mxu0
        %v2127 = vadd.f32 %v2034, %v2126
        %2128 = vdwg.mxu0
        %2129 = vmatprep.subr.bf16.mxu0 %v1411
        %2130 = vmatpush1.bf16.msra.mxu0 %v1410
        %2131 = vmatprep.subr.bf16.mxu0 %v1415
        %2132 = vmatpush1.bf16.msra.mxu0 %v1414
        %2133 = vmatprep.subr.bf16.mxu0 %v1419
        %2134 = vmatpush1.bf16.msra.mxu0 %v1418
        %2135 = vmatprep.subr.bf16.mxu0 %v1423
        %2136 = vmatpush1.bf16.msra.mxu0 %v1422
        %2137 = vmatprep.subr.bf16.mxu0 %v1427
        %2138 = vmatpush1.bf16.msra.mxu0 %v1426
        %2139 = vmatprep.subr.bf16.mxu0 %v1431
        %2140 = vmatpush1.bf16.msra.mxu0 %v1430
        %2141 = vmatprep.subr.bf16.mxu0 %v1435
        %2142 = vmatpush1.bf16.msra.mxu0 %v1434
        %2143 = vmatprep.subr.bf16.mxu0 %v1439
        %2144 = vmatpush1.bf16.msra.mxu0 %v1438
        %2145 = vmatprep.subr.bf16.mxu0 %v1443
        %2146 = vmatpush1.bf16.msra.mxu0 %v1442
        %2147 = vmatprep.subr.bf16.mxu0 %v1447
        %2148 = vmatpush1.bf16.msra.mxu0 %v1446
        %2149 = vmatprep.subr.bf16.mxu0 %v1451
        %2150 = vmatpush1.bf16.msra.mxu0 %v1450
        %2151 = vmatprep.subr.bf16.mxu0 %v1455
        %2152 = vmatpush1.bf16.msra.mxu0 %v1454
        %2153 = vmatprep.subr.bf16.mxu0 %v1459
        %2154 = vmatpush1.bf16.msra.mxu0 %v1458
        %2155 = vmatprep.subr.bf16.mxu0 %v1463
        %2156 = vmatpush1.bf16.msra.mxu0 %v1462
        %2157 = vmatprep.subr.bf16.mxu0 %v1467
        %2158 = vmatpush1.bf16.msra.mxu0 %v1466
        %2159 = vmatprep.subr.bf16.mxu0 %v1471
        %2160 = vmatpush1.bf16.msra.mxu0 %v1470
        %2161 = vmatprep.mubr.bf16.mxu0 %v637
        %2162 = vmatmul.mubr.bf16.gmra.mrb[0].mxu0 %v636
        %v2163 = vpop.f32.mrb[0].mxu0
        %v2164 = vadd.f32 %v2071, %v2163
        %v2165 = vpop.f32.mrb[0].mxu0
        %v2166 = vadd.f32 %v2073, %v2165
        %v2167 = vpop.f32.mrb[0].mxu0
        %v2168 = vadd.f32 %v2075, %v2167
        %v2169 = vpop.f32.mrb[0].mxu0
        %v2170 = vadd.f32 %v2077, %v2169
        %2171 = vmatprep.mubr.bf16.mxu0 %v643
        %2172 = vmatmul.mubr.bf16.gmra.mrb[0].mxu0 %v642
        %v2173 = vpop.f32.mrb[0].mxu0
        %v2174 = vadd.f32 %v2081, %v2173
        %v2175 = vpop.f32.mrb[0].mxu0
        %v2176 = vadd.f32 %v2083, %v2175
        %v2177 = vpop.f32.mrb[0].mxu0
        %v2178 = vadd.f32 %v2085, %v2177
        %v2179 = vpop.f32.mrb[0].mxu0
        %v2180 = vadd.f32 %v2087, %v2179
        %2181 = vmatprep.mubr.bf16.mxu0 %v649
        %2182 = vmatmul.mubr.bf16.gmra.mrb[0].mxu0 %v648
        %v2183 = vpop.f32.mrb[0].mxu0
        %v2184 = vadd.f32 %v2091, %v2183
        %v2185 = vpop.f32.mrb[0].mxu0
        %v2186 = vadd.f32 %v2093, %v2185
        %v2187 = vpop.f32.mrb[0].mxu0
        %v2188 = vadd.f32 %v2095, %v2187
        %v2189 = vpop.f32.mrb[0].mxu0
        %v2190 = vadd.f32 %v2097, %v2189
        %2191 = vmatprep.mubr.bf16.mxu0 %v655
        %2192 = vmatmul.mubr.bf16.gmra.mrb[0].mxu0 %v654
        %v2193 = vpop.f32.mrb[0].mxu0
        %v2194 = vadd.f32 %v2101, %v2193
        %v2195 = vpop.f32.mrb[0].mxu0
        %v2196 = vadd.f32 %v2103, %v2195
        %v2197 = vpop.f32.mrb[0].mxu0
        %v2198 = vadd.f32 %v2105, %v2197
        %v2199 = vpop.f32.mrb[0].mxu0
        %v2200 = vadd.f32 %v2107, %v2199
        %2201 = vmatprep.mubr.bf16.mxu0 %v661
        %2202 = vmatmul.mubr.bf16.gmra.mrb[0].mxu0 %v660
        %v2203 = vpop.f32.mrb[0].mxu0
        %v2204 = vadd.f32 %v2111, %v2203
        %v2205 = vpop.f32.mrb[0].mxu0
        %v2206 = vadd.f32 %v2113, %v2205
        %v2207 = vpop.f32.mrb[0].mxu0
        %v2208 = vadd.f32 %v2115, %v2207
        %v2209 = vpop.f32.mrb[0].mxu0
        %v2210 = vadd.f32 %v2117, %v2209
        %2211 = vmatprep.mubr.bf16.mxu0 %v667
        %2212 = vmatmul.mubr.bf16.gmra.mrb[0].mxu0 %v666
        %v2213 = vpop.f32.mrb[0].mxu0
        %v2214 = vadd.f32 %v2121, %v2213
        %v2215 = vpop.f32.mrb[0].mxu0
        %v2216 = vadd.f32 %v2123, %v2215
        %v2217 = vpop.f32.mrb[0].mxu0
        %v2218 = vadd.f32 %v2125, %v2217
        %v2219 = vpop.f32.mrb[0].mxu0
        %v2220 = vadd.f32 %v2127, %v2219
        %2221 = vdwg.mxu0
        %v2222 = vmax.f32 %v1885, %v1887
        %v2223 = vmax.f32 %v2222, %v2164
        %v2224 = vmax.f32 %v2223, %v2166
        %2225 = vmax.xlane.f32.xlu0 %v2224
        %v2226 = vpop.xlane.xlu0 %2225
        %v2227 = vmax.f32 %v1889, %v1891
        %v2228 = vmax.f32 %v2227, %v2168
        %v2229 = vmax.f32 %v2228, %v2170
        %2230 = vmax.xlane.f32.xlu0 %v2229
        %v2231 = vpop.xlane.xlu0 %2230
        %v2232 = vmax.f32 %v1895, %v1897
        %v2233 = vmax.f32 %v2232, %v2174
        %v2234 = vmax.f32 %v2233, %v2176
        %2235 = vmax.xlane.f32.xlu0 %v2234
        %v2236 = vpop.xlane.xlu0 %2235
        %v2237 = vmax.f32 %v1899, %v1901
        %v2238 = vmax.f32 %v2237, %v2178
        %v2239 = vmax.f32 %v2238, %v2180
        %2240 = vmax.xlane.f32.xlu0 %v2239
        %v2241 = vpop.xlane.xlu0 %2240
        %v2242 = vmax.f32 %v1905, %v1907
        %v2243 = vmax.f32 %v2242, %v2184
        %v2244 = vmax.f32 %v2243, %v2186
        %2245 = vmax.xlane.f32.xlu0 %v2244
        %v2246 = vpop.xlane.xlu0 %2245
        %v2247 = vmax.f32 %v1909, %v1911
        %v2248 = vmax.f32 %v2247, %v2188
        %v2249 = vmax.f32 %v2248, %v2190
        %2250 = vmax.xlane.f32.xlu0 %v2249
        %v2251 = vpop.xlane.xlu0 %2250
        %v2252 = vmax.f32 %v1915, %v1917
        %v2253 = vmax.f32 %v2252, %v2194
        %v2254 = vmax.f32 %v2253, %v2196
        %2255 = vmax.xlane.f32.xlu0 %v2254
        %v2256 = vpop.xlane.xlu0 %2255
        %v2257 = vmax.f32 %v1919, %v1921
        %v2258 = vmax.f32 %v2257, %v2198
        %v2259 = vmax.f32 %v2258, %v2200
        %2260 = vmax.xlane.f32.xlu0 %v2259
        %v2261 = vpop.xlane.xlu0 %2260
        %v2262 = vmax.f32 %v1925, %v1927
        %v2263 = vmax.f32 %v2262, %v2204
        %v2264 = vmax.f32 %v2263, %v2206
        %2265 = vmax.xlane.f32.xlu0 %v2264
        %v2266 = vpop.xlane.xlu0 %2265
        %v2267 = vmax.f32 %v1929, %v1931
        %v2268 = vmax.f32 %v2267, %v2208
        %v2269 = vmax.f32 %v2268, %v2210
        %2270 = vmax.xlane.f32.xlu0 %v2269
        %v2271 = vpop.xlane.xlu0 %2270
        %v2272 = vmax.f32 %v1935, %v1937
        %v2273 = vmax.f32 %v2272, %v2214
        %v2274 = vmax.f32 %v2273, %v2216
        %2275 = vmax.xlane.f32.xlu0 %v2274
        %v2276 = vpop.xlane.xlu0 %2275
        %v2277 = vmax.f32 %v1939, %v1941
        %v2278 = vmax.f32 %v2277, %v2218
        %v2279 = vmax.f32 %v2278, %v2220
        %2280 = vmax.xlane.f32.xlu0 %v2279
        %v2281 = vpop.xlane.xlu0 %2280
        %v2282 = vsub.f32 %v1885, %v2226
        %v2283 = vsub.f32 %v1887, %v2226
        %v2284 = vsub.f32 %v2164, %v2226
        %v2285 = vsub.f32 %v2166, %v2226
        %v2286 = vsub.f32 %v1889, %v2231
        %v2287 = vsub.f32 %v1891, %v2231
        %v2288 = vsub.f32 %v2168, %v2231
        %v2289 = vsub.f32 %v2170, %v2231
        %v2290 = vsub.f32 %v1895, %v2236
        %v2291 = vsub.f32 %v1897, %v2236
        %v2292 = vsub.f32 %v2174, %v2236
        %v2293 = vsub.f32 %v2176, %v2236
        %v2294 = vsub.f32 %v1899, %v2241
        %v2295 = vsub.f32 %v1901, %v2241
        %v2296 = vsub.f32 %v2178, %v2241
        %v2297 = vsub.f32 %v2180, %v2241
        %v2298 = vsub.f32 %v1905, %v2246
        %v2299 = vsub.f32 %v1907, %v2246
        %v2300 = vsub.f32 %v2184, %v2246
        %v2301 = vsub.f32 %v2186, %v2246
        %v2302 = vsub.f32 %v1909, %v2251
        %v2303 = vsub.f32 %v1911, %v2251
        %v2304 = vsub.f32 %v2188, %v2251
        %v2305 = vsub.f32 %v2190, %v2251
        %v2306 = vsub.f32 %v1915, %v2256
        %v2307 = vsub.f32 %v1917, %v2256
        %v2308 = vsub.f32 %v2194, %v2256
        %v2309 = vsub.f32 %v2196, %v2256
        %v2310 = vsub.f32 %v1919, %v2261
        %v2311 = vsub.f32 %v1921, %v2261
        %v2312 = vsub.f32 %v2198, %v2261
        %v2313 = vsub.f32 %v2200, %v2261
        %v2314 = vsub.f32 %v1925, %v2266
        %v2315 = vsub.f32 %v1927, %v2266
        %v2316 = vsub.f32 %v2204, %v2266
        %v2317 = vsub.f32 %v2206, %v2266
        %v2318 = vsub.f32 %v1929, %v2271
        %v2319 = vsub.f32 %v1931, %v2271
        %v2320 = vsub.f32 %v2208, %v2271
        %v2321 = vsub.f32 %v2210, %v2271
        %v2322 = vsub.f32 %v1935, %v2276
        %v2323 = vsub.f32 %v1937, %v2276
        %v2324 = vsub.f32 %v2214, %v2276
        %v2325 = vsub.f32 %v2216, %v2276
        %v2326 = vsub.f32 %v1939, %v2281
        %v2327 = vsub.f32 %v1941, %v2281
        %v2328 = vsub.f32 %v2218, %v2281
        %v2329 = vsub.f32 %v2220, %v2281
        %v2330 = vmul.f32 %v2282, 1.442695
        %v2331 = vpow.pop %v2330
        %v2332 = vmul.f32 %v2283, 1.442695
        %v2333 = vpow.pop %v2332
        %v2334 = vmul.f32 %v2284, 1.442695
        %v2335 = vpow.pop %v2334
        %v2336 = vmul.f32 %v2285, 1.442695
        %v2337 = vpow.pop %v2336
        %v2338 = vmul.f32 %v2286, 1.442695
        %v2339 = vpow.pop %v2338
        %v2340 = vmul.f32 %v2287, 1.442695
        %v2341 = vpow.pop %v2340
        %v2342 = vmul.f32 %v2288, 1.442695
        %v2343 = vpow.pop %v2342
        %v2344 = vmul.f32 %v2289, 1.442695
        %v2345 = vpow.pop %v2344
        %v2346 = vmul.f32 %v2290, 1.442695
        %v2347 = vpow.pop %v2346
        %v2348 = vmul.f32 %v2291, 1.442695
        %v2349 = vpow.pop %v2348
        %v2350 = vmul.f32 %v2292, 1.442695
        %v2351 = vpow.pop %v2350
        %v2352 = vmul.f32 %v2293, 1.442695
        %v2353 = vpow.pop %v2352
        %v2354 = vmul.f32 %v2294, 1.442695
        %v2355 = vpow.pop %v2354
        %v2356 = vmul.f32 %v2295, 1.442695
        %v2357 = vpow.pop %v2356
        %v2358 = vmul.f32 %v2296, 1.442695
        %v2359 = vpow.pop %v2358
        %v2360 = vmul.f32 %v2297, 1.442695
        %v2361 = vpow.pop %v2360
        %v2362 = vmul.f32 %v2298, 1.442695
        %v2363 = vpow.pop %v2362
        %v2364 = vmul.f32 %v2299, 1.442695
        %v2365 = vpow.pop %v2364
        %v2366 = vmul.f32 %v2300, 1.442695
        %v2367 = vpow.pop %v2366
        %v2368 = vmul.f32 %v2301, 1.442695
        %v2369 = vpow.pop %v2368
        %v2370 = vmul.f32 %v2302, 1.442695
        %v2371 = vpow.pop %v2370
        %v2372 = vmul.f32 %v2303, 1.442695
        %v2373 = vpow.pop %v2372
        %v2374 = vmul.f32 %v2304, 1.442695
        %v2375 = vpow.pop %v2374
        %v2376 = vmul.f32 %v2305, 1.442695
        %v2377 = vpow.pop %v2376
        %v2378 = vmul.f32 %v2306, 1.442695
        %v2379 = vpow.pop %v2378
        %v2380 = vmul.f32 %v2307, 1.442695
        %v2381 = vpow.pop %v2380
        %v2382 = vmul.f32 %v2308, 1.442695
        %v2383 = vpow.pop %v2382
        %v2384 = vmul.f32 %v2309, 1.442695
        %v2385 = vpow.pop %v2384
        %v2386 = vmul.f32 %v2310, 1.442695
        %v2387 = vpow.pop %v2386
        %v2388 = vmul.f32 %v2311, 1.442695
        %v2389 = vpow.pop %v2388
        %v2390 = vmul.f32 %v2312, 1.442695
        %v2391 = vpow.pop %v2390
        %v2392 = vmul.f32 %v2313, 1.442695
        %v2393 = vpow.pop %v2392
        %v2394 = vmul.f32 %v2314, 1.442695
        %v2395 = vpow.pop %v2394
        %v2396 = vmul.f32 %v2315, 1.442695
        %v2397 = vpow.pop %v2396
        %v2398 = vmul.f32 %v2316, 1.442695
        %v2399 = vpow.pop %v2398
        %v2400 = vmul.f32 %v2317, 1.442695
        %v2401 = vpow.pop %v2400
        %v2402 = vmul.f32 %v2318, 1.442695
        %v2403 = vpow.pop %v2402
        %v2404 = vmul.f32 %v2319, 1.442695
        %v2405 = vpow.pop %v2404
        %v2406 = vmul.f32 %v2320, 1.442695
        %v2407 = vpow.pop %v2406
        %v2408 = vmul.f32 %v2321, 1.442695
        %v2409 = vpow.pop %v2408
        %v2410 = vmul.f32 %v2322, 1.442695
        %v2411 = vpow.pop %v2410
        %v2412 = vmul.f32 %v2323, 1.442695
        %v2413 = vpow.pop %v2412
        %v2414 = vmul.f32 %v2324, 1.442695
        %v2415 = vpow.pop %v2414
        %v2416 = vmul.f32 %v2325, 1.442695
        %v2417 = vpow.pop %v2416
        %v2418 = vmul.f32 %v2326, 1.442695
        %v2419 = vpow.pop %v2418
        %v2420 = vmul.f32 %v2327, 1.442695
        %v2421 = vpow.pop %v2420
        %v2422 = vmul.f32 %v2328, 1.442695
        %v2423 = vpow.pop %v2422
        %v2424 = vmul.f32 %v2329, 1.442695
        %v2425 = vpow.pop %v2424
        %v2426 = vadd.f32 %v2331, %v2333
        %v2427 = vadd.f32 %v2426, %v2335
        %v2428 = vadd.f32 %v2427, %v2337
        %2429 = vadd.xlane.f32.xlu0 %v2428
        %v2430 = vpop.xlane.xlu0 %2429
        %v2431 = vadd.f32 %v2339, %v2341
        %v2432 = vadd.f32 %v2431, %v2343
        %v2433 = vadd.f32 %v2432, %v2345
        %2434 = vadd.xlane.f32.xlu0 %v2433
        %v2435 = vpop.xlane.xlu0 %2434
        %v2436 = vadd.f32 %v2347, %v2349
        %v2437 = vadd.f32 %v2436, %v2351
        %v2438 = vadd.f32 %v2437, %v2353
        %2439 = vadd.xlane.f32.xlu0 %v2438
        %v2440 = vpop.xlane.xlu0 %2439
        %v2441 = vadd.f32 %v2355, %v2357
        %v2442 = vadd.f32 %v2441, %v2359
        %v2443 = vadd.f32 %v2442, %v2361
        %2444 = vadd.xlane.f32.xlu0 %v2443
        %v2445 = vpop.xlane.xlu0 %2444
        %v2446 = vadd.f32 %v2363, %v2365
        %v2447 = vadd.f32 %v2446, %v2367
        %v2448 = vadd.f32 %v2447, %v2369
        %2449 = vadd.xlane.f32.xlu0 %v2448
        %v2450 = vpop.xlane.xlu0 %2449
        %v2451 = vadd.f32 %v2371, %v2373
        %v2452 = vadd.f32 %v2451, %v2375
        %v2453 = vadd.f32 %v2452, %v2377
        %2454 = vadd.xlane.f32.xlu0 %v2453
        %v2455 = vpop.xlane.xlu0 %2454
        %v2456 = vadd.f32 %v2379, %v2381
        %v2457 = vadd.f32 %v2456, %v2383
        %v2458 = vadd.f32 %v2457, %v2385
        %2459 = vadd.xlane.f32.xlu0 %v2458
        %v2460 = vpop.xlane.xlu0 %2459
        %v2461 = vadd.f32 %v2387, %v2389
        %v2462 = vadd.f32 %v2461, %v2391
        %v2463 = vadd.f32 %v2462, %v2393
        %2464 = vadd.xlane.f32.xlu0 %v2463
        %v2465 = vpop.xlane.xlu0 %2464
        %v2466 = vadd.f32 %v2395, %v2397
        %v2467 = vadd.f32 %v2466, %v2399
        %v2468 = vadd.f32 %v2467, %v2401
        %2469 = vadd.xlane.f32.xlu0 %v2468
        %v2470 = vpop.xlane.xlu0 %2469
        %v2471 = vadd.f32 %v2403, %v2405
        %v2472 = vadd.f32 %v2471, %v2407
        %v2473 = vadd.f32 %v2472, %v2409
        %2474 = vadd.xlane.f32.xlu0 %v2473
        %v2475 = vpop.xlane.xlu0 %2474
        %v2476 = vadd.f32 %v2411, %v2413
        %v2477 = vadd.f32 %v2476, %v2415
        %v2478 = vadd.f32 %v2477, %v2417
        %2479 = vadd.xlane.f32.xlu0 %v2478
        %v2480 = vpop.xlane.xlu0 %2479
        %v2481 = vadd.f32 %v2419, %v2421
        %v2482 = vadd.f32 %v2481, %v2423
        %v2483 = vadd.f32 %v2482, %v2425
        %2484 = vadd.xlane.f32.xlu0 %v2483
        %v2485 = vpop.xlane.xlu0 %2484
        %v2486 = vrcp.pop %v2430
        %v2487 = vrcp.pop %v2435
        %v2488 = vrcp.pop %v2440
        %v2489 = vrcp.pop %v2445
        %v2490 = vrcp.pop %v2450
        %v2491 = vrcp.pop %v2455
        %v2492 = vrcp.pop %v2460
        %v2493 = vrcp.pop %v2465
        %v2494 = vrcp.pop %v2470
        %v2495 = vrcp.pop %v2475
        %v2496 = vrcp.pop %v2480
        %v2497 = vrcp.pop %v2485
        %v2498 = vmul.f32 %v2331, %v2486
        %v2499 = vmul.f32 %v2333, %v2486
        %v2500 = vmul.f32 %v2335, %v2486
        %v2501 = vmul.f32 %v2337, %v2486
        %v2502 = vmul.f32 %v2339, %v2487
        %v2503 = vmul.f32 %v2341, %v2487
        %v2504 = vmul.f32 %v2343, %v2487
        %v2505 = vmul.f32 %v2345, %v2487
        %v2506 = vmul.f32 %v2347, %v2488
        %v2507 = vmul.f32 %v2349, %v2488
        %v2508 = vmul.f32 %v2351, %v2488
        %v2509 = vmul.f32 %v2353, %v2488
        %v2510 = vmul.f32 %v2355, %v2489
        %v2511 = vmul.f32 %v2357, %v2489
        %v2512 = vmul.f32 %v2359, %v2489
        %v2513 = vmul.f32 %v2361, %v2489
        %v2514 = vmul.f32 %v2363, %v2490
        %v2515 = vmul.f32 %v2365, %v2490
        %v2516 = vmul.f32 %v2367, %v2490
        %v2517 = vmul.f32 %v2369, %v2490
        %v2518 = vmul.f32 %v2371, %v2491
        %v2519 = vmul.f32 %v2373, %v2491
        %v2520 = vmul.f32 %v2375, %v2491
        %v2521 = vmul.f32 %v2377, %v2491
        %v2522 = vmul.f32 %v2379, %v2492
        %v2523 = vmul.f32 %v2381, %v2492
        %v2524 = vmul.f32 %v2383, %v2492
        %v2525 = vmul.f32 %v2385, %v2492
        %v2526 = vmul.f32 %v2387, %v2493
        %v2527 = vmul.f32 %v2389, %v2493
        %v2528 = vmul.f32 %v2391, %v2493
        %v2529 = vmul.f32 %v2393, %v2493
        %v2530 = vmul.f32 %v2395, %v2494
        %v2531 = vmul.f32 %v2397, %v2494
        %v2532 = vmul.f32 %v2399, %v2494
        %v2533 = vmul.f32 %v2401, %v2494
        %v2534 = vmul.f32 %v2403, %v2495
        %v2535 = vmul.f32 %v2405, %v2495
        %v2536 = vmul.f32 %v2407, %v2495
        %v2537 = vmul.f32 %v2409, %v2495
        %v2538 = vmul.f32 %v2411, %v2496
        %v2539 = vmul.f32 %v2413, %v2496
        %v2540 = vmul.f32 %v2415, %v2496
        %v2541 = vmul.f32 %v2417, %v2496
        %v2542 = vmul.f32 %v2419, %v2497
        %v2543 = vmul.f32 %v2421, %v2497
        %v2544 = vmul.f32 %v2423, %v2497
        %v2545 = vmul.f32 %v2425, %v2497
        %v2546 = vrot.slane %v2498, 4
        %v2547 = vadd.f32 %v2498, %v2546
        %v2548 = vrot.slane %v2547, 2
        %v2549 = vadd.f32 %v2547, %v2548
        %v2550 = vrot.slane %v2549, 1
        %v2551 = vadd.f32 %v2549, %v2550
        %v2552 = vrot.slane %v2499, 4
        %v2553 = vadd.f32 %v2499, %v2552
        %v2554 = vrot.slane %v2553, 2
        %v2555 = vadd.f32 %v2553, %v2554
        %v2556 = vrot.slane %v2555, 1
        %v2557 = vadd.f32 %v2555, %v2556
        %v2558 = vrot.slane %v2500, 4
        %v2559 = vadd.f32 %v2500, %v2558
        %v2560 = vrot.slane %v2559, 2
        %v2561 = vadd.f32 %v2559, %v2560
        %v2562 = vrot.slane %v2561, 1
        %v2563 = vadd.f32 %v2561, %v2562
        %v2564 = vrot.slane %v2501, 4
        %v2565 = vadd.f32 %v2501, %v2564
        %v2566 = vrot.slane %v2565, 2
        %v2567 = vadd.f32 %v2565, %v2566
        %v2568 = vrot.slane %v2567, 1
        %v2569 = vadd.f32 %v2567, %v2568
        %v2570 = vrot.slane %v2502, 4
        %v2571 = vadd.f32 %v2502, %v2570
        %v2572 = vrot.slane %v2571, 2
        %v2573 = vadd.f32 %v2571, %v2572
        %v2574 = vrot.slane %v2573, 1
        %v2575 = vadd.f32 %v2573, %v2574
        %v2576 = vrot.slane %v2503, 4
        %v2577 = vadd.f32 %v2503, %v2576
        %v2578 = vrot.slane %v2577, 2
        %v2579 = vadd.f32 %v2577, %v2578
        %v2580 = vrot.slane %v2579, 1
        %v2581 = vadd.f32 %v2579, %v2580
        %v2582 = vrot.slane %v2504, 4
        %v2583 = vadd.f32 %v2504, %v2582
        %v2584 = vrot.slane %v2583, 2
        %v2585 = vadd.f32 %v2583, %v2584
        %v2586 = vrot.slane %v2585, 1
        %v2587 = vadd.f32 %v2585, %v2586
        %v2588 = vrot.slane %v2505, 4
        %v2589 = vadd.f32 %v2505, %v2588
        %v2590 = vrot.slane %v2589, 2
        %v2591 = vadd.f32 %v2589, %v2590
        %v2592 = vrot.slane %v2591, 1
        %v2593 = vadd.f32 %v2591, %v2592
        %v2594 = vrot.slane %v2506, 4
        %v2595 = vadd.f32 %v2506, %v2594
        %v2596 = vrot.slane %v2595, 2
        %v2597 = vadd.f32 %v2595, %v2596
        %v2598 = vrot.slane %v2597, 1
        %v2599 = vadd.f32 %v2597, %v2598
        %v2600 = vrot.slane %v2507, 4
        %v2601 = vadd.f32 %v2507, %v2600
        %v2602 = vrot.slane %v2601, 2
        %v2603 = vadd.f32 %v2601, %v2602
        %v2604 = vrot.slane %v2603, 1
        %v2605 = vadd.f32 %v2603, %v2604
        %v2606 = vrot.slane %v2508, 4
        %v2607 = vadd.f32 %v2508, %v2606
        %v2608 = vrot.slane %v2607, 2
        %v2609 = vadd.f32 %v2607, %v2608
        %v2610 = vrot.slane %v2609, 1
        %v2611 = vadd.f32 %v2609, %v2610
        %v2612 = vrot.slane %v2509, 4
        %v2613 = vadd.f32 %v2509, %v2612
        %v2614 = vrot.slane %v2613, 2
        %v2615 = vadd.f32 %v2613, %v2614
        %v2616 = vrot.slane %v2615, 1
        %v2617 = vadd.f32 %v2615, %v2616
        %v2618 = vrot.slane %v2510, 4
        %v2619 = vadd.f32 %v2510, %v2618
        %v2620 = vrot.slane %v2619, 2
        %v2621 = vadd.f32 %v2619, %v2620
        %v2622 = vrot.slane %v2621, 1
        %v2623 = vadd.f32 %v2621, %v2622
        %v2624 = vrot.slane %v2511, 4
        %v2625 = vadd.f32 %v2511, %v2624
        %v2626 = vrot.slane %v2625, 2
        %v2627 = vadd.f32 %v2625, %v2626
        %v2628 = vrot.slane %v2627, 1
        %v2629 = vadd.f32 %v2627, %v2628
        %v2630 = vrot.slane %v2512, 4
        %v2631 = vadd.f32 %v2512, %v2630
        %v2632 = vrot.slane %v2631, 2
        %v2633 = vadd.f32 %v2631, %v2632
        %v2634 = vrot.slane %v2633, 1
        %v2635 = vadd.f32 %v2633, %v2634
        %v2636 = vrot.slane %v2513, 4
        %v2637 = vadd.f32 %v2513, %v2636
        %v2638 = vrot.slane %v2637, 2
        %v2639 = vadd.f32 %v2637, %v2638
        %v2640 = vrot.slane %v2639, 1
        %v2641 = vadd.f32 %v2639, %v2640
        %v2642 = vrot.slane %v2514, 4
        %v2643 = vadd.f32 %v2514, %v2642
        %v2644 = vrot.slane %v2643, 2
        %v2645 = vadd.f32 %v2643, %v2644
        %v2646 = vrot.slane %v2645, 1
        %v2647 = vadd.f32 %v2645, %v2646
        %v2648 = vrot.slane %v2515, 4
        %v2649 = vadd.f32 %v2515, %v2648
        %v2650 = vrot.slane %v2649, 2
        %v2651 = vadd.f32 %v2649, %v2650
        %v2652 = vrot.slane %v2651, 1
        %v2653 = vadd.f32 %v2651, %v2652
        %v2654 = vrot.slane %v2516, 4
        %v2655 = vadd.f32 %v2516, %v2654
        %v2656 = vrot.slane %v2655, 2
        %v2657 = vadd.f32 %v2655, %v2656
        %v2658 = vrot.slane %v2657, 1
        %v2659 = vadd.f32 %v2657, %v2658
        %v2660 = vrot.slane %v2517, 4
        %v2661 = vadd.f32 %v2517, %v2660
        %v2662 = vrot.slane %v2661, 2
        %v2663 = vadd.f32 %v2661, %v2662
        %v2664 = vrot.slane %v2663, 1
        %v2665 = vadd.f32 %v2663, %v2664
        %v2666 = vrot.slane %v2518, 4
        %v2667 = vadd.f32 %v2518, %v2666
        %v2668 = vrot.slane %v2667, 2
        %v2669 = vadd.f32 %v2667, %v2668
        %v2670 = vrot.slane %v2669, 1
        %v2671 = vadd.f32 %v2669, %v2670
        %v2672 = vrot.slane %v2519, 4
        %v2673 = vadd.f32 %v2519, %v2672
        %v2674 = vrot.slane %v2673, 2
        %v2675 = vadd.f32 %v2673, %v2674
        %v2676 = vrot.slane %v2675, 1
        %v2677 = vadd.f32 %v2675, %v2676
        %v2678 = vrot.slane %v2520, 4
        %v2679 = vadd.f32 %v2520, %v2678
        %v2680 = vrot.slane %v2679, 2
        %v2681 = vadd.f32 %v2679, %v2680
        %v2682 = vrot.slane %v2681, 1
        %v2683 = vadd.f32 %v2681, %v2682
        %v2684 = vrot.slane %v2521, 4
        %v2685 = vadd.f32 %v2521, %v2684
        %v2686 = vrot.slane %v2685, 2
        %v2687 = vadd.f32 %v2685, %v2686
        %v2688 = vrot.slane %v2687, 1
        %v2689 = vadd.f32 %v2687, %v2688
        %v2690 = vrot.slane %v2522, 4
        %v2691 = vadd.f32 %v2522, %v2690
        %v2692 = vrot.slane %v2691, 2
        %v2693 = vadd.f32 %v2691, %v2692
        %v2694 = vrot.slane %v2693, 1
        %v2695 = vadd.f32 %v2693, %v2694
        %v2696 = vrot.slane %v2523, 4
        %v2697 = vadd.f32 %v2523, %v2696
        %v2698 = vrot.slane %v2697, 2
        %v2699 = vadd.f32 %v2697, %v2698
        %v2700 = vrot.slane %v2699, 1
        %v2701 = vadd.f32 %v2699, %v2700
        %v2702 = vrot.slane %v2524, 4
        %v2703 = vadd.f32 %v2524, %v2702
        %v2704 = vrot.slane %v2703, 2
        %v2705 = vadd.f32 %v2703, %v2704
        %v2706 = vrot.slane %v2705, 1
        %v2707 = vadd.f32 %v2705, %v2706
        %v2708 = vrot.slane %v2525, 4
        %v2709 = vadd.f32 %v2525, %v2708
        %v2710 = vrot.slane %v2709, 2
        %v2711 = vadd.f32 %v2709, %v2710
        %v2712 = vrot.slane %v2711, 1
        %v2713 = vadd.f32 %v2711, %v2712
        %v2714 = vrot.slane %v2526, 4
        %v2715 = vadd.f32 %v2526, %v2714
        %v2716 = vrot.slane %v2715, 2
        %v2717 = vadd.f32 %v2715, %v2716
        %v2718 = vrot.slane %v2717, 1
        %v2719 = vadd.f32 %v2717, %v2718
        %v2720 = vrot.slane %v2527, 4
        %v2721 = vadd.f32 %v2527, %v2720
        %v2722 = vrot.slane %v2721, 2
        %v2723 = vadd.f32 %v2721, %v2722
        %v2724 = vrot.slane %v2723, 1
        %v2725 = vadd.f32 %v2723, %v2724
        %v2726 = vrot.slane %v2528, 4
        %v2727 = vadd.f32 %v2528, %v2726
        %v2728 = vrot.slane %v2727, 2
        %v2729 = vadd.f32 %v2727, %v2728
        %v2730 = vrot.slane %v2729, 1
        %v2731 = vadd.f32 %v2729, %v2730
        %v2732 = vrot.slane %v2529, 4
        %v2733 = vadd.f32 %v2529, %v2732
        %v2734 = vrot.slane %v2733, 2
        %v2735 = vadd.f32 %v2733, %v2734
        %v2736 = vrot.slane %v2735, 1
        %v2737 = vadd.f32 %v2735, %v2736
        %v2738 = vrot.slane %v2530, 4
        %v2739 = vadd.f32 %v2530, %v2738
        %v2740 = vrot.slane %v2739, 2
        %v2741 = vadd.f32 %v2739, %v2740
        %v2742 = vrot.slane %v2741, 1
        %v2743 = vadd.f32 %v2741, %v2742
        %v2744 = vrot.slane %v2531, 4
        %v2745 = vadd.f32 %v2531, %v2744
        %v2746 = vrot.slane %v2745, 2
        %v2747 = vadd.f32 %v2745, %v2746
        %v2748 = vrot.slane %v2747, 1
        %v2749 = vadd.f32 %v2747, %v2748
        %v2750 = vrot.slane %v2532, 4
        %v2751 = vadd.f32 %v2532, %v2750
        %v2752 = vrot.slane %v2751, 2
        %v2753 = vadd.f32 %v2751, %v2752
        %v2754 = vrot.slane %v2753, 1
        %v2755 = vadd.f32 %v2753, %v2754
        %v2756 = vrot.slane %v2533, 4
        %v2757 = vadd.f32 %v2533, %v2756
        %v2758 = vrot.slane %v2757, 2
        %v2759 = vadd.f32 %v2757, %v2758
        %v2760 = vrot.slane %v2759, 1
        %v2761 = vadd.f32 %v2759, %v2760
        %v2762 = vrot.slane %v2534, 4
        %v2763 = vadd.f32 %v2534, %v2762
        %v2764 = vrot.slane %v2763, 2
        %v2765 = vadd.f32 %v2763, %v2764
        %v2766 = vrot.slane %v2765, 1
        %v2767 = vadd.f32 %v2765, %v2766
        %v2768 = vrot.slane %v2535, 4
        %v2769 = vadd.f32 %v2535, %v2768
        %v2770 = vrot.slane %v2769, 2
        %v2771 = vadd.f32 %v2769, %v2770
        %v2772 = vrot.slane %v2771, 1
        %v2773 = vadd.f32 %v2771, %v2772
        %v2774 = vrot.slane %v2536, 4
        %v2775 = vadd.f32 %v2536, %v2774
        %v2776 = vrot.slane %v2775, 2
        %v2777 = vadd.f32 %v2775, %v2776
        %v2778 = vrot.slane %v2777, 1
        %v2779 = vadd.f32 %v2777, %v2778
        %v2780 = vrot.slane %v2537, 4
        %v2781 = vadd.f32 %v2537, %v2780
        %v2782 = vrot.slane %v2781, 2
        %v2783 = vadd.f32 %v2781, %v2782
        %v2784 = vrot.slane %v2783, 1
        %v2785 = vadd.f32 %v2783, %v2784
        %v2786 = vrot.slane %v2538, 4
        %v2787 = vadd.f32 %v2538, %v2786
        %v2788 = vrot.slane %v2787, 2
        %v2789 = vadd.f32 %v2787, %v2788
        %v2790 = vrot.slane %v2789, 1
        %v2791 = vadd.f32 %v2789, %v2790
        %v2792 = vrot.slane %v2539, 4
        %v2793 = vadd.f32 %v2539, %v2792
        %v2794 = vrot.slane %v2793, 2
        %v2795 = vadd.f32 %v2793, %v2794
        %v2796 = vrot.slane %v2795, 1
        %v2797 = vadd.f32 %v2795, %v2796
        %v2798 = vrot.slane %v2540, 4
        %v2799 = vadd.f32 %v2540, %v2798
        %v2800 = vrot.slane %v2799, 2
        %v2801 = vadd.f32 %v2799, %v2800
        %v2802 = vrot.slane %v2801, 1
        %v2803 = vadd.f32 %v2801, %v2802
        %v2804 = vrot.slane %v2541, 4
        %v2805 = vadd.f32 %v2541, %v2804
        %v2806 = vrot.slane %v2805, 2
        %v2807 = vadd.f32 %v2805, %v2806
        %v2808 = vrot.slane %v2807, 1
        %v2809 = vadd.f32 %v2807, %v2808
        %v2810 = vrot.slane %v2542, 4
        %v2811 = vadd.f32 %v2542, %v2810
        %v2812 = vrot.slane %v2811, 2
        %v2813 = vadd.f32 %v2811, %v2812
        %v2814 = vrot.slane %v2813, 1
        %v2815 = vadd.f32 %v2813, %v2814
        %v2816 = vrot.slane %v2543, 4
        %v2817 = vadd.f32 %v2543, %v2816
        %v2818 = vrot.slane %v2817, 2
        %v2819 = vadd.f32 %v2817, %v2818
        %v2820 = vrot.slane %v2819, 1
        %v2821 = vadd.f32 %v2819, %v2820
        %v2822 = vrot.slane %v2544, 4
        %v2823 = vadd.f32 %v2544, %v2822
        %v2824 = vrot.slane %v2823, 2
        %v2825 = vadd.f32 %v2823, %v2824
        %v2826 = vrot.slane %v2825, 1
        %v2827 = vadd.f32 %v2825, %v2826
        %v2828 = vrot.slane %v2545, 4
        %v2829 = vadd.f32 %v2545, %v2828
        %v2830 = vrot.slane %v2829, 2
        %v2831 = vadd.f32 %v2829, %v2830
        %v2832 = vrot.slane %v2831, 1
        %v2833 = vadd.f32 %v2831, %v2832
        %v2840 = vunpack.c.l.b16 %v288
        %v2841 = vunpack.c.h.b16 %v288
        %v2842 = vunpack.c.l.b16 %v289
        %v2843 = vunpack.c.h.b16 %v289
        %v2844 = vunpack.c.l.b16 %v290
        %v2845 = vunpack.c.h.b16 %v290
        %v2846 = vunpack.c.l.b16 %v291
        %v2847 = vunpack.c.h.b16 %v291
        %v2848 = vunpack.c.l.b16 %v292
        %v2849 = vunpack.c.h.b16 %v292
        %v2850 = vunpack.c.l.b16 %v293
        %v2851 = vunpack.c.h.b16 %v293
        %v2852 = vpack.c.b16 %v2846, %v2840
        %v2853 = vpack.c.b16 %v2847, %v2841
        %v2854 = vpack.c.b16 %v2848, %v2842
        %v2855 = vpack.c.b16 %v2849, %v2843
        %v2856 = vpack.c.b16 %v2850, %v2844
        %v2857 = vpack.c.b16 %v2851, %v2845
        %2864 = vmatprep.subr.bf16.mxu0 %v1281
        %2865 = vmatpush1.bf16.msra.mxu0 %v1280
        %2866 = vmatprep.subr.bf16.mxu0 %v1285
        %2867 = vmatpush1.bf16.msra.mxu0 %v1284
        %2868 = vmatprep.subr.bf16.mxu0 %v1289
        %2869 = vmatpush1.bf16.msra.mxu0 %v1288
        %2870 = vmatprep.subr.bf16.mxu0 %v1293
        %2871 = vmatpush1.bf16.msra.mxu0 %v1292
        %2872 = vmatprep.subr.bf16.mxu0 %v1297
        %2873 = vmatpush1.bf16.msra.mxu0 %v1296
        %2874 = vmatprep.subr.bf16.mxu0 %v1301
        %2875 = vmatpush1.bf16.msra.mxu0 %v1300
        %2876 = vmatprep.subr.bf16.mxu0 %v1305
        %2877 = vmatpush1.bf16.msra.mxu0 %v1304
        %2878 = vmatprep.subr.bf16.mxu0 %v1309
        %2879 = vmatpush1.bf16.msra.mxu0 %v1308
        %2880 = vmatprep.subr.bf16.mxu0 %v1313
        %2881 = vmatpush1.bf16.msra.mxu0 %v1312
        %2882 = vmatprep.subr.bf16.mxu0 %v1317
        %2883 = vmatpush1.bf16.msra.mxu0 %v1316
        %2884 = vmatprep.subr.bf16.mxu0 %v1321
        %2885 = vmatpush1.bf16.msra.mxu0 %v1320
        %2886 = vmatprep.subr.bf16.mxu0 %v1325
        %2887 = vmatpush1.bf16.msra.mxu0 %v1324
        %2888 = vmatprep.subr.bf16.mxu0 %v1329
        %2889 = vmatpush1.bf16.msra.mxu0 %v1328
        %2890 = vmatprep.subr.bf16.mxu0 %v1333
        %2891 = vmatpush1.bf16.msra.mxu0 %v1332
        %2892 = vmatprep.subr.bf16.mxu0 %v1337
        %2893 = vmatpush1.bf16.msra.mxu0 %v1336
        %2894 = vmatprep.subr.bf16.mxu0 %v1341
        %2895 = vmatpush1.bf16.msra.mxu0 %v1340
        %2896 = vmatprep.mubr.bf16.mxu0 %v2853
        %2897 = vmatmul.mubr.bf16.gmra.mrb[0].mxu0 %v2852
        %v2898 = vpop.f32.mrb[0].mxu0
        %v2899 = vadd.f32 0.0, %v2898
        %v2900 = vpop.f32.mrb[0].mxu0
        %v2901 = vadd.f32 0.0, %v2900
        %v2902 = vpop.f32.mrb[0].mxu0
        %v2903 = vadd.f32 0.0, %v2902
        %v2904 = vpop.f32.mrb[0].mxu0
        %v2905 = vadd.f32 0.0, %v2904
        %2906 = vdwg.mxu0
        %2907 = vmatprep.subr.bf16.mxu0 %v1345
        %2908 = vmatpush1.bf16.msra.mxu0 %v1344
        %2909 = vmatprep.subr.bf16.mxu0 %v1349
        %2910 = vmatpush1.bf16.msra.mxu0 %v1348
        %2911 = vmatprep.subr.bf16.mxu0 %v1353
        %2912 = vmatpush1.bf16.msra.mxu0 %v1352
        %2913 = vmatprep.subr.bf16.mxu0 %v1357
        %2914 = vmatpush1.bf16.msra.mxu0 %v1356
        %2915 = vmatprep.subr.bf16.mxu0 %v1361
        %2916 = vmatpush1.bf16.msra.mxu0 %v1360
        %2917 = vmatprep.subr.bf16.mxu0 %v1365
        %2918 = vmatpush1.bf16.msra.mxu0 %v1364
        %2919 = vmatprep.subr.bf16.mxu0 %v1369
        %2920 = vmatpush1.bf16.msra.mxu0 %v1368
        %2921 = vmatprep.subr.bf16.mxu0 %v1373
        %2922 = vmatpush1.bf16.msra.mxu0 %v1372
        %2923 = vmatprep.subr.bf16.mxu0 %v1377
        %2924 = vmatpush1.bf16.msra.mxu0 %v1376
        %2925 = vmatprep.subr.bf16.mxu0 %v1381
        %2926 = vmatpush1.bf16.msra.mxu0 %v1380
        %2927 = vmatprep.subr.bf16.mxu0 %v1385
        %2928 = vmatpush1.bf16.msra.mxu0 %v1384
        %2929 = vmatprep.subr.bf16.mxu0 %v1389
        %2930 = vmatpush1.bf16.msra.mxu0 %v1388
        %2931 = vmatprep.subr.bf16.mxu0 %v1393
        %2932 = vmatpush1.bf16.msra.mxu0 %v1392
        %2933 = vmatprep.subr.bf16.mxu0 %v1397
        %2934 = vmatpush1.bf16.msra.mxu0 %v1396
        %2935 = vmatprep.subr.bf16.mxu0 %v1401
        %2936 = vmatpush1.bf16.msra.mxu0 %v1400
        %2937 = vmatprep.subr.bf16.mxu0 %v1405
        %2938 = vmatpush1.bf16.msra.mxu0 %v1404
        %2939 = vmatprep.mubr.bf16.mxu0 %v2855
        %2940 = vmatmul.mubr.bf16.gmra.mrb[0].mxu0 %v2854
        %v2941 = vpop.f32.mrb[0].mxu0
        %v2942 = vadd.f32 %v2899, %v2941
        %v2943 = vpop.f32.mrb[0].mxu0
        %v2944 = vadd.f32 %v2901, %v2943
        %v2945 = vpop.f32.mrb[0].mxu0
        %v2946 = vadd.f32 %v2903, %v2945
        %v2947 = vpop.f32.mrb[0].mxu0
        %v2948 = vadd.f32 %v2905, %v2947
        %2949 = vdwg.mxu0
        %2950 = vmatprep.subr.bf16.mxu0 %v1409
        %2951 = vmatpush1.bf16.msra.mxu0 %v1408
        %2952 = vmatprep.subr.bf16.mxu0 %v1413
        %2953 = vmatpush1.bf16.msra.mxu0 %v1412
        %2954 = vmatprep.subr.bf16.mxu0 %v1417
        %2955 = vmatpush1.bf16.msra.mxu0 %v1416
        %2956 = vmatprep.subr.bf16.mxu0 %v1421
        %2957 = vmatpush1.bf16.msra.mxu0 %v1420
        %2958 = vmatprep.subr.bf16.mxu0 %v1425
        %2959 = vmatpush1.bf16.msra.mxu0 %v1424
        %2960 = vmatprep.subr.bf16.mxu0 %v1429
        %2961 = vmatpush1.bf16.msra.mxu0 %v1428
        %2962 = vmatprep.subr.bf16.mxu0 %v1433
        %2963 = vmatpush1.bf16.msra.mxu0 %v1432
        %2964 = vmatprep.subr.bf16.mxu0 %v1437
        %2965 = vmatpush1.bf16.msra.mxu0 %v1436
        %2966 = vmatprep.subr.bf16.mxu0 %v1441
        %2967 = vmatpush1.bf16.msra.mxu0 %v1440
        %2968 = vmatprep.subr.bf16.mxu0 %v1445
        %2969 = vmatpush1.bf16.msra.mxu0 %v1444
        %2970 = vmatprep.subr.bf16.mxu0 %v1449
        %2971 = vmatpush1.bf16.msra.mxu0 %v1448
        %2972 = vmatprep.subr.bf16.mxu0 %v1453
        %2973 = vmatpush1.bf16.msra.mxu0 %v1452
        %2974 = vmatprep.subr.bf16.mxu0 %v1457
        %2975 = vmatpush1.bf16.msra.mxu0 %v1456
        %2976 = vmatprep.subr.bf16.mxu0 %v1461
        %2977 = vmatpush1.bf16.msra.mxu0 %v1460
        %2978 = vmatprep.subr.bf16.mxu0 %v1465
        %2979 = vmatpush1.bf16.msra.mxu0 %v1464
        %2980 = vmatprep.subr.bf16.mxu0 %v1469
        %2981 = vmatpush1.bf16.msra.mxu0 %v1468
        %2982 = vmatprep.mubr.bf16.mxu0 %v2857
        %2983 = vmatmul.mubr.bf16.gmra.mrb[0].mxu0 %v2856
        %v2984 = vpop.f32.mrb[0].mxu0
        %v2985 = vadd.f32 %v2942, %v2984
        %v2986 = vpop.f32.mrb[0].mxu0
        %v2987 = vadd.f32 %v2944, %v2986
        %v2988 = vpop.f32.mrb[0].mxu0
        %v2989 = vadd.f32 %v2946, %v2988
        %v2990 = vpop.f32.mrb[0].mxu0
        %v2991 = vadd.f32 %v2948, %v2990
        %2992 = vdwg.mxu0
        %2993 = vmatprep.subr.bf16.mxu0 %v1283
        %2994 = vmatpush1.bf16.msra.mxu0 %v1282
        %2995 = vmatprep.subr.bf16.mxu0 %v1287
        %2996 = vmatpush1.bf16.msra.mxu0 %v1286
        %2997 = vmatprep.subr.bf16.mxu0 %v1291
        %2998 = vmatpush1.bf16.msra.mxu0 %v1290
        %2999 = vmatprep.subr.bf16.mxu0 %v1295
        %3000 = vmatpush1.bf16.msra.mxu0 %v1294
        %3001 = vmatprep.subr.bf16.mxu0 %v1299
        %3002 = vmatpush1.bf16.msra.mxu0 %v1298
        %3003 = vmatprep.subr.bf16.mxu0 %v1303
        %3004 = vmatpush1.bf16.msra.mxu0 %v1302
        %3005 = vmatprep.subr.bf16.mxu0 %v1307
        %3006 = vmatpush1.bf16.msra.mxu0 %v1306
        %3007 = vmatprep.subr.bf16.mxu0 %v1311
        %3008 = vmatpush1.bf16.msra.mxu0 %v1310
        %3009 = vmatprep.subr.bf16.mxu0 %v1315
        %3010 = vmatpush1.bf16.msra.mxu0 %v1314
        %3011 = vmatprep.subr.bf16.mxu0 %v1319
        %3012 = vmatpush1.bf16.msra.mxu0 %v1318
        %3013 = vmatprep.subr.bf16.mxu0 %v1323
        %3014 = vmatpush1.bf16.msra.mxu0 %v1322
        %3015 = vmatprep.subr.bf16.mxu0 %v1327
        %3016 = vmatpush1.bf16.msra.mxu0 %v1326
        %3017 = vmatprep.subr.bf16.mxu0 %v1331
        %3018 = vmatpush1.bf16.msra.mxu0 %v1330
        %3019 = vmatprep.subr.bf16.mxu0 %v1335
        %3020 = vmatpush1.bf16.msra.mxu0 %v1334
        %3021 = vmatprep.subr.bf16.mxu0 %v1339
        %3022 = vmatpush1.bf16.msra.mxu0 %v1338
        %3023 = vmatprep.subr.bf16.mxu0 %v1343
        %3024 = vmatpush1.bf16.msra.mxu0 %v1342
        %3025 = vmatprep.mubr.bf16.mxu0 %v2853
        %3026 = vmatmul.mubr.bf16.gmra.mrb[0].mxu0 %v2852
        %v3027 = vpop.f32.mrb[0].mxu0
        %v3028 = vadd.f32 0.0, %v3027
        %v3029 = vpop.f32.mrb[0].mxu0
        %v3030 = vadd.f32 0.0, %v3029
        %v3031 = vpop.f32.mrb[0].mxu0
        %v3032 = vadd.f32 0.0, %v3031
        %v3033 = vpop.f32.mrb[0].mxu0
        %v3034 = vadd.f32 0.0, %v3033
        %3035 = vdwg.mxu0
        %3036 = vmatprep.subr.bf16.mxu0 %v1347
        %3037 = vmatpush1.bf16.msra.mxu0 %v1346
        %3038 = vmatprep.subr.bf16.mxu0 %v1351
        %3039 = vmatpush1.bf16.msra.mxu0 %v1350
        %3040 = vmatprep.subr.bf16.mxu0 %v1355
        %3041 = vmatpush1.bf16.msra.mxu0 %v1354
        %3042 = vmatprep.subr.bf16.mxu0 %v1359
        %3043 = vmatpush1.bf16.msra.mxu0 %v1358
        %3044 = vmatprep.subr.bf16.mxu0 %v1363
        %3045 = vmatpush1.bf16.msra.mxu0 %v1362
        %3046 = vmatprep.subr.bf16.mxu0 %v1367
        %3047 = vmatpush1.bf16.msra.mxu0 %v1366
        %3048 = vmatprep.subr.bf16.mxu0 %v1371
        %3049 = vmatpush1.bf16.msra.mxu0 %v1370
        %3050 = vmatprep.subr.bf16.mxu0 %v1375
        %3051 = vmatpush1.bf16.msra.mxu0 %v1374
        %3052 = vmatprep.subr.bf16.mxu0 %v1379
        %3053 = vmatpush1.bf16.msra.mxu0 %v1378
        %3054 = vmatprep.subr.bf16.mxu0 %v1383
        %3055 = vmatpush1.bf16.msra.mxu0 %v1382
        %3056 = vmatprep.subr.bf16.mxu0 %v1387
        %3057 = vmatpush1.bf16.msra.mxu0 %v1386
        %3058 = vmatprep.subr.bf16.mxu0 %v1391
        %3059 = vmatpush1.bf16.msra.mxu0 %v1390
        %3060 = vmatprep.subr.bf16.mxu0 %v1395
        %3061 = vmatpush1.bf16.msra.mxu0 %v1394
        %3062 = vmatprep.subr.bf16.mxu0 %v1399
        %3063 = vmatpush1.bf16.msra.mxu0 %v1398
        %3064 = vmatprep.subr.bf16.mxu0 %v1403
        %3065 = vmatpush1.bf16.msra.mxu0 %v1402
        %3066 = vmatprep.subr.bf16.mxu0 %v1407
        %3067 = vmatpush1.bf16.msra.mxu0 %v1406
        %3068 = vmatprep.mubr.bf16.mxu0 %v2855
        %3069 = vmatmul.mubr.bf16.gmra.mrb[0].mxu0 %v2854
        %v3070 = vpop.f32.mrb[0].mxu0
        %v3071 = vadd.f32 %v3028, %v3070
        %v3072 = vpop.f32.mrb[0].mxu0
        %v3073 = vadd.f32 %v3030, %v3072
        %v3074 = vpop.f32.mrb[0].mxu0
        %v3075 = vadd.f32 %v3032, %v3074
        %v3076 = vpop.f32.mrb[0].mxu0
        %v3077 = vadd.f32 %v3034, %v3076
        %3078 = vdwg.mxu0
        %3079 = vmatprep.subr.bf16.mxu0 %v1411
        %3080 = vmatpush1.bf16.msra.mxu0 %v1410
        %3081 = vmatprep.subr.bf16.mxu0 %v1415
        %3082 = vmatpush1.bf16.msra.mxu0 %v1414
        %3083 = vmatprep.subr.bf16.mxu0 %v1419
        %3084 = vmatpush1.bf16.msra.mxu0 %v1418
        %3085 = vmatprep.subr.bf16.mxu0 %v1423
        %3086 = vmatpush1.bf16.msra.mxu0 %v1422
        %3087 = vmatprep.subr.bf16.mxu0 %v1427
        %3088 = vmatpush1.bf16.msra.mxu0 %v1426
        %3089 = vmatprep.subr.bf16.mxu0 %v1431
        %3090 = vmatpush1.bf16.msra.mxu0 %v1430
        %3091 = vmatprep.subr.bf16.mxu0 %v1435
        %3092 = vmatpush1.bf16.msra.mxu0 %v1434
        %3093 = vmatprep.subr.bf16.mxu0 %v1439
        %3094 = vmatpush1.bf16.msra.mxu0 %v1438
        %3095 = vmatprep.subr.bf16.mxu0 %v1443
        %3096 = vmatpush1.bf16.msra.mxu0 %v1442
        %3097 = vmatprep.subr.bf16.mxu0 %v1447
        %3098 = vmatpush1.bf16.msra.mxu0 %v1446
        %3099 = vmatprep.subr.bf16.mxu0 %v1451
        %3100 = vmatpush1.bf16.msra.mxu0 %v1450
        %3101 = vmatprep.subr.bf16.mxu0 %v1455
        %3102 = vmatpush1.bf16.msra.mxu0 %v1454
        %3103 = vmatprep.subr.bf16.mxu0 %v1459
        %3104 = vmatpush1.bf16.msra.mxu0 %v1458
        %3105 = vmatprep.subr.bf16.mxu0 %v1463
        %3106 = vmatpush1.bf16.msra.mxu0 %v1462
        %3107 = vmatprep.subr.bf16.mxu0 %v1467
        %3108 = vmatpush1.bf16.msra.mxu0 %v1466
        %3109 = vmatprep.subr.bf16.mxu0 %v1471
        %3110 = vmatpush1.bf16.msra.mxu0 %v1470
        %3111 = vmatprep.mubr.bf16.mxu0 %v2857
        %3112 = vmatmul.mubr.bf16.gmra.mrb[0].mxu0 %v2856
        %v3113 = vpop.f32.mrb[0].mxu0
        %v3114 = vadd.f32 %v3071, %v3113
        %v3115 = vpop.f32.mrb[0].mxu0
        %v3116 = vadd.f32 %v3073, %v3115
        %v3117 = vpop.f32.mrb[0].mxu0
        %v3118 = vadd.f32 %v3075, %v3117
        %v3119 = vpop.f32.mrb[0].mxu0
        %v3120 = vadd.f32 %v3077, %v3119
        %3121 = vdwg.mxu0
        %v3130 = vrot.slane %v2985, 1
        %v3131 = vrot.slane %v2987, 1
        %v3132 = vrot.slane %v3114, 1
        %v3133 = vrot.slane %v3116, 1
        %v3134 = vrot.slane %v2985, 2
        %v3135 = vrot.slane %v2987, 2
        %v3136 = vrot.slane %v3114, 2
        %v3137 = vrot.slane %v3116, 2
        %v3138 = vrot.slane %v2985, 3
        %v3139 = vrot.slane %v2987, 3
        %v3140 = vrot.slane %v3114, 3
        %v3141 = vrot.slane %v3116, 3
        %v3142 = vrot.slane %v2985, 4
        %v3143 = vrot.slane %v2987, 4
        %v3144 = vrot.slane %v3114, 4
        %v3145 = vrot.slane %v3116, 4
        %v3146 = vrot.slane %v2985, 5
        %v3147 = vrot.slane %v2987, 5
        %v3148 = vrot.slane %v3114, 5
        %v3149 = vrot.slane %v3116, 5
        %v3150 = vrot.slane %v2985, 6
        %v3151 = vrot.slane %v2987, 6
        %v3152 = vrot.slane %v3114, 6
        %v3153 = vrot.slane %v3116, 6
        %v3154 = vrot.slane %v2985, 7
        %v3155 = vrot.slane %v2987, 7
        %v3156 = vrot.slane %v3114, 7
        %v3157 = vrot.slane %v3116, 7
        %v3158 = vrot.slane %v2989, 1
        %v3159 = vrot.slane %v2991, 1
        %v3160 = vrot.slane %v3118, 1
        %v3161 = vrot.slane %v3120, 1
        %v3162 = vrot.slane %v2989, 2
        %v3163 = vrot.slane %v2991, 2
        %v3164 = vrot.slane %v3118, 2
        %v3165 = vrot.slane %v3120, 2
        %v3166 = vrot.slane %v2989, 3
        %v3167 = vrot.slane %v2991, 3
        %v3168 = vrot.slane %v3118, 3
        %v3169 = vrot.slane %v3120, 3
        %v3218 = vmul.f32 %v2551, %v2985
        %v3219 = vmul.f32 %v2557, %v2987
        %v3220 = vmul.f32 %v2563, %v3114
        %v3221 = vmul.f32 %v2569, %v3116
        %v3222 = vmul.f32 %v2575, %v3130
        %v3223 = vmul.f32 %v2581, %v3131
        %v3224 = vmul.f32 %v2587, %v3132
        %v3225 = vmul.f32 %v2593, %v3133
        %v3226 = vmul.f32 %v2599, %v3134
        %v3227 = vmul.f32 %v2605, %v3135
        %v3228 = vmul.f32 %v2611, %v3136
        %v3229 = vmul.f32 %v2617, %v3137
        %v3230 = vmul.f32 %v2623, %v3138
        %v3231 = vmul.f32 %v2629, %v3139
        %v3232 = vmul.f32 %v2635, %v3140
        %v3233 = vmul.f32 %v2641, %v3141
        %v3234 = vmul.f32 %v2647, %v3142
        %v3235 = vmul.f32 %v2653, %v3143
        %v3236 = vmul.f32 %v2659, %v3144
        %v3237 = vmul.f32 %v2665, %v3145
        %v3238 = vmul.f32 %v2671, %v3146
        %v3239 = vmul.f32 %v2677, %v3147
        %v3240 = vmul.f32 %v2683, %v3148
        %v3241 = vmul.f32 %v2689, %v3149
        %v3242 = vmul.f32 %v2695, %v3150
        %v3243 = vmul.f32 %v2701, %v3151
        %v3244 = vmul.f32 %v2707, %v3152
        %v3245 = vmul.f32 %v2713, %v3153
        %v3246 = vmul.f32 %v2719, %v3154
        %v3247 = vmul.f32 %v2725, %v3155
        %v3248 = vmul.f32 %v2731, %v3156
        %v3249 = vmul.f32 %v2737, %v3157
        %v3250 = vmul.f32 %v2743, %v2989
        %v3251 = vmul.f32 %v2749, %v2991
        %v3252 = vmul.f32 %v2755, %v3118
        %v3253 = vmul.f32 %v2761, %v3120
        %v3254 = vmul.f32 %v2767, %v3158
        %v3255 = vmul.f32 %v2773, %v3159
        %v3256 = vmul.f32 %v2779, %v3160
        %v3257 = vmul.f32 %v2785, %v3161
        %v3258 = vmul.f32 %v2791, %v3162
        %v3259 = vmul.f32 %v2797, %v3163
        %v3260 = vmul.f32 %v2803, %v3164
        %v3261 = vmul.f32 %v2809, %v3165
        %v3262 = vmul.f32 %v2815, %v3166
        %v3263 = vmul.f32 %v2821, %v3167
        %v3264 = vmul.f32 %v2827, %v3168
        %v3265 = vmul.f32 %v2833, %v3169
        %v3314 = vrot.slane %v3222, 7
        %vm3315 = vcmask 1041409
        %v3316 = vsel %vm3315, %v3314, %v3218
        %v3317 = vrot.slane %v3226, 6
        %vm3318 = vcmask 1042434
        %v3319 = vsel %vm3318, %v3317, %v3316
        %v3320 = vrot.slane %v3230, 5
        %vm3321 = vcmask 1043459
        %v3322 = vsel %vm3321, %v3320, %v3319
        %v3323 = vrot.slane %v3234, 4
        %vm3324 = vcmask 1044484
        %v3325 = vsel %vm3324, %v3323, %v3322
        %v3326 = vrot.slane %v3238, 3
        %vm3327 = vcmask 1045509
        %v3328 = vsel %vm3327, %v3326, %v3325
        %v3329 = vrot.slane %v3242, 2
        %vm3330 = vcmask 1046534
        %v3331 = vsel %vm3330, %v3329, %v3328
        %v3332 = vrot.slane %v3246, 1
        %vm3333 = vcmask 1047559
        %v3334 = vsel %vm3333, %v3332, %v3331
        %v3335 = vrot.slane %v3223, 7
        %v3336 = vsel %vm3315, %v3335, %v3219
        %v3337 = vrot.slane %v3227, 6
        %v3338 = vsel %vm3318, %v3337, %v3336
        %v3339 = vrot.slane %v3231, 5
        %v3340 = vsel %vm3321, %v3339, %v3338
        %v3341 = vrot.slane %v3235, 4
        %v3342 = vsel %vm3324, %v3341, %v3340
        %v3343 = vrot.slane %v3239, 3
        %v3344 = vsel %vm3327, %v3343, %v3342
        %v3345 = vrot.slane %v3243, 2
        %v3346 = vsel %vm3330, %v3345, %v3344
        %v3347 = vrot.slane %v3247, 1
        %v3348 = vsel %vm3333, %v3347, %v3346
        %v3349 = vrot.slane %v3224, 7
        %v3350 = vsel %vm3315, %v3349, %v3220
        %v3351 = vrot.slane %v3228, 6
        %v3352 = vsel %vm3318, %v3351, %v3350
        %v3353 = vrot.slane %v3232, 5
        %v3354 = vsel %vm3321, %v3353, %v3352
        %v3355 = vrot.slane %v3236, 4
        %v3356 = vsel %vm3324, %v3355, %v3354
        %v3357 = vrot.slane %v3240, 3
        %v3358 = vsel %vm3327, %v3357, %v3356
        %v3359 = vrot.slane %v3244, 2
        %v3360 = vsel %vm3330, %v3359, %v3358
        %v3361 = vrot.slane %v3248, 1
        %v3362 = vsel %vm3333, %v3361, %v3360
        %v3363 = vrot.slane %v3225, 7
        %v3364 = vsel %vm3315, %v3363, %v3221
        %v3365 = vrot.slane %v3229, 6
        %v3366 = vsel %vm3318, %v3365, %v3364
        %v3367 = vrot.slane %v3233, 5
        %v3368 = vsel %vm3321, %v3367, %v3366
        %v3369 = vrot.slane %v3237, 4
        %v3370 = vsel %vm3324, %v3369, %v3368
        %v3371 = vrot.slane %v3241, 3
        %v3372 = vsel %vm3327, %v3371, %v3370
        %v3373 = vrot.slane %v3245, 2
        %v3374 = vsel %vm3330, %v3373, %v3372
        %v3375 = vrot.slane %v3249, 1
        %v3376 = vsel %vm3333, %v3375, %v3374
        %v3377 = vrot.slane %v3254, 7
        %v3378 = vsel %vm3315, %v3377, %v3250
        %v3379 = vrot.slane %v3258, 6
        %v3380 = vsel %vm3318, %v3379, %v3378
        %v3381 = vrot.slane %v3262, 5
        %v3382 = vsel %vm3321, %v3381, %v3380
        %v3383 = vrot.slane %v3255, 7
        %v3384 = vsel %vm3315, %v3383, %v3251
        %v3385 = vrot.slane %v3259, 6
        %v3386 = vsel %vm3318, %v3385, %v3384
        %v3387 = vrot.slane %v3263, 5
        %v3388 = vsel %vm3321, %v3387, %v3386
        %v3389 = vrot.slane %v3256, 7
        %v3390 = vsel %vm3315, %v3389, %v3252
        %v3391 = vrot.slane %v3260, 6
        %v3392 = vsel %vm3318, %v3391, %v3390
        %v3393 = vrot.slane %v3264, 5
        %v3394 = vsel %vm3321, %v3393, %v3392
        %v3395 = vrot.slane %v3257, 7
        %v3396 = vsel %vm3315, %v3395, %v3253
        %v3397 = vrot.slane %v3261, 6
        %v3398 = vsel %vm3318, %v3397, %v3396
        %v3399 = vrot.slane %v3265, 5
        %v3400 = vsel %vm3321, %v3399, %v3398
        %v3409 = vadd.f32 %v3334, %v3348
        %v3410 = vadd.f32 %v3409, %v3362
        %v3411 = vadd.f32 %v3410, %v3376
        %vm3412 = vcmask 1043456
        %v3413 = vsel %vm3412, %v3382, 0.0
        %v3414 = vadd.f32 %v3411, %v3413
        %v3415 = vsel %vm3412, %v3388, 0.0
        %v3416 = vadd.f32 %v3414, %v3415
        %v3417 = vsel %vm3412, %v3394, 0.0
        %v3418 = vadd.f32 %v3416, %v3417
        %v3419 = vsel %vm3412, %v3400, 0.0
        %v3420 = vadd.f32 %v3418, %v3419
        %3421 = vadd.xlane.f32.xlu0 %v3420
        %v3422 = vpop.xlane.xlu0 %3421
        %v3423 = vrot.slane %v3422, 4
        %v3424 = vadd.f32 %v3422, %v3423
        %v3425 = vrot.slane %v3424, 2
        %v3426 = vadd.f32 %v3424, %v3425
        %v3427 = vrot.slane %v3426, 1
        %v3428 = vadd.f32 %v3426, %v3427
        %s3429 = vtos %v3428
        %s3430 = sadd.f32 %s3429, %s295
        %s3431 = sxor.u32 %s3430, 2147483648
        %v3432 = vstv %s3431
        %v3433 = vmul.f32 %v3432, 1.442695
        %v3434 = vpow.pop %v3433
        %s3435 = vtos %v3434
        %s3436 = sadd.f32 %s3435, 1.0
        %v3437 = vstv %s3436
        %v3438 = vrcp.pop %v3437
        %s3439 = vtos %v3438
        %v3440 = vstv %s3439
        %3441 = vst [vmem:[%s284] sm:$0xff] %v3440
        %s3442 = scalar_lea.vmem %s238, 1536 [#allocation2]
        %v3443 = vld [vmem:[%s3442] sm:$0xff]
        %v3444 = vld [vmem:[%s3442 + $0x8] sm:$0xff]
        %v3445 = vld [vmem:[%s3442 + $0x10] sm:$0xff]
        %v3446 = vld [vmem:[%s3442 + $0x18] sm:$0xff]
        %v3447 = vld [vmem:[%s3442 + $0x20] sm:$0xff]
        %v3448 = vld [vmem:[%s3442 + $0x28] sm:$0xff]
        %v3449 = vld [vmem:[%s3442 + $0x30] sm:$0xff]
        %v3450 = vld [vmem:[%s3442 + $0x38] sm:$0xff]
        %v3451 = vld [vmem:[%s3442 + $0x40] sm:$0xff]
        %v3452 = vld [vmem:[%s3442 + $0x48] sm:$0xff]
        %v3453 = vld [vmem:[%s3442 + $0x50] sm:$0xff]
        %v3454 = vld [vmem:[%s3442 + $0x58] sm:$0xff]
        %v3455 = vld [vmem:[%s3442 + $0x60] sm:$0xff]
        %v3456 = vld [vmem:[%s3442 + $0x68] sm:$0xff]
        %v3457 = vld [vmem:[%s3442 + $0x70] sm:$0xff]
        %v3458 = vld [vmem:[%s3442 + $0x78] sm:$0xff]
        %v3459 = vld [vmem:[%s3442 + $0x80] sm:$0xff]
        %v3460 = vld [vmem:[%s3442 + $0x88] sm:$0xff]
        %v3461 = vld [vmem:[%s3442 + $0x90] sm:$0xff]
        %v3462 = vld [vmem:[%s3442 + $0x98] sm:$0xff]
        %v3463 = vld [vmem:[%s3442 + $0xa0] sm:$0xff]
        %v3464 = vld [vmem:[%s3442 + $0xa8] sm:$0xff]
        %v3465 = vld [vmem:[%s3442 + $0xb0] sm:$0xff]
        %v3466 = vld [vmem:[%s3442 + $0xb8] sm:$0xff]
        %v3467 = vld [vmem:[%s3442 + $0xc0] sm:$0xff]
        %v3468 = vld [vmem:[%s3442 + $0xc8] sm:$0xff]
        %v3469 = vld [vmem:[%s3442 + $0xd0] sm:$0xff]
        %v3470 = vld [vmem:[%s3442 + $0xd8] sm:$0xff]
        %v3471 = vld [vmem:[%s3442 + $0xe0] sm:$0xff]
        %v3472 = vld [vmem:[%s3442 + $0xe8] sm:$0xff]
        %v3473 = vld [vmem:[%s3442 + $0xf0] sm:$0xff]
        %v3474 = vld [vmem:[%s3442 + $0xf8] sm:$0xff]
        %v3475 = vld [vmem:[%s3442 + $0x100] sm:$0xff]
        %v3476 = vld [vmem:[%s3442 + $0x108] sm:$0xff]
        %v3477 = vld [vmem:[%s3442 + $0x110] sm:$0xff]
        %v3478 = vld [vmem:[%s3442 + $0x118] sm:$0xff]
        %v3479 = vld [vmem:[%s3442 + $0x120] sm:$0xff]
        %v3480 = vld [vmem:[%s3442 + $0x128] sm:$0xff]
        %v3481 = vld [vmem:[%s3442 + $0x130] sm:$0xff]
        %v3482 = vld [vmem:[%s3442 + $0x138] sm:$0xff]
        %v3483 = vld [vmem:[%s3442 + $0x140] sm:$0xff]
        %v3484 = vld [vmem:[%s3442 + $0x148] sm:$0xff]
        %v3485 = vld [vmem:[%s3442 + $0x150] sm:$0xff]
        %v3486 = vld [vmem:[%s3442 + $0x158] sm:$0xff]
        %v3487 = vld [vmem:[%s3442 + $0x160] sm:$0xff]
        %v3488 = vld [vmem:[%s3442 + $0x168] sm:$0xff]
        %v3489 = vld [vmem:[%s3442 + $0x170] sm:$0xff]
        %v3490 = vld [vmem:[%s3442 + $0x178] sm:$0xff]
        %v3491 = vld [vmem:[%s3442 + $0x180] sm:$0xff]
        %v3492 = vld [vmem:[%s3442 + $0x188] sm:$0xff]
        %v3493 = vld [vmem:[%s3442 + $0x190] sm:$0xff]
        %v3494 = vld [vmem:[%s3442 + $0x198] sm:$0xff]
        %v3495 = vld [vmem:[%s3442 + $0x1a0] sm:$0xff]
        %v3496 = vld [vmem:[%s3442 + $0x1a8] sm:$0xff]
        %v3497 = vld [vmem:[%s3442 + $0x1b0] sm:$0xff]
        %v3498 = vld [vmem:[%s3442 + $0x1b8] sm:$0xff]
        %v3499 = vld [vmem:[%s3442 + $0x1c0] sm:$0xff]
        %v3500 = vld [vmem:[%s3442 + $0x1c8] sm:$0xff]
        %v3501 = vld [vmem:[%s3442 + $0x1d0] sm:$0xff]
        %v3502 = vld [vmem:[%s3442 + $0x1d8] sm:$0xff]
        %v3503 = vld [vmem:[%s3442 + $0x1e0] sm:$0xff]
        %v3504 = vld [vmem:[%s3442 + $0x1e8] sm:$0xff]
        %v3505 = vld [vmem:[%s3442 + $0x1f0] sm:$0xff]
        %v3506 = vld [vmem:[%s3442 + $0x1f8] sm:$0xff]
        %v3507 = vld [vmem:[%s3442 + $0x200] sm:$0xff]
        %v3508 = vld [vmem:[%s3442 + $0x208] sm:$0xff]
        %v3509 = vld [vmem:[%s3442 + $0x210] sm:$0xff]
        %v3510 = vld [vmem:[%s3442 + $0x218] sm:$0xff]
        %v3511 = vld [vmem:[%s3442 + $0x220] sm:$0xff]
        %v3512 = vld [vmem:[%s3442 + $0x228] sm:$0xff]
        %v3513 = vld [vmem:[%s3442 + $0x230] sm:$0xff]
        %v3514 = vld [vmem:[%s3442 + $0x238] sm:$0xff]
        %v3515 = vld [vmem:[%s3442 + $0x240] sm:$0xff]
        %v3516 = vld [vmem:[%s3442 + $0x248] sm:$0xff]
        %v3517 = vld [vmem:[%s3442 + $0x250] sm:$0xff]
        %v3518 = vld [vmem:[%s3442 + $0x258] sm:$0xff]
        %v3519 = vld [vmem:[%s3442 + $0x260] sm:$0xff]
        %v3520 = vld [vmem:[%s3442 + $0x268] sm:$0xff]
        %v3521 = vld [vmem:[%s3442 + $0x270] sm:$0xff]
        %v3522 = vld [vmem:[%s3442 + $0x278] sm:$0xff]
        %v3523 = vld [vmem:[%s3442 + $0x280] sm:$0xff]
        %v3524 = vld [vmem:[%s3442 + $0x288] sm:$0xff]
        %v3525 = vld [vmem:[%s3442 + $0x290] sm:$0xff]
        %v3526 = vld [vmem:[%s3442 + $0x298] sm:$0xff]
        %v3527 = vld [vmem:[%s3442 + $0x2a0] sm:$0xff]
        %v3528 = vld [vmem:[%s3442 + $0x2a8] sm:$0xff]
        %v3529 = vld [vmem:[%s3442 + $0x2b0] sm:$0xff]
        %v3530 = vld [vmem:[%s3442 + $0x2b8] sm:$0xff]
        %v3531 = vld [vmem:[%s3442 + $0x2c0] sm:$0xff]
        %v3532 = vld [vmem:[%s3442 + $0x2c8] sm:$0xff]
        %v3533 = vld [vmem:[%s3442 + $0x2d0] sm:$0xff]
        %v3534 = vld [vmem:[%s3442 + $0x2d8] sm:$0xff]
        %v3535 = vld [vmem:[%s3442 + $0x2e0] sm:$0xff]
        %v3536 = vld [vmem:[%s3442 + $0x2e8] sm:$0xff]
        %v3537 = vld [vmem:[%s3442 + $0x2f0] sm:$0xff]
        %v3538 = vld [vmem:[%s3442 + $0x2f8] sm:$0xff]
        %v3539 = vld [vmem:[%s3442 + $0x300] sm:$0xff]
        %v3540 = vld [vmem:[%s3442 + $0x308] sm:$0xff]
        %v3541 = vld [vmem:[%s3442 + $0x310] sm:$0xff]
        %v3542 = vld [vmem:[%s3442 + $0x318] sm:$0xff]
        %v3543 = vld [vmem:[%s3442 + $0x320] sm:$0xff]
        %v3544 = vld [vmem:[%s3442 + $0x328] sm:$0xff]
        %v3545 = vld [vmem:[%s3442 + $0x330] sm:$0xff]
        %v3546 = vld [vmem:[%s3442 + $0x338] sm:$0xff]
        %v3547 = vld [vmem:[%s3442 + $0x340] sm:$0xff]
        %v3548 = vld [vmem:[%s3442 + $0x348] sm:$0xff]
        %v3549 = vld [vmem:[%s3442 + $0x350] sm:$0xff]
        %v3550 = vld [vmem:[%s3442 + $0x358] sm:$0xff]
        %v3551 = vld [vmem:[%s3442 + $0x360] sm:$0xff]
        %v3552 = vld [vmem:[%s3442 + $0x368] sm:$0xff]
        %v3553 = vld [vmem:[%s3442 + $0x370] sm:$0xff]
        %v3554 = vld [vmem:[%s3442 + $0x378] sm:$0xff]
        %v3555 = vld [vmem:[%s3442 + $0x380] sm:$0xff]
        %v3556 = vld [vmem:[%s3442 + $0x388] sm:$0xff]
        %v3557 = vld [vmem:[%s3442 + $0x390] sm:$0xff]
        %v3558 = vld [vmem:[%s3442 + $0x398] sm:$0xff]
        %v3559 = vld [vmem:[%s3442 + $0x3a0] sm:$0xff]
        %v3560 = vld [vmem:[%s3442 + $0x3a8] sm:$0xff]
        %v3561 = vld [vmem:[%s3442 + $0x3b0] sm:$0xff]
        %v3562 = vld [vmem:[%s3442 + $0x3b8] sm:$0xff]
        %v3563 = vld [vmem:[%s3442 + $0x3c0] sm:$0xff]
        %v3564 = vld [vmem:[%s3442 + $0x3c8] sm:$0xff]
        %v3565 = vld [vmem:[%s3442 + $0x3d0] sm:$0xff]
        %v3566 = vld [vmem:[%s3442 + $0x3d8] sm:$0xff]
        %v3567 = vld [vmem:[%s3442 + $0x3e0] sm:$0xff]
        %v3568 = vld [vmem:[%s3442 + $0x3e8] sm:$0xff]
        %v3569 = vld [vmem:[%s3442 + $0x3f0] sm:$0xff]
        %v3570 = vld [vmem:[%s3442 + $0x3f8] sm:$0xff]
        %v3571 = vld [vmem:[%s3442 + $0x400] sm:$0xff]
        %v3572 = vld [vmem:[%s3442 + $0x408] sm:$0xff]
        %v3573 = vld [vmem:[%s3442 + $0x410] sm:$0xff]
        %v3574 = vld [vmem:[%s3442 + $0x418] sm:$0xff]
        %v3575 = vld [vmem:[%s3442 + $0x420] sm:$0xff]
        %v3576 = vld [vmem:[%s3442 + $0x428] sm:$0xff]
        %v3577 = vld [vmem:[%s3442 + $0x430] sm:$0xff]
        %v3578 = vld [vmem:[%s3442 + $0x438] sm:$0xff]
        %v3579 = vld [vmem:[%s3442 + $0x440] sm:$0xff]
        %v3580 = vld [vmem:[%s3442 + $0x448] sm:$0xff]
        %v3581 = vld [vmem:[%s3442 + $0x450] sm:$0xff]
        %v3582 = vld [vmem:[%s3442 + $0x458] sm:$0xff]
        %v3583 = vld [vmem:[%s3442 + $0x460] sm:$0xff]
        %v3584 = vld [vmem:[%s3442 + $0x468] sm:$0xff]
        %v3585 = vld [vmem:[%s3442 + $0x470] sm:$0xff]
        %v3586 = vld [vmem:[%s3442 + $0x478] sm:$0xff]
        %v3587 = vld [vmem:[%s3442 + $0x480] sm:$0xff]
        %v3588 = vld [vmem:[%s3442 + $0x488] sm:$0xff]
        %v3589 = vld [vmem:[%s3442 + $0x490] sm:$0xff]
        %v3590 = vld [vmem:[%s3442 + $0x498] sm:$0xff]
        %v3591 = vld [vmem:[%s3442 + $0x4a0] sm:$0xff]
        %v3592 = vld [vmem:[%s3442 + $0x4a8] sm:$0xff]
        %v3593 = vld [vmem:[%s3442 + $0x4b0] sm:$0xff]
        %v3594 = vld [vmem:[%s3442 + $0x4b8] sm:$0xff]
        %v3595 = vld [vmem:[%s3442 + $0x4c0] sm:$0xff]
        %v3596 = vld [vmem:[%s3442 + $0x4c8] sm:$0xff]
        %v3597 = vld [vmem:[%s3442 + $0x4d0] sm:$0xff]
        %v3598 = vld [vmem:[%s3442 + $0x4d8] sm:$0xff]
        %v3599 = vld [vmem:[%s3442 + $0x4e0] sm:$0xff]
        %v3600 = vld [vmem:[%s3442 + $0x4e8] sm:$0xff]
        %v3601 = vld [vmem:[%s3442 + $0x4f0] sm:$0xff]
        %v3602 = vld [vmem:[%s3442 + $0x4f8] sm:$0xff]
        %v3603 = vld [vmem:[%s3442 + $0x500] sm:$0xff]
        %v3604 = vld [vmem:[%s3442 + $0x508] sm:$0xff]
        %v3605 = vld [vmem:[%s3442 + $0x510] sm:$0xff]
        %v3606 = vld [vmem:[%s3442 + $0x518] sm:$0xff]
        %v3607 = vld [vmem:[%s3442 + $0x520] sm:$0xff]
        %v3608 = vld [vmem:[%s3442 + $0x528] sm:$0xff]
        %v3609 = vld [vmem:[%s3442 + $0x530] sm:$0xff]
        %v3610 = vld [vmem:[%s3442 + $0x538] sm:$0xff]
        %v3611 = vld [vmem:[%s3442 + $0x540] sm:$0xff]
        %v3612 = vld [vmem:[%s3442 + $0x548] sm:$0xff]
        %v3613 = vld [vmem:[%s3442 + $0x550] sm:$0xff]
        %v3614 = vld [vmem:[%s3442 + $0x558] sm:$0xff]
        %v3615 = vld [vmem:[%s3442 + $0x560] sm:$0xff]
        %v3616 = vld [vmem:[%s3442 + $0x568] sm:$0xff]
        %v3617 = vld [vmem:[%s3442 + $0x570] sm:$0xff]
        %v3618 = vld [vmem:[%s3442 + $0x578] sm:$0xff]
        %v3619 = vld [vmem:[%s3442 + $0x580] sm:$0xff]
        %v3620 = vld [vmem:[%s3442 + $0x588] sm:$0xff]
        %v3621 = vld [vmem:[%s3442 + $0x590] sm:$0xff]
        %v3622 = vld [vmem:[%s3442 + $0x598] sm:$0xff]
        %v3623 = vld [vmem:[%s3442 + $0x5a0] sm:$0xff]
        %v3624 = vld [vmem:[%s3442 + $0x5a8] sm:$0xff]
        %v3625 = vld [vmem:[%s3442 + $0x5b0] sm:$0xff]
        %v3626 = vld [vmem:[%s3442 + $0x5b8] sm:$0xff]
        %v3627 = vld [vmem:[%s3442 + $0x5c0] sm:$0xff]
        %v3628 = vld [vmem:[%s3442 + $0x5c8] sm:$0xff]
        %v3629 = vld [vmem:[%s3442 + $0x5d0] sm:$0xff]
        %v3630 = vld [vmem:[%s3442 + $0x5d8] sm:$0xff]
        %v3631 = vld [vmem:[%s3442 + $0x5e0] sm:$0xff]
        %v3632 = vld [vmem:[%s3442 + $0x5e8] sm:$0xff]
        %v3633 = vld [vmem:[%s3442 + $0x5f0] sm:$0xff]
        %v3634 = vld [vmem:[%s3442 + $0x5f8] sm:$0xff]
        %s3635 = scalar_lea.vmem %s247, 288 [#allocation5]
        %v3636 = vld [vmem:[%s3635] sm:$0xff]
        %v3637 = vld [vmem:[%s3635 + $0x8] sm:$0xff]
        %v3638 = vld [vmem:[%s3635 + $0x10] sm:$0xff]
        %v3639 = vld [vmem:[%s3635 + $0x18] sm:$0xff]
        %v3640 = vld [vmem:[%s3635 + $0x20] sm:$0xff]
        %v3641 = vld [vmem:[%s3635 + $0x28] sm:$0xff]
        %v3642 = vld [vmem:[%s3635 + $0x30] sm:$0xff]
        %v3643 = vld [vmem:[%s3635 + $0x38] sm:$0xff]
        %v3644 = vld [vmem:[%s3635 + $0x40] sm:$0xff]
        %v3645 = vld [vmem:[%s3635 + $0x48] sm:$0xff]
        %v3646 = vld [vmem:[%s3635 + $0x50] sm:$0xff]
        %v3647 = vld [vmem:[%s3635 + $0x58] sm:$0xff]
        %v3648 = vld [vmem:[%s3635 + $0x60] sm:$0xff]
        %v3649 = vld [vmem:[%s3635 + $0x68] sm:$0xff]
        %v3650 = vld [vmem:[%s3635 + $0x70] sm:$0xff]
        %v3651 = vld [vmem:[%s3635 + $0x78] sm:$0xff]
        %v3652 = vld [vmem:[%s3635 + $0x80] sm:$0xff]
        %v3653 = vld [vmem:[%s3635 + $0x88] sm:$0xff]
        %v3654 = vld [vmem:[%s3635 + $0x90] sm:$0xff]
        %v3655 = vld [vmem:[%s3635 + $0x98] sm:$0xff]
        %v3656 = vld [vmem:[%s3635 + $0xa0] sm:$0xff]
        %v3657 = vld [vmem:[%s3635 + $0xa8] sm:$0xff]
        %v3658 = vld [vmem:[%s3635 + $0xb0] sm:$0xff]
        %v3659 = vld [vmem:[%s3635 + $0xb8] sm:$0xff]
        %v3660 = vld [vmem:[%s3635 + $0xc0] sm:$0xff]
        %v3661 = vld [vmem:[%s3635 + $0xc8] sm:$0xff]
        %v3662 = vld [vmem:[%s3635 + $0xd0] sm:$0xff]
        %v3663 = vld [vmem:[%s3635 + $0xd8] sm:$0xff]
        %v3664 = vld [vmem:[%s3635 + $0xe0] sm:$0xff]
        %v3665 = vld [vmem:[%s3635 + $0xe8] sm:$0xff]
        %v3666 = vld [vmem:[%s3635 + $0xf0] sm:$0xff]
        %v3667 = vld [vmem:[%s3635 + $0xf8] sm:$0xff]
        %v3668 = vld [vmem:[%s3635 + $0x100] sm:$0xff]
        %v3669 = vld [vmem:[%s3635 + $0x108] sm:$0xff]
        %v3670 = vld [vmem:[%s3635 + $0x110] sm:$0xff]
        %v3671 = vld [vmem:[%s3635 + $0x118] sm:$0xff]
        %v3708 = vunpack.c.l.b16 %v3636
        %v3709 = vunpack.c.h.b16 %v3636
        %v3710 = vunpack.c.l.b16 %v3637
        %v3711 = vunpack.c.h.b16 %v3637
        %v3712 = vunpack.c.l.b16 %v3638
        %v3713 = vunpack.c.h.b16 %v3638
        %v3714 = vunpack.c.l.b16 %v3639
        %v3715 = vunpack.c.h.b16 %v3639
        %v3716 = vunpack.c.l.b16 %v3640
        %v3717 = vunpack.c.h.b16 %v3640
        %v3718 = vunpack.c.l.b16 %v3641
        %v3719 = vunpack.c.h.b16 %v3641
        %v3720 = vunpack.c.l.b16 %v3642
        %v3721 = vunpack.c.h.b16 %v3642
        %v3722 = vunpack.c.l.b16 %v3643
        %v3723 = vunpack.c.h.b16 %v3643
        %v3724 = vunpack.c.l.b16 %v3644
        %v3725 = vunpack.c.h.b16 %v3644
        %v3726 = vunpack.c.l.b16 %v3645
        %v3727 = vunpack.c.h.b16 %v3645
        %v3728 = vunpack.c.l.b16 %v3646
        %v3729 = vunpack.c.h.b16 %v3646
        %v3730 = vunpack.c.l.b16 %v3647
        %v3731 = vunpack.c.h.b16 %v3647
        %v3732 = vunpack.c.l.b16 %v3648
        %v3733 = vunpack.c.h.b16 %v3648
        %v3734 = vunpack.c.l.b16 %v3649
        %v3735 = vunpack.c.h.b16 %v3649
        %v3736 = vunpack.c.l.b16 %v3650
        %v3737 = vunpack.c.h.b16 %v3650
        %v3738 = vunpack.c.l.b16 %v3651
        %v3739 = vunpack.c.h.b16 %v3651
        %v3740 = vunpack.c.l.b16 %v3652
        %v3741 = vunpack.c.h.b16 %v3652
        %v3742 = vunpack.c.l.b16 %v3653
        %v3743 = vunpack.c.h.b16 %v3653
        %v3744 = vunpack.c.l.b16 %v3654
        %v3745 = vunpack.c.h.b16 %v3654
        %v3746 = vunpack.c.l.b16 %v3655
        %v3747 = vunpack.c.h.b16 %v3655
        %v3748 = vunpack.c.l.b16 %v3656
        %v3749 = vunpack.c.h.b16 %v3656
        %v3750 = vunpack.c.l.b16 %v3657
        %v3751 = vunpack.c.h.b16 %v3657
        %v3752 = vunpack.c.l.b16 %v3658
        %v3753 = vunpack.c.h.b16 %v3658
        %v3754 = vunpack.c.l.b16 %v3659
        %v3755 = vunpack.c.h.b16 %v3659
        %v3756 = vunpack.c.l.b16 %v3660
        %v3757 = vunpack.c.h.b16 %v3660
        %v3758 = vunpack.c.l.b16 %v3661
        %v3759 = vunpack.c.h.b16 %v3661
        %v3760 = vunpack.c.l.b16 %v3662
        %v3761 = vunpack.c.h.b16 %v3662
        %v3762 = vunpack.c.l.b16 %v3663
        %v3763 = vunpack.c.h.b16 %v3663
        %v3764 = vunpack.c.l.b16 %v3664
        %v3765 = vunpack.c.h.b16 %v3664
        %v3766 = vunpack.c.l.b16 %v3665
        %v3767 = vunpack.c.h.b16 %v3665
        %v3768 = vunpack.c.l.b16 %v3666
        %v3769 = vunpack.c.h.b16 %v3666
        %v3770 = vunpack.c.l.b16 %v3667
        %v3771 = vunpack.c.h.b16 %v3667
        %v3772 = vunpack.c.l.b16 %v3668
        %v3773 = vunpack.c.h.b16 %v3668
        %v3774 = vunpack.c.l.b16 %v3669
        %v3775 = vunpack.c.h.b16 %v3669
        %v3776 = vunpack.c.l.b16 %v3670
        %v3777 = vunpack.c.h.b16 %v3670
        %v3778 = vunpack.c.l.b16 %v3671
        %v3779 = vunpack.c.h.b16 %v3671
        %v3780 = vpack.c.b16 %v3714, %v3708
        %v3781 = vpack.c.b16 %v3715, %v3709
        %v3782 = vpack.c.b16 %v3716, %v3710
        %v3783 = vpack.c.b16 %v3717, %v3711
        %v3784 = vpack.c.b16 %v3718, %v3712
        %v3785 = vpack.c.b16 %v3719, %v3713
        %v3786 = vpack.c.b16 %v3726, %v3720
        %v3787 = vpack.c.b16 %v3727, %v3721
        %v3788 = vpack.c.b16 %v3728, %v3722
        %v3789 = vpack.c.b16 %v3729, %v3723
        %v3790 = vpack.c.b16 %v3730, %v3724
        %v3791 = vpack.c.b16 %v3731, %v3725
        %v3792 = vpack.c.b16 %v3738, %v3732
        %v3793 = vpack.c.b16 %v3739, %v3733
        %v3794 = vpack.c.b16 %v3740, %v3734
        %v3795 = vpack.c.b16 %v3741, %v3735
        %v3796 = vpack.c.b16 %v3742, %v3736
        %v3797 = vpack.c.b16 %v3743, %v3737
        %v3798 = vpack.c.b16 %v3750, %v3744
        %v3799 = vpack.c.b16 %v3751, %v3745
        %v3800 = vpack.c.b16 %v3752, %v3746
        %v3801 = vpack.c.b16 %v3753, %v3747
        %v3802 = vpack.c.b16 %v3754, %v3748
        %v3803 = vpack.c.b16 %v3755, %v3749
        %v3804 = vpack.c.b16 %v3762, %v3756
        %v3805 = vpack.c.b16 %v3763, %v3757
        %v3806 = vpack.c.b16 %v3764, %v3758
        %v3807 = vpack.c.b16 %v3765, %v3759
        %v3808 = vpack.c.b16 %v3766, %v3760
        %v3809 = vpack.c.b16 %v3767, %v3761
        %v3810 = vpack.c.b16 %v3774, %v3768
        %v3811 = vpack.c.b16 %v3775, %v3769
        %v3812 = vpack.c.b16 %v3776, %v3770
        %v3813 = vpack.c.b16 %v3777, %v3771
        %v3814 = vpack.c.b16 %v3778, %v3772
        %v3815 = vpack.c.b16 %v3779, %v3773
        %v4044 = vunpack.c.l.b16 %v3443
        %v4045 = vunpack.c.h.b16 %v3443
        %v4046 = vunpack.c.l.b16 %v3444
        %v4047 = vunpack.c.h.b16 %v3444
        %v4048 = vunpack.c.l.b16 %v3445
        %v4049 = vunpack.c.h.b16 %v3445
        %v4050 = vunpack.c.l.b16 %v3446
        %v4051 = vunpack.c.h.b16 %v3446
        %v4052 = vunpack.c.l.b16 %v3447
        %v4053 = vunpack.c.h.b16 %v3447
        %v4054 = vunpack.c.l.b16 %v3448
        %v4055 = vunpack.c.h.b16 %v3448
        %v4056 = vunpack.c.l.b16 %v3449
        %v4057 = vunpack.c.h.b16 %v3449
        %v4058 = vunpack.c.l.b16 %v3450
        %v4059 = vunpack.c.h.b16 %v3450
        %v4060 = vunpack.c.l.b16 %v3451
        %v4061 = vunpack.c.h.b16 %v3451
        %v4062 = vunpack.c.l.b16 %v3452
        %v4063 = vunpack.c.h.b16 %v3452
        %v4064 = vunpack.c.l.b16 %v3453
        %v4065 = vunpack.c.h.b16 %v3453
        %v4066 = vunpack.c.l.b16 %v3454
        %v4067 = vunpack.c.h.b16 %v3454
        %v4068 = vunpack.c.l.b16 %v3455
        %v4069 = vunpack.c.h.b16 %v3455
        %v4070 = vunpack.c.l.b16 %v3456
        %v4071 = vunpack.c.h.b16 %v3456
        %v4072 = vunpack.c.l.b16 %v3457
        %v4073 = vunpack.c.h.b16 %v3457
        %v4074 = vunpack.c.l.b16 %v3458
        %v4075 = vunpack.c.h.b16 %v3458
        %v4076 = vunpack.c.l.b16 %v3459
        %v4077 = vunpack.c.h.b16 %v3459
        %v4078 = vunpack.c.l.b16 %v3460
        %v4079 = vunpack.c.h.b16 %v3460
        %v4080 = vunpack.c.l.b16 %v3461
        %v4081 = vunpack.c.h.b16 %v3461
        %v4082 = vunpack.c.l.b16 %v3462
        %v4083 = vunpack.c.h.b16 %v3462
        %v4084 = vunpack.c.l.b16 %v3463
        %v4085 = vunpack.c.h.b16 %v3463
        %v4086 = vunpack.c.l.b16 %v3464
        %v4087 = vunpack.c.h.b16 %v3464
        %v4088 = vunpack.c.l.b16 %v3465
        %v4089 = vunpack.c.h.b16 %v3465
        %v4090 = vunpack.c.l.b16 %v3466
        %v4091 = vunpack.c.h.b16 %v3466
        %v4092 = vunpack.c.l.b16 %v3467
        %v4093 = vunpack.c.h.b16 %v3467
        %v4094 = vunpack.c.l.b16 %v3468
        %v4095 = vunpack.c.h.b16 %v3468
        %v4096 = vunpack.c.l.b16 %v3469
        %v4097 = vunpack.c.h.b16 %v3469
        %v4098 = vunpack.c.l.b16 %v3470
        %v4099 = vunpack.c.h.b16 %v3470
        %v4100 = vunpack.c.l.b16 %v3471
        %v4101 = vunpack.c.h.b16 %v3471
        %v4102 = vunpack.c.l.b16 %v3472
        %v4103 = vunpack.c.h.b16 %v3472
        %v4104 = vunpack.c.l.b16 %v3473
        %v4105 = vunpack.c.h.b16 %v3473
        %v4106 = vunpack.c.l.b16 %v3474
        %v4107 = vunpack.c.h.b16 %v3474
        %v4108 = vunpack.c.l.b16 %v3475
        %v4109 = vunpack.c.h.b16 %v3475
        %v4110 = vunpack.c.l.b16 %v3476
        %v4111 = vunpack.c.h.b16 %v3476
        %v4112 = vunpack.c.l.b16 %v3477
        %v4113 = vunpack.c.h.b16 %v3477
        %v4114 = vunpack.c.l.b16 %v3478
        %v4115 = vunpack.c.h.b16 %v3478
        %v4116 = vunpack.c.l.b16 %v3479
        %v4117 = vunpack.c.h.b16 %v3479
        %v4118 = vunpack.c.l.b16 %v3480
        %v4119 = vunpack.c.h.b16 %v3480
        %v4120 = vunpack.c.l.b16 %v3481
        %v4121 = vunpack.c.h.b16 %v3481
        %v4122 = vunpack.c.l.b16 %v3482
        %v4123 = vunpack.c.h.b16 %v3482
        %v4124 = vunpack.c.l.b16 %v3483
        %v4125 = vunpack.c.h.b16 %v3483
        %v4126 = vunpack.c.l.b16 %v3484
        %v4127 = vunpack.c.h.b16 %v3484
        %v4128 = vunpack.c.l.b16 %v3485
        %v4129 = vunpack.c.h.b16 %v3485
        %v4130 = vunpack.c.l.b16 %v3486
        %v4131 = vunpack.c.h.b16 %v3486
        %v4132 = vunpack.c.l.b16 %v3487
        %v4133 = vunpack.c.h.b16 %v3487
        %v4134 = vunpack.c.l.b16 %v3488
        %v4135 = vunpack.c.h.b16 %v3488
        %v4136 = vunpack.c.l.b16 %v3489
        %v4137 = vunpack.c.h.b16 %v3489
        %v4138 = vunpack.c.l.b16 %v3490
        %v4139 = vunpack.c.h.b16 %v3490
        %v4140 = vunpack.c.l.b16 %v3491
        %v4141 = vunpack.c.h.b16 %v3491
        %v4142 = vunpack.c.l.b16 %v3492
        %v4143 = vunpack.c.h.b16 %v3492
        %v4144 = vunpack.c.l.b16 %v3493
        %v4145 = vunpack.c.h.b16 %v3493
        %v4146 = vunpack.c.l.b16 %v3494
        %v4147 = vunpack.c.h.b16 %v3494
        %v4148 = vunpack.c.l.b16 %v3495
        %v4149 = vunpack.c.h.b16 %v3495
        %v4150 = vunpack.c.l.b16 %v3496
        %v4151 = vunpack.c.h.b16 %v3496
        %v4152 = vunpack.c.l.b16 %v3497
        %v4153 = vunpack.c.h.b16 %v3497
        %v4154 = vunpack.c.l.b16 %v3498
        %v4155 = vunpack.c.h.b16 %v3498
        %v4156 = vunpack.c.l.b16 %v3499
        %v4157 = vunpack.c.h.b16 %v3499
        %v4158 = vunpack.c.l.b16 %v3500
        %v4159 = vunpack.c.h.b16 %v3500
        %v4160 = vunpack.c.l.b16 %v3501
        %v4161 = vunpack.c.h.b16 %v3501
        %v4162 = vunpack.c.l.b16 %v3502
        %v4163 = vunpack.c.h.b16 %v3502
        %v4164 = vunpack.c.l.b16 %v3503
        %v4165 = vunpack.c.h.b16 %v3503
        %v4166 = vunpack.c.l.b16 %v3504
        %v4167 = vunpack.c.h.b16 %v3504
        %v4168 = vunpack.c.l.b16 %v3505
        %v4169 = vunpack.c.h.b16 %v3505
        %v4170 = vunpack.c.l.b16 %v3506
        %v4171 = vunpack.c.h.b16 %v3506
        %v4172 = vunpack.c.l.b16 %v3507
        %v4173 = vunpack.c.h.b16 %v3507
        %v4174 = vunpack.c.l.b16 %v3508
        %v4175 = vunpack.c.h.b16 %v3508
        %v4176 = vunpack.c.l.b16 %v3509
        %v4177 = vunpack.c.h.b16 %v3509
        %v4178 = vunpack.c.l.b16 %v3510
        %v4179 = vunpack.c.h.b16 %v3510
        %v4180 = vunpack.c.l.b16 %v3511
        %v4181 = vunpack.c.h.b16 %v3511
        %v4182 = vunpack.c.l.b16 %v3512
        %v4183 = vunpack.c.h.b16 %v3512
        %v4184 = vunpack.c.l.b16 %v3513
        %v4185 = vunpack.c.h.b16 %v3513
        %v4186 = vunpack.c.l.b16 %v3514
        %v4187 = vunpack.c.h.b16 %v3514
        %v4188 = vunpack.c.l.b16 %v3515
        %v4189 = vunpack.c.h.b16 %v3515
        %v4190 = vunpack.c.l.b16 %v3516
        %v4191 = vunpack.c.h.b16 %v3516
        %v4192 = vunpack.c.l.b16 %v3517
        %v4193 = vunpack.c.h.b16 %v3517
        %v4194 = vunpack.c.l.b16 %v3518
        %v4195 = vunpack.c.h.b16 %v3518
        %v4196 = vunpack.c.l.b16 %v3519
        %v4197 = vunpack.c.h.b16 %v3519
        %v4198 = vunpack.c.l.b16 %v3520
        %v4199 = vunpack.c.h.b16 %v3520
        %v4200 = vunpack.c.l.b16 %v3521
        %v4201 = vunpack.c.h.b16 %v3521
        %v4202 = vunpack.c.l.b16 %v3522
        %v4203 = vunpack.c.h.b16 %v3522
        %v4204 = vunpack.c.l.b16 %v3523
        %v4205 = vunpack.c.h.b16 %v3523
        %v4206 = vunpack.c.l.b16 %v3524
        %v4207 = vunpack.c.h.b16 %v3524
        %v4208 = vunpack.c.l.b16 %v3525
        %v4209 = vunpack.c.h.b16 %v3525
        %v4210 = vunpack.c.l.b16 %v3526
        %v4211 = vunpack.c.h.b16 %v3526
        %v4212 = vunpack.c.l.b16 %v3527
        %v4213 = vunpack.c.h.b16 %v3527
        %v4214 = vunpack.c.l.b16 %v3528
        %v4215 = vunpack.c.h.b16 %v3528
        %v4216 = vunpack.c.l.b16 %v3529
        %v4217 = vunpack.c.h.b16 %v3529
        %v4218 = vunpack.c.l.b16 %v3530
        %v4219 = vunpack.c.h.b16 %v3530
        %v4220 = vunpack.c.l.b16 %v3531
        %v4221 = vunpack.c.h.b16 %v3531
        %v4222 = vunpack.c.l.b16 %v3532
        %v4223 = vunpack.c.h.b16 %v3532
        %v4224 = vunpack.c.l.b16 %v3533
        %v4225 = vunpack.c.h.b16 %v3533
        %v4226 = vunpack.c.l.b16 %v3534
        %v4227 = vunpack.c.h.b16 %v3534
        %v4228 = vunpack.c.l.b16 %v3535
        %v4229 = vunpack.c.h.b16 %v3535
        %v4230 = vunpack.c.l.b16 %v3536
        %v4231 = vunpack.c.h.b16 %v3536
        %v4232 = vunpack.c.l.b16 %v3537
        %v4233 = vunpack.c.h.b16 %v3537
        %v4234 = vunpack.c.l.b16 %v3538
        %v4235 = vunpack.c.h.b16 %v3538
        %v4236 = vunpack.c.l.b16 %v3539
        %v4237 = vunpack.c.h.b16 %v3539
        %v4238 = vunpack.c.l.b16 %v3540
        %v4239 = vunpack.c.h.b16 %v3540
        %v4240 = vunpack.c.l.b16 %v3541
        %v4241 = vunpack.c.h.b16 %v3541
        %v4242 = vunpack.c.l.b16 %v3542
        %v4243 = vunpack.c.h.b16 %v3542
        %v4244 = vunpack.c.l.b16 %v3543
        %v4245 = vunpack.c.h.b16 %v3543
        %v4246 = vunpack.c.l.b16 %v3544
        %v4247 = vunpack.c.h.b16 %v3544
        %v4248 = vunpack.c.l.b16 %v3545
        %v4249 = vunpack.c.h.b16 %v3545
        %v4250 = vunpack.c.l.b16 %v3546
        %v4251 = vunpack.c.h.b16 %v3546
        %v4252 = vunpack.c.l.b16 %v3547
        %v4253 = vunpack.c.h.b16 %v3547
        %v4254 = vunpack.c.l.b16 %v3548
        %v4255 = vunpack.c.h.b16 %v3548
        %v4256 = vunpack.c.l.b16 %v3549
        %v4257 = vunpack.c.h.b16 %v3549
        %v4258 = vunpack.c.l.b16 %v3550
        %v4259 = vunpack.c.h.b16 %v3550
        %v4260 = vunpack.c.l.b16 %v3551
        %v4261 = vunpack.c.h.b16 %v3551
        %v4262 = vunpack.c.l.b16 %v3552
        %v4263 = vunpack.c.h.b16 %v3552
        %v4264 = vunpack.c.l.b16 %v3553
        %v4265 = vunpack.c.h.b16 %v3553
        %v4266 = vunpack.c.l.b16 %v3554
        %v4267 = vunpack.c.h.b16 %v3554
        %v4268 = vunpack.c.l.b16 %v3555
        %v4269 = vunpack.c.h.b16 %v3555
        %v4270 = vunpack.c.l.b16 %v3556
        %v4271 = vunpack.c.h.b16 %v3556
        %v4272 = vunpack.c.l.b16 %v3557
        %v4273 = vunpack.c.h.b16 %v3557
        %v4274 = vunpack.c.l.b16 %v3558
        %v4275 = vunpack.c.h.b16 %v3558
        %v4276 = vunpack.c.l.b16 %v3559
        %v4277 = vunpack.c.h.b16 %v3559
        %v4278 = vunpack.c.l.b16 %v3560
        %v4279 = vunpack.c.h.b16 %v3560
        %v4280 = vunpack.c.l.b16 %v3561
        %v4281 = vunpack.c.h.b16 %v3561
        %v4282 = vunpack.c.l.b16 %v3562
        %v4283 = vunpack.c.h.b16 %v3562
        %v4284 = vunpack.c.l.b16 %v3563
        %v4285 = vunpack.c.h.b16 %v3563
        %v4286 = vunpack.c.l.b16 %v3564
        %v4287 = vunpack.c.h.b16 %v3564
        %v4288 = vunpack.c.l.b16 %v3565
        %v4289 = vunpack.c.h.b16 %v3565
        %v4290 = vunpack.c.l.b16 %v3566
        %v4291 = vunpack.c.h.b16 %v3566
        %v4292 = vunpack.c.l.b16 %v3567
        %v4293 = vunpack.c.h.b16 %v3567
        %v4294 = vunpack.c.l.b16 %v3568
        %v4295 = vunpack.c.h.b16 %v3568
        %v4296 = vunpack.c.l.b16 %v3569
        %v4297 = vunpack.c.h.b16 %v3569
        %v4298 = vunpack.c.l.b16 %v3570
        %v4299 = vunpack.c.h.b16 %v3570
        %v4300 = vunpack.c.l.b16 %v3571
        %v4301 = vunpack.c.h.b16 %v3571
        %v4302 = vunpack.c.l.b16 %v3572
        %v4303 = vunpack.c.h.b16 %v3572
        %v4304 = vunpack.c.l.b16 %v3573
        %v4305 = vunpack.c.h.b16 %v3573
        %v4306 = vunpack.c.l.b16 %v3574
        %v4307 = vunpack.c.h.b16 %v3574
        %v4308 = vunpack.c.l.b16 %v3575
        %v4309 = vunpack.c.h.b16 %v3575
        %v4310 = vunpack.c.l.b16 %v3576
        %v4311 = vunpack.c.h.b16 %v3576
        %v4312 = vunpack.c.l.b16 %v3577
        %v4313 = vunpack.c.h.b16 %v3577
        %v4314 = vunpack.c.l.b16 %v3578
        %v4315 = vunpack.c.h.b16 %v3578
        %v4316 = vunpack.c.l.b16 %v3579
        %v4317 = vunpack.c.h.b16 %v3579
        %v4318 = vunpack.c.l.b16 %v3580
        %v4319 = vunpack.c.h.b16 %v3580
        %v4320 = vunpack.c.l.b16 %v3581
        %v4321 = vunpack.c.h.b16 %v3581
        %v4322 = vunpack.c.l.b16 %v3582
        %v4323 = vunpack.c.h.b16 %v3582
        %v4324 = vunpack.c.l.b16 %v3583
        %v4325 = vunpack.c.h.b16 %v3583
        %v4326 = vunpack.c.l.b16 %v3584
        %v4327 = vunpack.c.h.b16 %v3584
        %v4328 = vunpack.c.l.b16 %v3585
        %v4329 = vunpack.c.h.b16 %v3585
        %v4330 = vunpack.c.l.b16 %v3586
        %v4331 = vunpack.c.h.b16 %v3586
        %v4332 = vunpack.c.l.b16 %v3587
        %v4333 = vunpack.c.h.b16 %v3587
        %v4334 = vunpack.c.l.b16 %v3588
        %v4335 = vunpack.c.h.b16 %v3588
        %v4336 = vunpack.c.l.b16 %v3589
        %v4337 = vunpack.c.h.b16 %v3589
        %v4338 = vunpack.c.l.b16 %v3590
        %v4339 = vunpack.c.h.b16 %v3590
        %v4340 = vunpack.c.l.b16 %v3591
        %v4341 = vunpack.c.h.b16 %v3591
        %v4342 = vunpack.c.l.b16 %v3592
        %v4343 = vunpack.c.h.b16 %v3592
        %v4344 = vunpack.c.l.b16 %v3593
        %v4345 = vunpack.c.h.b16 %v3593
        %v4346 = vunpack.c.l.b16 %v3594
        %v4347 = vunpack.c.h.b16 %v3594
        %v4348 = vunpack.c.l.b16 %v3595
        %v4349 = vunpack.c.h.b16 %v3595
        %v4350 = vunpack.c.l.b16 %v3596
        %v4351 = vunpack.c.h.b16 %v3596
        %v4352 = vunpack.c.l.b16 %v3597
        %v4353 = vunpack.c.h.b16 %v3597
        %v4354 = vunpack.c.l.b16 %v3598
        %v4355 = vunpack.c.h.b16 %v3598
        %v4356 = vunpack.c.l.b16 %v3599
        %v4357 = vunpack.c.h.b16 %v3599
        %v4358 = vunpack.c.l.b16 %v3600
        %v4359 = vunpack.c.h.b16 %v3600
        %v4360 = vunpack.c.l.b16 %v3601
        %v4361 = vunpack.c.h.b16 %v3601
        %v4362 = vunpack.c.l.b16 %v3602
        %v4363 = vunpack.c.h.b16 %v3602
        %v4364 = vunpack.c.l.b16 %v3603
        %v4365 = vunpack.c.h.b16 %v3603
        %v4366 = vunpack.c.l.b16 %v3604
        %v4367 = vunpack.c.h.b16 %v3604
        %v4368 = vunpack.c.l.b16 %v3605
        %v4369 = vunpack.c.h.b16 %v3605
        %v4370 = vunpack.c.l.b16 %v3606
        %v4371 = vunpack.c.h.b16 %v3606
        %v4372 = vunpack.c.l.b16 %v3607
        %v4373 = vunpack.c.h.b16 %v3607
        %v4374 = vunpack.c.l.b16 %v3608
        %v4375 = vunpack.c.h.b16 %v3608
        %v4376 = vunpack.c.l.b16 %v3609
        %v4377 = vunpack.c.h.b16 %v3609
        %v4378 = vunpack.c.l.b16 %v3610
        %v4379 = vunpack.c.h.b16 %v3610
        %v4380 = vunpack.c.l.b16 %v3611
        %v4381 = vunpack.c.h.b16 %v3611
        %v4382 = vunpack.c.l.b16 %v3612
        %v4383 = vunpack.c.h.b16 %v3612
        %v4384 = vunpack.c.l.b16 %v3613
        %v4385 = vunpack.c.h.b16 %v3613
        %v4386 = vunpack.c.l.b16 %v3614
        %v4387 = vunpack.c.h.b16 %v3614
        %v4388 = vunpack.c.l.b16 %v3615
        %v4389 = vunpack.c.h.b16 %v3615
        %v4390 = vunpack.c.l.b16 %v3616
        %v4391 = vunpack.c.h.b16 %v3616
        %v4392 = vunpack.c.l.b16 %v3617
        %v4393 = vunpack.c.h.b16 %v3617
        %v4394 = vunpack.c.l.b16 %v3618
        %v4395 = vunpack.c.h.b16 %v3618
        %v4396 = vunpack.c.l.b16 %v3619
        %v4397 = vunpack.c.h.b16 %v3619
        %v4398 = vunpack.c.l.b16 %v3620
        %v4399 = vunpack.c.h.b16 %v3620
        %v4400 = vunpack.c.l.b16 %v3621
        %v4401 = vunpack.c.h.b16 %v3621
        %v4402 = vunpack.c.l.b16 %v3622
        %v4403 = vunpack.c.h.b16 %v3622
        %v4404 = vunpack.c.l.b16 %v3623
        %v4405 = vunpack.c.h.b16 %v3623
        %v4406 = vunpack.c.l.b16 %v3624
        %v4407 = vunpack.c.h.b16 %v3624
        %v4408 = vunpack.c.l.b16 %v3625
        %v4409 = vunpack.c.h.b16 %v3625
        %v4410 = vunpack.c.l.b16 %v3626
        %v4411 = vunpack.c.h.b16 %v3626
        %v4412 = vunpack.c.l.b16 %v3627
        %v4413 = vunpack.c.h.b16 %v3627
        %v4414 = vunpack.c.l.b16 %v3628
        %v4415 = vunpack.c.h.b16 %v3628
        %v4416 = vunpack.c.l.b16 %v3629
        %v4417 = vunpack.c.h.b16 %v3629
        %v4418 = vunpack.c.l.b16 %v3630
        %v4419 = vunpack.c.h.b16 %v3630
        %v4420 = vunpack.c.l.b16 %v3631
        %v4421 = vunpack.c.h.b16 %v3631
        %v4422 = vunpack.c.l.b16 %v3632
        %v4423 = vunpack.c.h.b16 %v3632
        %v4424 = vunpack.c.l.b16 %v3633
        %v4425 = vunpack.c.h.b16 %v3633
        %v4426 = vunpack.c.l.b16 %v3634
        %v4427 = vunpack.c.h.b16 %v3634
        %v4428 = vpack.c.b16 %v4048, %v4044
        %v4429 = vpack.c.b16 %v4049, %v4045
        %v4430 = vpack.c.b16 %v4050, %v4046
        %v4431 = vpack.c.b16 %v4051, %v4047
        %v4432 = vpack.c.b16 %v4056, %v4052
        %v4433 = vpack.c.b16 %v4057, %v4053
        %v4434 = vpack.c.b16 %v4058, %v4054
        %v4435 = vpack.c.b16 %v4059, %v4055
        %v4436 = vpack.c.b16 %v4064, %v4060
        %v4437 = vpack.c.b16 %v4065, %v4061
        %v4438 = vpack.c.b16 %v4066, %v4062
        %v4439 = vpack.c.b16 %v4067, %v4063
        %v4440 = vpack.c.b16 %v4072, %v4068
        %v4441 = vpack.c.b16 %v4073, %v4069
        %v4442 = vpack.c.b16 %v4074, %v4070
        %v4443 = vpack.c.b16 %v4075, %v4071
        %v4444 = vpack.c.b16 %v4080, %v4076
        %v4445 = vpack.c.b16 %v4081, %v4077
        %v4446 = vpack.c.b16 %v4082, %v4078
        %v4447 = vpack.c.b16 %v4083, %v4079
        %v4448 = vpack.c.b16 %v4088, %v4084
        %v4449 = vpack.c.b16 %v4089, %v4085
        %v4450 = vpack.c.b16 %v4090, %v4086
        %v4451 = vpack.c.b16 %v4091, %v4087
        %v4452 = vpack.c.b16 %v4096, %v4092
        %v4453 = vpack.c.b16 %v4097, %v4093
        %v4454 = vpack.c.b16 %v4098, %v4094
        %v4455 = vpack.c.b16 %v4099, %v4095
        %v4456 = vpack.c.b16 %v4104, %v4100
        %v4457 = vpack.c.b16 %v4105, %v4101
        %v4458 = vpack.c.b16 %v4106, %v4102
        %v4459 = vpack.c.b16 %v4107, %v4103
        %v4460 = vpack.c.b16 %v4112, %v4108
        %v4461 = vpack.c.b16 %v4113, %v4109
        %v4462 = vpack.c.b16 %v4114, %v4110
        %v4463 = vpack.c.b16 %v4115, %v4111
        %v4464 = vpack.c.b16 %v4120, %v4116
        %v4465 = vpack.c.b16 %v4121, %v4117
        %v4466 = vpack.c.b16 %v4122, %v4118
        %v4467 = vpack.c.b16 %v4123, %v4119
        %v4468 = vpack.c.b16 %v4128, %v4124
        %v4469 = vpack.c.b16 %v4129, %v4125
        %v4470 = vpack.c.b16 %v4130, %v4126
        %v4471 = vpack.c.b16 %v4131, %v4127
        %v4472 = vpack.c.b16 %v4136, %v4132
        %v4473 = vpack.c.b16 %v4137, %v4133
        %v4474 = vpack.c.b16 %v4138, %v4134
        %v4475 = vpack.c.b16 %v4139, %v4135
        %v4476 = vpack.c.b16 %v4144, %v4140
        %v4477 = vpack.c.b16 %v4145, %v4141
        %v4478 = vpack.c.b16 %v4146, %v4142
        %v4479 = vpack.c.b16 %v4147, %v4143
        %v4480 = vpack.c.b16 %v4152, %v4148
        %v4481 = vpack.c.b16 %v4153, %v4149
        %v4482 = vpack.c.b16 %v4154, %v4150
        %v4483 = vpack.c.b16 %v4155, %v4151
        %v4484 = vpack.c.b16 %v4160, %v4156
        %v4485 = vpack.c.b16 %v4161, %v4157
        %v4486 = vpack.c.b16 %v4162, %v4158
        %v4487 = vpack.c.b16 %v4163, %v4159
        %v4488 = vpack.c.b16 %v4168, %v4164
        %v4489 = vpack.c.b16 %v4169, %v4165
        %v4490 = vpack.c.b16 %v4170, %v4166
        %v4491 = vpack.c.b16 %v4171, %v4167
        %v4492 = vpack.c.b16 %v4176, %v4172
        %v4493 = vpack.c.b16 %v4177, %v4173
        %v4494 = vpack.c.b16 %v4178, %v4174
        %v4495 = vpack.c.b16 %v4179, %v4175
        %v4496 = vpack.c.b16 %v4184, %v4180
        %v4497 = vpack.c.b16 %v4185, %v4181
        %v4498 = vpack.c.b16 %v4186, %v4182
        %v4499 = vpack.c.b16 %v4187, %v4183
        %v4500 = vpack.c.b16 %v4192, %v4188
        %v4501 = vpack.c.b16 %v4193, %v4189
        %v4502 = vpack.c.b16 %v4194, %v4190
        %v4503 = vpack.c.b16 %v4195, %v4191
        %v4504 = vpack.c.b16 %v4200, %v4196
        %v4505 = vpack.c.b16 %v4201, %v4197
        %v4506 = vpack.c.b16 %v4202, %v4198
        %v4507 = vpack.c.b16 %v4203, %v4199
        %v4508 = vpack.c.b16 %v4208, %v4204
        %v4509 = vpack.c.b16 %v4209, %v4205
        %v4510 = vpack.c.b16 %v4210, %v4206
        %v4511 = vpack.c.b16 %v4211, %v4207
        %v4512 = vpack.c.b16 %v4216, %v4212
        %v4513 = vpack.c.b16 %v4217, %v4213
        %v4514 = vpack.c.b16 %v4218, %v4214
        %v4515 = vpack.c.b16 %v4219, %v4215
        %v4516 = vpack.c.b16 %v4224, %v4220
        %v4517 = vpack.c.b16 %v4225, %v4221
        %v4518 = vpack.c.b16 %v4226, %v4222
        %v4519 = vpack.c.b16 %v4227, %v4223
        %v4520 = vpack.c.b16 %v4232, %v4228
        %v4521 = vpack.c.b16 %v4233, %v4229
        %v4522 = vpack.c.b16 %v4234, %v4230
        %v4523 = vpack.c.b16 %v4235, %v4231
        %v4524 = vpack.c.b16 %v4240, %v4236
        %v4525 = vpack.c.b16 %v4241, %v4237
        %v4526 = vpack.c.b16 %v4242, %v4238
        %v4527 = vpack.c.b16 %v4243, %v4239
        %v4528 = vpack.c.b16 %v4248, %v4244
        %v4529 = vpack.c.b16 %v4249, %v4245
        %v4530 = vpack.c.b16 %v4250, %v4246
        %v4531 = vpack.c.b16 %v4251, %v4247
        %v4532 = vpack.c.b16 %v4256, %v4252
        %v4533 = vpack.c.b16 %v4257, %v4253
        %v4534 = vpack.c.b16 %v4258, %v4254
        %v4535 = vpack.c.b16 %v4259, %v4255
        %v4536 = vpack.c.b16 %v4264, %v4260
        %v4537 = vpack.c.b16 %v4265, %v4261
        %v4538 = vpack.c.b16 %v4266, %v4262
        %v4539 = vpack.c.b16 %v4267, %v4263
        %v4540 = vpack.c.b16 %v4272, %v4268
        %v4541 = vpack.c.b16 %v4273, %v4269
        %v4542 = vpack.c.b16 %v4274, %v4270
        %v4543 = vpack.c.b16 %v4275, %v4271
        %v4544 = vpack.c.b16 %v4280, %v4276
        %v4545 = vpack.c.b16 %v4281, %v4277
        %v4546 = vpack.c.b16 %v4282, %v4278
        %v4547 = vpack.c.b16 %v4283, %v4279
        %v4548 = vpack.c.b16 %v4288, %v4284
        %v4549 = vpack.c.b16 %v4289, %v4285
        %v4550 = vpack.c.b16 %v4290, %v4286
        %v4551 = vpack.c.b16 %v4291, %v4287
        %v4552 = vpack.c.b16 %v4296, %v4292
        %v4553 = vpack.c.b16 %v4297, %v4293
        %v4554 = vpack.c.b16 %v4298, %v4294
        %v4555 = vpack.c.b16 %v4299, %v4295
        %v4556 = vpack.c.b16 %v4304, %v4300
        %v4557 = vpack.c.b16 %v4305, %v4301
        %v4558 = vpack.c.b16 %v4306, %v4302
        %v4559 = vpack.c.b16 %v4307, %v4303
        %v4560 = vpack.c.b16 %v4312, %v4308
        %v4561 = vpack.c.b16 %v4313, %v4309
        %v4562 = vpack.c.b16 %v4314, %v4310
        %v4563 = vpack.c.b16 %v4315, %v4311
        %v4564 = vpack.c.b16 %v4320, %v4316
        %v4565 = vpack.c.b16 %v4321, %v4317
        %v4566 = vpack.c.b16 %v4322, %v4318
        %v4567 = vpack.c.b16 %v4323, %v4319
        %v4568 = vpack.c.b16 %v4328, %v4324
        %v4569 = vpack.c.b16 %v4329, %v4325
        %v4570 = vpack.c.b16 %v4330, %v4326
        %v4571 = vpack.c.b16 %v4331, %v4327
        %v4572 = vpack.c.b16 %v4336, %v4332
        %v4573 = vpack.c.b16 %v4337, %v4333
        %v4574 = vpack.c.b16 %v4338, %v4334
        %v4575 = vpack.c.b16 %v4339, %v4335
        %v4576 = vpack.c.b16 %v4344, %v4340
        %v4577 = vpack.c.b16 %v4345, %v4341
        %v4578 = vpack.c.b16 %v4346, %v4342
        %v4579 = vpack.c.b16 %v4347, %v4343
        %v4580 = vpack.c.b16 %v4352, %v4348
        %v4581 = vpack.c.b16 %v4353, %v4349
        %v4582 = vpack.c.b16 %v4354, %v4350
        %v4583 = vpack.c.b16 %v4355, %v4351
        %v4584 = vpack.c.b16 %v4360, %v4356
        %v4585 = vpack.c.b16 %v4361, %v4357
        %v4586 = vpack.c.b16 %v4362, %v4358
        %v4587 = vpack.c.b16 %v4363, %v4359
        %v4588 = vpack.c.b16 %v4368, %v4364
        %v4589 = vpack.c.b16 %v4369, %v4365
        %v4590 = vpack.c.b16 %v4370, %v4366
        %v4591 = vpack.c.b16 %v4371, %v4367
        %v4592 = vpack.c.b16 %v4376, %v4372
        %v4593 = vpack.c.b16 %v4377, %v4373
        %v4594 = vpack.c.b16 %v4378, %v4374
        %v4595 = vpack.c.b16 %v4379, %v4375
        %v4596 = vpack.c.b16 %v4384, %v4380
        %v4597 = vpack.c.b16 %v4385, %v4381
        %v4598 = vpack.c.b16 %v4386, %v4382
        %v4599 = vpack.c.b16 %v4387, %v4383
        %v4600 = vpack.c.b16 %v4392, %v4388
        %v4601 = vpack.c.b16 %v4393, %v4389
        %v4602 = vpack.c.b16 %v4394, %v4390
        %v4603 = vpack.c.b16 %v4395, %v4391
        %v4604 = vpack.c.b16 %v4400, %v4396
        %v4605 = vpack.c.b16 %v4401, %v4397
        %v4606 = vpack.c.b16 %v4402, %v4398
        %v4607 = vpack.c.b16 %v4403, %v4399
        %v4608 = vpack.c.b16 %v4408, %v4404
        %v4609 = vpack.c.b16 %v4409, %v4405
        %v4610 = vpack.c.b16 %v4410, %v4406
        %v4611 = vpack.c.b16 %v4411, %v4407
        %v4612 = vpack.c.b16 %v4416, %v4412
        %v4613 = vpack.c.b16 %v4417, %v4413
        %v4614 = vpack.c.b16 %v4418, %v4414
        %v4615 = vpack.c.b16 %v4419, %v4415
        %v4616 = vpack.c.b16 %v4424, %v4420
        %v4617 = vpack.c.b16 %v4425, %v4421
        %v4618 = vpack.c.b16 %v4426, %v4422
        %v4619 = vpack.c.b16 %v4427, %v4423
        %4812 = vmatprep.subr.bf16.mxu0 %v4429
        %4813 = vmatpush1.bf16.msra.mxu0 %v4428
        %4814 = vmatprep.subr.bf16.mxu0 %v4433
        %4815 = vmatpush1.bf16.msra.mxu0 %v4432
        %4816 = vmatprep.subr.bf16.mxu0 %v4437
        %4817 = vmatpush1.bf16.msra.mxu0 %v4436
        %4818 = vmatprep.subr.bf16.mxu0 %v4441
        %4819 = vmatpush1.bf16.msra.mxu0 %v4440
        %4820 = vmatprep.subr.bf16.mxu0 %v4445
        %4821 = vmatpush1.bf16.msra.mxu0 %v4444
        %4822 = vmatprep.subr.bf16.mxu0 %v4449
        %4823 = vmatpush1.bf16.msra.mxu0 %v4448
        %4824 = vmatprep.subr.bf16.mxu0 %v4453
        %4825 = vmatpush1.bf16.msra.mxu0 %v4452
        %4826 = vmatprep.subr.bf16.mxu0 %v4457
        %4827 = vmatpush1.bf16.msra.mxu0 %v4456
        %4828 = vmatprep.subr.bf16.mxu0 %v4461
        %4829 = vmatpush1.bf16.msra.mxu0 %v4460
        %4830 = vmatprep.subr.bf16.mxu0 %v4465
        %4831 = vmatpush1.bf16.msra.mxu0 %v4464
        %4832 = vmatprep.subr.bf16.mxu0 %v4469
        %4833 = vmatpush1.bf16.msra.mxu0 %v4468
        %4834 = vmatprep.subr.bf16.mxu0 %v4473
        %4835 = vmatpush1.bf16.msra.mxu0 %v4472
        %4836 = vmatprep.subr.bf16.mxu0 %v4477
        %4837 = vmatpush1.bf16.msra.mxu0 %v4476
        %4838 = vmatprep.subr.bf16.mxu0 %v4481
        %4839 = vmatpush1.bf16.msra.mxu0 %v4480
        %4840 = vmatprep.subr.bf16.mxu0 %v4485
        %4841 = vmatpush1.bf16.msra.mxu0 %v4484
        %4842 = vmatprep.subr.bf16.mxu0 %v4489
        %4843 = vmatpush1.bf16.msra.mxu0 %v4488
        %4844 = vmatprep.mubr.bf16.mxu0 %v3781
        %4845 = vmatmul.mubr.bf16.gmra.mrb[0].mxu0 %v3780
        %v4846 = vpop.f32.mrb[0].mxu0
        %v4847 = vadd.f32 0.0, %v4846
        %v4848 = vpop.f32.mrb[0].mxu0
        %v4849 = vadd.f32 0.0, %v4848
        %v4850 = vpop.f32.mrb[0].mxu0
        %v4851 = vadd.f32 0.0, %v4850
        %v4852 = vpop.f32.mrb[0].mxu0
        %v4853 = vadd.f32 0.0, %v4852
        %4854 = vmatprep.mubr.bf16.mxu0 %v3787
        %4855 = vmatmul.mubr.bf16.gmra.mrb[0].mxu0 %v3786
        %v4856 = vpop.f32.mrb[0].mxu0
        %v4857 = vadd.f32 0.0, %v4856
        %v4858 = vpop.f32.mrb[0].mxu0
        %v4859 = vadd.f32 0.0, %v4858
        %v4860 = vpop.f32.mrb[0].mxu0
        %v4861 = vadd.f32 0.0, %v4860
        %v4862 = vpop.f32.mrb[0].mxu0
        %v4863 = vadd.f32 0.0, %v4862
        %4864 = vmatprep.mubr.bf16.mxu0 %v3793
        %4865 = vmatmul.mubr.bf16.gmra.mrb[0].mxu0 %v3792
        %v4866 = vpop.f32.mrb[0].mxu0
        %v4867 = vadd.f32 0.0, %v4866
        %v4868 = vpop.f32.mrb[0].mxu0
        %v4869 = vadd.f32 0.0, %v4868
        %v4870 = vpop.f32.mrb[0].mxu0
        %v4871 = vadd.f32 0.0, %v4870
        %v4872 = vpop.f32.mrb[0].mxu0
        %v4873 = vadd.f32 0.0, %v4872
        %4874 = vmatprep.mubr.bf16.mxu0 %v3799
        %4875 = vmatmul.mubr.bf16.gmra.mrb[0].mxu0 %v3798
        %v4876 = vpop.f32.mrb[0].mxu0
        %v4877 = vadd.f32 0.0, %v4876
        %v4878 = vpop.f32.mrb[0].mxu0
        %v4879 = vadd.f32 0.0, %v4878
        %v4880 = vpop.f32.mrb[0].mxu0
        %v4881 = vadd.f32 0.0, %v4880
        %v4882 = vpop.f32.mrb[0].mxu0
        %v4883 = vadd.f32 0.0, %v4882
        %4884 = vmatprep.mubr.bf16.mxu0 %v3805
        %4885 = vmatmul.mubr.bf16.gmra.mrb[0].mxu0 %v3804
        %v4886 = vpop.f32.mrb[0].mxu0
        %v4887 = vadd.f32 0.0, %v4886
        %v4888 = vpop.f32.mrb[0].mxu0
        %v4889 = vadd.f32 0.0, %v4888
        %v4890 = vpop.f32.mrb[0].mxu0
        %v4891 = vadd.f32 0.0, %v4890
        %v4892 = vpop.f32.mrb[0].mxu0
        %v4893 = vadd.f32 0.0, %v4892
        %4894 = vmatprep.mubr.bf16.mxu0 %v3811
        %4895 = vmatmul.mubr.bf16.gmra.mrb[0].mxu0 %v3810
        %v4896 = vpop.f32.mrb[0].mxu0
        %v4897 = vadd.f32 0.0, %v4896
        %v4898 = vpop.f32.mrb[0].mxu0
        %v4899 = vadd.f32 0.0, %v4898
        %v4900 = vpop.f32.mrb[0].mxu0
        %v4901 = vadd.f32 0.0, %v4900
        %v4902 = vpop.f32.mrb[0].mxu0
        %v4903 = vadd.f32 0.0, %v4902
        %4904 = vdwg.mxu0
        %4905 = vmatprep.subr.bf16.mxu0 %v4493
        %4906 = vmatpush1.bf16.msra.mxu0 %v4492
        %4907 = vmatprep.subr.bf16.mxu0 %v4497
        %4908 = vmatpush1.bf16.msra.mxu0 %v4496
        %4909 = vmatprep.subr.bf16.mxu0 %v4501
        %4910 = vmatpush1.bf16.msra.mxu0 %v4500
        %4911 = vmatprep.subr.bf16.mxu0 %v4505
        %4912 = vmatpush1.bf16.msra.mxu0 %v4504
        %4913 = vmatprep.subr.bf16.mxu0 %v4509
        %4914 = vmatpush1.bf16.msra.mxu0 %v4508
        %4915 = vmatprep.subr.bf16.mxu0 %v4513
        %4916 = vmatpush1.bf16.msra.mxu0 %v4512
        %4917 = vmatprep.subr.bf16.mxu0 %v4517
        %4918 = vmatpush1.bf16.msra.mxu0 %v4516
        %4919 = vmatprep.subr.bf16.mxu0 %v4521
        %4920 = vmatpush1.bf16.msra.mxu0 %v4520
        %4921 = vmatprep.subr.bf16.mxu0 %v4525
        %4922 = vmatpush1.bf16.msra.mxu0 %v4524
        %4923 = vmatprep.subr.bf16.mxu0 %v4529
        %4924 = vmatpush1.bf16.msra.mxu0 %v4528
        %4925 = vmatprep.subr.bf16.mxu0 %v4533
        %4926 = vmatpush1.bf16.msra.mxu0 %v4532
        %4927 = vmatprep.subr.bf16.mxu0 %v4537
        %4928 = vmatpush1.bf16.msra.mxu0 %v4536
        %4929 = vmatprep.subr.bf16.mxu0 %v4541
        %4930 = vmatpush1.bf16.msra.mxu0 %v4540
        %4931 = vmatprep.subr.bf16.mxu0 %v4545
        %4932 = vmatpush1.bf16.msra.mxu0 %v4544
        %4933 = vmatprep.subr.bf16.mxu0 %v4549
        %4934 = vmatpush1.bf16.msra.mxu0 %v4548
        %4935 = vmatprep.subr.bf16.mxu0 %v4553
        %4936 = vmatpush1.bf16.msra.mxu0 %v4552
        %4937 = vmatprep.mubr.bf16.mxu0 %v3783
        %4938 = vmatmul.mubr.bf16.gmra.mrb[0].mxu0 %v3782
        %v4939 = vpop.f32.mrb[0].mxu0
        %v4940 = vadd.f32 %v4847, %v4939
        %v4941 = vpop.f32.mrb[0].mxu0
        %v4942 = vadd.f32 %v4849, %v4941
        %v4943 = vpop.f32.mrb[0].mxu0
        %v4944 = vadd.f32 %v4851, %v4943
        %v4945 = vpop.f32.mrb[0].mxu0
        %v4946 = vadd.f32 %v4853, %v4945
        %4947 = vmatprep.mubr.bf16.mxu0 %v3789
        %4948 = vmatmul.mubr.bf16.gmra.mrb[0].mxu0 %v3788
        %v4949 = vpop.f32.mrb[0].mxu0
        %v4950 = vadd.f32 %v4857, %v4949
        %v4951 = vpop.f32.mrb[0].mxu0
        %v4952 = vadd.f32 %v4859, %v4951
        %v4953 = vpop.f32.mrb[0].mxu0
        %v4954 = vadd.f32 %v4861, %v4953
        %v4955 = vpop.f32.mrb[0].mxu0
        %v4956 = vadd.f32 %v4863, %v4955
        %4957 = vmatprep.mubr.bf16.mxu0 %v3795
        %4958 = vmatmul.mubr.bf16.gmra.mrb[0].mxu0 %v3794
        %v4959 = vpop.f32.mrb[0].mxu0
        %v4960 = vadd.f32 %v4867, %v4959
        %v4961 = vpop.f32.mrb[0].mxu0
        %v4962 = vadd.f32 %v4869, %v4961
        %v4963 = vpop.f32.mrb[0].mxu0
        %v4964 = vadd.f32 %v4871, %v4963
        %v4965 = vpop.f32.mrb[0].mxu0
        %v4966 = vadd.f32 %v4873, %v4965
        %4967 = vmatprep.mubr.bf16.mxu0 %v3801
        %4968 = vmatmul.mubr.bf16.gmra.mrb[0].mxu0 %v3800
        %v4969 = vpop.f32.mrb[0].mxu0
        %v4970 = vadd.f32 %v4877, %v4969
        %v4971 = vpop.f32.mrb[0].mxu0
        %v4972 = vadd.f32 %v4879, %v4971
        %v4973 = vpop.f32.mrb[0].mxu0
        %v4974 = vadd.f32 %v4881, %v4973
        %v4975 = vpop.f32.mrb[0].mxu0
        %v4976 = vadd.f32 %v4883, %v4975
        %4977 = vmatprep.mubr.bf16.mxu0 %v3807
        %4978 = vmatmul.mubr.bf16.gmra.mrb[0].mxu0 %v3806
        %v4979 = vpop.f32.mrb[0].mxu0
        %v4980 = vadd.f32 %v4887, %v4979
        %v4981 = vpop.f32.mrb[0].mxu0
        %v4982 = vadd.f32 %v4889, %v4981
        %v4983 = vpop.f32.mrb[0].mxu0
        %v4984 = vadd.f32 %v4891, %v4983
        %v4985 = vpop.f32.mrb[0].mxu0
        %v4986 = vadd.f32 %v4893, %v4985
        %4987 = vmatprep.mubr.bf16.mxu0 %v3813
        %4988 = vmatmul.mubr.bf16.gmra.mrb[0].mxu0 %v3812
        %v4989 = vpop.f32.mrb[0].mxu0
        %v4990 = vadd.f32 %v4897, %v4989
        %v4991 = vpop.f32.mrb[0].mxu0
        %v4992 = vadd.f32 %v4899, %v4991
        %v4993 = vpop.f32.mrb[0].mxu0
        %v4994 = vadd.f32 %v4901, %v4993
        %v4995 = vpop.f32.mrb[0].mxu0
        %v4996 = vadd.f32 %v4903, %v4995
        %4997 = vdwg.mxu0
        %4998 = vmatprep.subr.bf16.mxu0 %v4557
        %4999 = vmatpush1.bf16.msra.mxu0 %v4556
        %5000 = vmatprep.subr.bf16.mxu0 %v4561
        %5001 = vmatpush1.bf16.msra.mxu0 %v4560
        %5002 = vmatprep.subr.bf16.mxu0 %v4565
        %5003 = vmatpush1.bf16.msra.mxu0 %v4564
        %5004 = vmatprep.subr.bf16.mxu0 %v4569
        %5005 = vmatpush1.bf16.msra.mxu0 %v4568
        %5006 = vmatprep.subr.bf16.mxu0 %v4573
        %5007 = vmatpush1.bf16.msra.mxu0 %v4572
        %5008 = vmatprep.subr.bf16.mxu0 %v4577
        %5009 = vmatpush1.bf16.msra.mxu0 %v4576
        %5010 = vmatprep.subr.bf16.mxu0 %v4581
        %5011 = vmatpush1.bf16.msra.mxu0 %v4580
        %5012 = vmatprep.subr.bf16.mxu0 %v4585
        %5013 = vmatpush1.bf16.msra.mxu0 %v4584
        %5014 = vmatprep.subr.bf16.mxu0 %v4589
        %5015 = vmatpush1.bf16.msra.mxu0 %v4588
        %5016 = vmatprep.subr.bf16.mxu0 %v4593
        %5017 = vmatpush1.bf16.msra.mxu0 %v4592
        %5018 = vmatprep.subr.bf16.mxu0 %v4597
        %5019 = vmatpush1.bf16.msra.mxu0 %v4596
        %5020 = vmatprep.subr.bf16.mxu0 %v4601
        %5021 = vmatpush1.bf16.msra.mxu0 %v4600
        %5022 = vmatprep.subr.bf16.mxu0 %v4605
        %5023 = vmatpush1.bf16.msra.mxu0 %v4604
        %5024 = vmatprep.subr.bf16.mxu0 %v4609
        %5025 = vmatpush1.bf16.msra.mxu0 %v4608
        %5026 = vmatprep.subr.bf16.mxu0 %v4613
        %5027 = vmatpush1.bf16.msra.mxu0 %v4612
        %5028 = vmatprep.subr.bf16.mxu0 %v4617
        %5029 = vmatpush1.bf16.msra.mxu0 %v4616
        %5030 = vmatprep.mubr.bf16.mxu0 %v3785
        %5031 = vmatmul.mubr.bf16.gmra.mrb[0].mxu0 %v3784
        %v5032 = vpop.f32.mrb[0].mxu0
        %v5033 = vadd.f32 %v4940, %v5032
        %v5034 = vpop.f32.mrb[0].mxu0
        %v5035 = vadd.f32 %v4942, %v5034
        %v5036 = vpop.f32.mrb[0].mxu0
        %v5037 = vadd.f32 %v4944, %v5036
        %v5038 = vpop.f32.mrb[0].mxu0
        %v5039 = vadd.f32 %v4946, %v5038
        %5040 = vmatprep.mubr.bf16.mxu0 %v3791
        %5041 = vmatmul.mubr.bf16.gmra.mrb[0].mxu0 %v3790
        %v5042 = vpop.f32.mrb[0].mxu0
        %v5043 = vadd.f32 %v4950, %v5042
        %v5044 = vpop.f32.mrb[0].mxu0
        %v5045 = vadd.f32 %v4952, %v5044
        %v5046 = vpop.f32.mrb[0].mxu0
        %v5047 = vadd.f32 %v4954, %v5046
        %v5048 = vpop.f32.mrb[0].mxu0
        %v5049 = vadd.f32 %v4956, %v5048
        %5050 = vmatprep.mubr.bf16.mxu0 %v3797
        %5051 = vmatmul.mubr.bf16.gmra.mrb[0].mxu0 %v3796
        %v5052 = vpop.f32.mrb[0].mxu0
        %v5053 = vadd.f32 %v4960, %v5052
        %v5054 = vpop.f32.mrb[0].mxu0
        %v5055 = vadd.f32 %v4962, %v5054
        %v5056 = vpop.f32.mrb[0].mxu0
        %v5057 = vadd.f32 %v4964, %v5056
        %v5058 = vpop.f32.mrb[0].mxu0
        %v5059 = vadd.f32 %v4966, %v5058
        %5060 = vmatprep.mubr.bf16.mxu0 %v3803
        %5061 = vmatmul.mubr.bf16.gmra.mrb[0].mxu0 %v3802
        %v5062 = vpop.f32.mrb[0].mxu0
        %v5063 = vadd.f32 %v4970, %v5062
        %v5064 = vpop.f32.mrb[0].mxu0
        %v5065 = vadd.f32 %v4972, %v5064
        %v5066 = vpop.f32.mrb[0].mxu0
        %v5067 = vadd.f32 %v4974, %v5066
        %v5068 = vpop.f32.mrb[0].mxu0
        %v5069 = vadd.f32 %v4976, %v5068
        %5070 = vmatprep.mubr.bf16.mxu0 %v3809
        %5071 = vmatmul.mubr.bf16.gmra.mrb[0].mxu0 %v3808
        %v5072 = vpop.f32.mrb[0].mxu0
        %v5073 = vadd.f32 %v4980, %v5072
        %v5074 = vpop.f32.mrb[0].mxu0
        %v5075 = vadd.f32 %v4982, %v5074
        %v5076 = vpop.f32.mrb[0].mxu0
        %v5077 = vadd.f32 %v4984, %v5076
        %v5078 = vpop.f32.mrb[0].mxu0
        %v5079 = vadd.f32 %v4986, %v5078
        %5080 = vmatprep.mubr.bf16.mxu0 %v3815
        %5081 = vmatmul.mubr.bf16.gmra.mrb[0].mxu0 %v3814
        %v5082 = vpop.f32.mrb[0].mxu0
        %v5083 = vadd.f32 %v4990, %v5082
        %v5084 = vpop.f32.mrb[0].mxu0
        %v5085 = vadd.f32 %v4992, %v5084
        %v5086 = vpop.f32.mrb[0].mxu0
        %v5087 = vadd.f32 %v4994, %v5086
        %v5088 = vpop.f32.mrb[0].mxu0
        %v5089 = vadd.f32 %v4996, %v5088
        %5090 = vdwg.mxu0
        %5091 = vmatprep.subr.bf16.mxu0 %v4431
        %5092 = vmatpush1.bf16.msra.mxu0 %v4430
        %5093 = vmatprep.subr.bf16.mxu0 %v4435
        %5094 = vmatpush1.bf16.msra.mxu0 %v4434
        %5095 = vmatprep.subr.bf16.mxu0 %v4439
        %5096 = vmatpush1.bf16.msra.mxu0 %v4438
        %5097 = vmatprep.subr.bf16.mxu0 %v4443
        %5098 = vmatpush1.bf16.msra.mxu0 %v4442
        %5099 = vmatprep.subr.bf16.mxu0 %v4447
        %5100 = vmatpush1.bf16.msra.mxu0 %v4446
        %5101 = vmatprep.subr.bf16.mxu0 %v4451
        %5102 = vmatpush1.bf16.msra.mxu0 %v4450
        %5103 = vmatprep.subr.bf16.mxu0 %v4455
        %5104 = vmatpush1.bf16.msra.mxu0 %v4454
        %5105 = vmatprep.subr.bf16.mxu0 %v4459
        %5106 = vmatpush1.bf16.msra.mxu0 %v4458
        %5107 = vmatprep.subr.bf16.mxu0 %v4463
        %5108 = vmatpush1.bf16.msra.mxu0 %v4462
        %5109 = vmatprep.subr.bf16.mxu0 %v4467
        %5110 = vmatpush1.bf16.msra.mxu0 %v4466
        %5111 = vmatprep.subr.bf16.mxu0 %v4471
        %5112 = vmatpush1.bf16.msra.mxu0 %v4470
        %5113 = vmatprep.subr.bf16.mxu0 %v4475
        %5114 = vmatpush1.bf16.msra.mxu0 %v4474
        %5115 = vmatprep.subr.bf16.mxu0 %v4479
        %5116 = vmatpush1.bf16.msra.mxu0 %v4478
        %5117 = vmatprep.subr.bf16.mxu0 %v4483
        %5118 = vmatpush1.bf16.msra.mxu0 %v4482
        %5119 = vmatprep.subr.bf16.mxu0 %v4487
        %5120 = vmatpush1.bf16.msra.mxu0 %v4486
        %5121 = vmatprep.subr.bf16.mxu0 %v4491
        %5122 = vmatpush1.bf16.msra.mxu0 %v4490
        %5123 = vmatprep.mubr.bf16.mxu0 %v3781
        %5124 = vmatmul.mubr.bf16.gmra.mrb[0].mxu0 %v3780
        %v5125 = vpop.f32.mrb[0].mxu0
        %v5126 = vadd.f32 0.0, %v5125
        %v5127 = vpop.f32.mrb[0].mxu0
        %v5128 = vadd.f32 0.0, %v5127
        %v5129 = vpop.f32.mrb[0].mxu0
        %v5130 = vadd.f32 0.0, %v5129
        %v5131 = vpop.f32.mrb[0].mxu0
        %v5132 = vadd.f32 0.0, %v5131
        %5133 = vmatprep.mubr.bf16.mxu0 %v3787
        %5134 = vmatmul.mubr.bf16.gmra.mrb[0].mxu0 %v3786
        %v5135 = vpop.f32.mrb[0].mxu0
        %v5136 = vadd.f32 0.0, %v5135
        %v5137 = vpop.f32.mrb[0].mxu0
        %v5138 = vadd.f32 0.0, %v5137
        %v5139 = vpop.f32.mrb[0].mxu0
        %v5140 = vadd.f32 0.0, %v5139
        %v5141 = vpop.f32.mrb[0].mxu0
        %v5142 = vadd.f32 0.0, %v5141
        %5143 = vmatprep.mubr.bf16.mxu0 %v3793
        %5144 = vmatmul.mubr.bf16.gmra.mrb[0].mxu0 %v3792
        %v5145 = vpop.f32.mrb[0].mxu0
        %v5146 = vadd.f32 0.0, %v5145
        %v5147 = vpop.f32.mrb[0].mxu0
        %v5148 = vadd.f32 0.0, %v5147
        %v5149 = vpop.f32.mrb[0].mxu0
        %v5150 = vadd.f32 0.0, %v5149
        %v5151 = vpop.f32.mrb[0].mxu0
        %v5152 = vadd.f32 0.0, %v5151
        %5153 = vmatprep.mubr.bf16.mxu0 %v3799
        %5154 = vmatmul.mubr.bf16.gmra.mrb[0].mxu0 %v3798
        %v5155 = vpop.f32.mrb[0].mxu0
        %v5156 = vadd.f32 0.0, %v5155
        %v5157 = vpop.f32.mrb[0].mxu0
        %v5158 = vadd.f32 0.0, %v5157
        %v5159 = vpop.f32.mrb[0].mxu0
        %v5160 = vadd.f32 0.0, %v5159
        %v5161 = vpop.f32.mrb[0].mxu0
        %v5162 = vadd.f32 0.0, %v5161
        %5163 = vmatprep.mubr.bf16.mxu0 %v3805
        %5164 = vmatmul.mubr.bf16.gmra.mrb[0].mxu0 %v3804
        %v5165 = vpop.f32.mrb[0].mxu0
        %v5166 = vadd.f32 0.0, %v5165
        %v5167 = vpop.f32.mrb[0].mxu0
        %v5168 = vadd.f32 0.0, %v5167
        %v5169 = vpop.f32.mrb[0].mxu0
        %v5170 = vadd.f32 0.0, %v5169
        %v5171 = vpop.f32.mrb[0].mxu0
        %v5172 = vadd.f32 0.0, %v5171
        %5173 = vmatprep.mubr.bf16.mxu0 %v3811
        %5174 = vmatmul.mubr.bf16.gmra.mrb[0].mxu0 %v3810
        %v5175 = vpop.f32.mrb[0].mxu0
        %v5176 = vadd.f32 0.0, %v5175
        %v5177 = vpop.f32.mrb[0].mxu0
        %v5178 = vadd.f32 0.0, %v5177
        %v5179 = vpop.f32.mrb[0].mxu0
        %v5180 = vadd.f32 0.0, %v5179
        %v5181 = vpop.f32.mrb[0].mxu0
        %v5182 = vadd.f32 0.0, %v5181
        %5183 = vdwg.mxu0
        %5184 = vmatprep.subr.bf16.mxu0 %v4495
        %5185 = vmatpush1.bf16.msra.mxu0 %v4494
        %5186 = vmatprep.subr.bf16.mxu0 %v4499
        %5187 = vmatpush1.bf16.msra.mxu0 %v4498
        %5188 = vmatprep.subr.bf16.mxu0 %v4503
        %5189 = vmatpush1.bf16.msra.mxu0 %v4502
        %5190 = vmatprep.subr.bf16.mxu0 %v4507
        %5191 = vmatpush1.bf16.msra.mxu0 %v4506
        %5192 = vmatprep.subr.bf16.mxu0 %v4511
        %5193 = vmatpush1.bf16.msra.mxu0 %v4510
        %5194 = vmatprep.subr.bf16.mxu0 %v4515
        %5195 = vmatpush1.bf16.msra.mxu0 %v4514
        %5196 = vmatprep.subr.bf16.mxu0 %v4519
        %5197 = vmatpush1.bf16.msra.mxu0 %v4518
        %5198 = vmatprep.subr.bf16.mxu0 %v4523
        %5199 = vmatpush1.bf16.msra.mxu0 %v4522
        %5200 = vmatprep.subr.bf16.mxu0 %v4527
        %5201 = vmatpush1.bf16.msra.mxu0 %v4526
        %5202 = vmatprep.subr.bf16.mxu0 %v4531
        %5203 = vmatpush1.bf16.msra.mxu0 %v4530
        %5204 = vmatprep.subr.bf16.mxu0 %v4535
        %5205 = vmatpush1.bf16.msra.mxu0 %v4534
        %5206 = vmatprep.subr.bf16.mxu0 %v4539
        %5207 = vmatpush1.bf16.msra.mxu0 %v4538
        %5208 = vmatprep.subr.bf16.mxu0 %v4543
        %5209 = vmatpush1.bf16.msra.mxu0 %v4542
        %5210 = vmatprep.subr.bf16.mxu0 %v4547
        %5211 = vmatpush1.bf16.msra.mxu0 %v4546
        %5212 = vmatprep.subr.bf16.mxu0 %v4551
        %5213 = vmatpush1.bf16.msra.mxu0 %v4550
        %5214 = vmatprep.subr.bf16.mxu0 %v4555
        %5215 = vmatpush1.bf16.msra.mxu0 %v4554
        %5216 = vmatprep.mubr.bf16.mxu0 %v3783
        %5217 = vmatmul.mubr.bf16.gmra.mrb[0].mxu0 %v3782
        %v5218 = vpop.f32.mrb[0].mxu0
        %v5219 = vadd.f32 %v5126, %v5218
        %v5220 = vpop.f32.mrb[0].mxu0
        %v5221 = vadd.f32 %v5128, %v5220
        %v5222 = vpop.f32.mrb[0].mxu0
        %v5223 = vadd.f32 %v5130, %v5222
        %v5224 = vpop.f32.mrb[0].mxu0
        %v5225 = vadd.f32 %v5132, %v5224
        %5226 = vmatprep.mubr.bf16.mxu0 %v3789
        %5227 = vmatmul.mubr.bf16.gmra.mrb[0].mxu0 %v3788
        %v5228 = vpop.f32.mrb[0].mxu0
        %v5229 = vadd.f32 %v5136, %v5228
        %v5230 = vpop.f32.mrb[0].mxu0
        %v5231 = vadd.f32 %v5138, %v5230
        %v5232 = vpop.f32.mrb[0].mxu0
        %v5233 = vadd.f32 %v5140, %v5232
        %v5234 = vpop.f32.mrb[0].mxu0
        %v5235 = vadd.f32 %v5142, %v5234
        %5236 = vmatprep.mubr.bf16.mxu0 %v3795
        %5237 = vmatmul.mubr.bf16.gmra.mrb[0].mxu0 %v3794
        %v5238 = vpop.f32.mrb[0].mxu0
        %v5239 = vadd.f32 %v5146, %v5238
        %v5240 = vpop.f32.mrb[0].mxu0
        %v5241 = vadd.f32 %v5148, %v5240
        %v5242 = vpop.f32.mrb[0].mxu0
        %v5243 = vadd.f32 %v5150, %v5242
        %v5244 = vpop.f32.mrb[0].mxu0
        %v5245 = vadd.f32 %v5152, %v5244
        %5246 = vmatprep.mubr.bf16.mxu0 %v3801
        %5247 = vmatmul.mubr.bf16.gmra.mrb[0].mxu0 %v3800
        %v5248 = vpop.f32.mrb[0].mxu0
        %v5249 = vadd.f32 %v5156, %v5248
        %v5250 = vpop.f32.mrb[0].mxu0
        %v5251 = vadd.f32 %v5158, %v5250
        %v5252 = vpop.f32.mrb[0].mxu0
        %v5253 = vadd.f32 %v5160, %v5252
        %v5254 = vpop.f32.mrb[0].mxu0
        %v5255 = vadd.f32 %v5162, %v5254
        %5256 = vmatprep.mubr.bf16.mxu0 %v3807
        %5257 = vmatmul.mubr.bf16.gmra.mrb[0].mxu0 %v3806
        %v5258 = vpop.f32.mrb[0].mxu0
        %v5259 = vadd.f32 %v5166, %v5258
        %v5260 = vpop.f32.mrb[0].mxu0
        %v5261 = vadd.f32 %v5168, %v5260
        %v5262 = vpop.f32.mrb[0].mxu0
        %v5263 = vadd.f32 %v5170, %v5262
        %v5264 = vpop.f32.mrb[0].mxu0
        %v5265 = vadd.f32 %v5172, %v5264
        %5266 = vmatprep.mubr.bf16.mxu0 %v3813
        %5267 = vmatmul.mubr.bf16.gmra.mrb[0].mxu0 %v3812
        %v5268 = vpop.f32.mrb[0].mxu0
        %v5269 = vadd.f32 %v5176, %v5268
        %v5270 = vpop.f32.mrb[0].mxu0
        %v5271 = vadd.f32 %v5178, %v5270
        %v5272 = vpop.f32.mrb[0].mxu0
        %v5273 = vadd.f32 %v5180, %v5272
        %v5274 = vpop.f32.mrb[0].mxu0
        %v5275 = vadd.f32 %v5182, %v5274
        %5276 = vdwg.mxu0
        %5277 = vmatprep.subr.bf16.mxu0 %v4559
        %5278 = vmatpush1.bf16.msra.mxu0 %v4558
        %5279 = vmatprep.subr.bf16.mxu0 %v4563
        %5280 = vmatpush1.bf16.msra.mxu0 %v4562
        %5281 = vmatprep.subr.bf16.mxu0 %v4567
        %5282 = vmatpush1.bf16.msra.mxu0 %v4566
        %5283 = vmatprep.subr.bf16.mxu0 %v4571
        %5284 = vmatpush1.bf16.msra.mxu0 %v4570
        %5285 = vmatprep.subr.bf16.mxu0 %v4575
        %5286 = vmatpush1.bf16.msra.mxu0 %v4574
        %5287 = vmatprep.subr.bf16.mxu0 %v4579
        %5288 = vmatpush1.bf16.msra.mxu0 %v4578
        %5289 = vmatprep.subr.bf16.mxu0 %v4583
        %5290 = vmatpush1.bf16.msra.mxu0 %v4582
        %5291 = vmatprep.subr.bf16.mxu0 %v4587
        %5292 = vmatpush1.bf16.msra.mxu0 %v4586
        %5293 = vmatprep.subr.bf16.mxu0 %v4591
        %5294 = vmatpush1.bf16.msra.mxu0 %v4590
        %5295 = vmatprep.subr.bf16.mxu0 %v4595
        %5296 = vmatpush1.bf16.msra.mxu0 %v4594
        %5297 = vmatprep.subr.bf16.mxu0 %v4599
        %5298 = vmatpush1.bf16.msra.mxu0 %v4598
        %5299 = vmatprep.subr.bf16.mxu0 %v4603
        %5300 = vmatpush1.bf16.msra.mxu0 %v4602
        %5301 = vmatprep.subr.bf16.mxu0 %v4607
        %5302 = vmatpush1.bf16.msra.mxu0 %v4606
        %5303 = vmatprep.subr.bf16.mxu0 %v4611
        %5304 = vmatpush1.bf16.msra.mxu0 %v4610
        %5305 = vmatprep.subr.bf16.mxu0 %v4615
        %5306 = vmatpush1.bf16.msra.mxu0 %v4614
        %5307 = vmatprep.subr.bf16.mxu0 %v4619
        %5308 = vmatpush1.bf16.msra.mxu0 %v4618
        %5309 = vmatprep.mubr.bf16.mxu0 %v3785
        %5310 = vmatmul.mubr.bf16.gmra.mrb[0].mxu0 %v3784
        %v5311 = vpop.f32.mrb[0].mxu0
        %v5312 = vadd.f32 %v5219, %v5311
        %v5313 = vpop.f32.mrb[0].mxu0
        %v5314 = vadd.f32 %v5221, %v5313
        %v5315 = vpop.f32.mrb[0].mxu0
        %v5316 = vadd.f32 %v5223, %v5315
        %v5317 = vpop.f32.mrb[0].mxu0
        %v5318 = vadd.f32 %v5225, %v5317
        %5319 = vmatprep.mubr.bf16.mxu0 %v3791
        %5320 = vmatmul.mubr.bf16.gmra.mrb[0].mxu0 %v3790
        %v5321 = vpop.f32.mrb[0].mxu0
        %v5322 = vadd.f32 %v5229, %v5321
        %v5323 = vpop.f32.mrb[0].mxu0
        %v5324 = vadd.f32 %v5231, %v5323
        %v5325 = vpop.f32.mrb[0].mxu0
        %v5326 = vadd.f32 %v5233, %v5325
        %v5327 = vpop.f32.mrb[0].mxu0
        %v5328 = vadd.f32 %v5235, %v5327
        %5329 = vmatprep.mubr.bf16.mxu0 %v3797
        %5330 = vmatmul.mubr.bf16.gmra.mrb[0].mxu0 %v3796
        %v5331 = vpop.f32.mrb[0].mxu0
        %v5332 = vadd.f32 %v5239, %v5331
        %v5333 = vpop.f32.mrb[0].mxu0
        %v5334 = vadd.f32 %v5241, %v5333
        %v5335 = vpop.f32.mrb[0].mxu0
        %v5336 = vadd.f32 %v5243, %v5335
        %v5337 = vpop.f32.mrb[0].mxu0
        %v5338 = vadd.f32 %v5245, %v5337
        %5339 = vmatprep.mubr.bf16.mxu0 %v3803
        %5340 = vmatmul.mubr.bf16.gmra.mrb[0].mxu0 %v3802
        %v5341 = vpop.f32.mrb[0].mxu0
        %v5342 = vadd.f32 %v5249, %v5341
        %v5343 = vpop.f32.mrb[0].mxu0
        %v5344 = vadd.f32 %v5251, %v5343
        %v5345 = vpop.f32.mrb[0].mxu0
        %v5346 = vadd.f32 %v5253, %v5345
        %v5347 = vpop.f32.mrb[0].mxu0
        %v5348 = vadd.f32 %v5255, %v5347
        %5349 = vmatprep.mubr.bf16.mxu0 %v3809
        %5350 = vmatmul.mubr.bf16.gmra.mrb[0].mxu0 %v3808
        %v5351 = vpop.f32.mrb[0].mxu0
        %v5352 = vadd.f32 %v5259, %v5351
        %v5353 = vpop.f32.mrb[0].mxu0
        %v5354 = vadd.f32 %v5261, %v5353
        %v5355 = vpop.f32.mrb[0].mxu0
        %v5356 = vadd.f32 %v5263, %v5355
        %v5357 = vpop.f32.mrb[0].mxu0
        %v5358 = vadd.f32 %v5265, %v5357
        %5359 = vmatprep.mubr.bf16.mxu0 %v3815
        %5360 = vmatmul.mubr.bf16.gmra.mrb[0].mxu0 %v3814
        %v5361 = vpop.f32.mrb[0].mxu0
        %v5362 = vadd.f32 %v5269, %v5361
        %v5363 = vpop.f32.mrb[0].mxu0
        %v5364 = vadd.f32 %v5271, %v5363
        %v5365 = vpop.f32.mrb[0].mxu0
        %v5366 = vadd.f32 %v5273, %v5365
        %v5367 = vpop.f32.mrb[0].mxu0
        %v5368 = vadd.f32 %v5275, %v5367
        %5369 = vdwg.mxu0
        %v5370 = vmax.f32 %v5033, %v5035
        %v5371 = vmax.f32 %v5370, %v5312
        %v5372 = vmax.f32 %v5371, %v5314
        %5373 = vmax.xlane.f32.xlu0 %v5372
        %v5374 = vpop.xlane.xlu0 %5373
        %v5375 = vmax.f32 %v5037, %v5039
        %v5376 = vmax.f32 %v5375, %v5316
        %v5377 = vmax.f32 %v5376, %v5318
        %5378 = vmax.xlane.f32.xlu0 %v5377
        %v5379 = vpop.xlane.xlu0 %5378
        %v5380 = vmax.f32 %v5043, %v5045
        %v5381 = vmax.f32 %v5380, %v5322
        %v5382 = vmax.f32 %v5381, %v5324
        %5383 = vmax.xlane.f32.xlu0 %v5382
        %v5384 = vpop.xlane.xlu0 %5383
        %v5385 = vmax.f32 %v5047, %v5049
        %v5386 = vmax.f32 %v5385, %v5326
        %v5387 = vmax.f32 %v5386, %v5328
        %5388 = vmax.xlane.f32.xlu0 %v5387
        %v5389 = vpop.xlane.xlu0 %5388
        %v5390 = vmax.f32 %v5053, %v5055
        %v5391 = vmax.f32 %v5390, %v5332
        %v5392 = vmax.f32 %v5391, %v5334
        %5393 = vmax.xlane.f32.xlu0 %v5392
        %v5394 = vpop.xlane.xlu0 %5393
        %v5395 = vmax.f32 %v5057, %v5059
        %v5396 = vmax.f32 %v5395, %v5336
        %v5397 = vmax.f32 %v5396, %v5338
        %5398 = vmax.xlane.f32.xlu0 %v5397
        %v5399 = vpop.xlane.xlu0 %5398
        %v5400 = vmax.f32 %v5063, %v5065
        %v5401 = vmax.f32 %v5400, %v5342
        %v5402 = vmax.f32 %v5401, %v5344
        %5403 = vmax.xlane.f32.xlu0 %v5402
        %v5404 = vpop.xlane.xlu0 %5403
        %v5405 = vmax.f32 %v5067, %v5069
        %v5406 = vmax.f32 %v5405, %v5346
        %v5407 = vmax.f32 %v5406, %v5348
        %5408 = vmax.xlane.f32.xlu0 %v5407
        %v5409 = vpop.xlane.xlu0 %5408
        %v5410 = vmax.f32 %v5073, %v5075
        %v5411 = vmax.f32 %v5410, %v5352
        %v5412 = vmax.f32 %v5411, %v5354
        %5413 = vmax.xlane.f32.xlu0 %v5412
        %v5414 = vpop.xlane.xlu0 %5413
        %v5415 = vmax.f32 %v5077, %v5079
        %v5416 = vmax.f32 %v5415, %v5356
        %v5417 = vmax.f32 %v5416, %v5358
        %5418 = vmax.xlane.f32.xlu0 %v5417
        %v5419 = vpop.xlane.xlu0 %5418
        %v5420 = vmax.f32 %v5083, %v5085
        %v5421 = vmax.f32 %v5420, %v5362
        %v5422 = vmax.f32 %v5421, %v5364
        %5423 = vmax.xlane.f32.xlu0 %v5422
        %v5424 = vpop.xlane.xlu0 %5423
        %v5425 = vmax.f32 %v5087, %v5089
        %v5426 = vmax.f32 %v5425, %v5366
        %v5427 = vmax.f32 %v5426, %v5368
        %5428 = vmax.xlane.f32.xlu0 %v5427
        %v5429 = vpop.xlane.xlu0 %5428
        %v5430 = vsub.f32 %v5033, %v5374
        %v5431 = vsub.f32 %v5035, %v5374
        %v5432 = vsub.f32 %v5312, %v5374
        %v5433 = vsub.f32 %v5314, %v5374
        %v5434 = vsub.f32 %v5037, %v5379
        %v5435 = vsub.f32 %v5039, %v5379
        %v5436 = vsub.f32 %v5316, %v5379
        %v5437 = vsub.f32 %v5318, %v5379
        %v5438 = vsub.f32 %v5043, %v5384
        %v5439 = vsub.f32 %v5045, %v5384
        %v5440 = vsub.f32 %v5322, %v5384
        %v5441 = vsub.f32 %v5324, %v5384
        %v5442 = vsub.f32 %v5047, %v5389
        %v5443 = vsub.f32 %v5049, %v5389
        %v5444 = vsub.f32 %v5326, %v5389
        %v5445 = vsub.f32 %v5328, %v5389
        %v5446 = vsub.f32 %v5053, %v5394
        %v5447 = vsub.f32 %v5055, %v5394
        %v5448 = vsub.f32 %v5332, %v5394
        %v5449 = vsub.f32 %v5334, %v5394
        %v5450 = vsub.f32 %v5057, %v5399
        %v5451 = vsub.f32 %v5059, %v5399
        %v5452 = vsub.f32 %v5336, %v5399
        %v5453 = vsub.f32 %v5338, %v5399
        %v5454 = vsub.f32 %v5063, %v5404
        %v5455 = vsub.f32 %v5065, %v5404
        %v5456 = vsub.f32 %v5342, %v5404
        %v5457 = vsub.f32 %v5344, %v5404
        %v5458 = vsub.f32 %v5067, %v5409
        %v5459 = vsub.f32 %v5069, %v5409
        %v5460 = vsub.f32 %v5346, %v5409
        %v5461 = vsub.f32 %v5348, %v5409
        %v5462 = vsub.f32 %v5073, %v5414
        %v5463 = vsub.f32 %v5075, %v5414
        %v5464 = vsub.f32 %v5352, %v5414
        %v5465 = vsub.f32 %v5354, %v5414
        %v5466 = vsub.f32 %v5077, %v5419
        %v5467 = vsub.f32 %v5079, %v5419
        %v5468 = vsub.f32 %v5356, %v5419
        %v5469 = vsub.f32 %v5358, %v5419
        %v5470 = vsub.f32 %v5083, %v5424
        %v5471 = vsub.f32 %v5085, %v5424
        %v5472 = vsub.f32 %v5362, %v5424
        %v5473 = vsub.f32 %v5364, %v5424
        %v5474 = vsub.f32 %v5087, %v5429
        %v5475 = vsub.f32 %v5089, %v5429
        %v5476 = vsub.f32 %v5366, %v5429
        %v5477 = vsub.f32 %v5368, %v5429
        %v5478 = vmul.f32 %v5430, 1.442695
        %v5479 = vpow.pop %v5478
        %v5480 = vmul.f32 %v5431, 1.442695
        %v5481 = vpow.pop %v5480
        %v5482 = vmul.f32 %v5432, 1.442695
        %v5483 = vpow.pop %v5482
        %v5484 = vmul.f32 %v5433, 1.442695
        %v5485 = vpow.pop %v5484
        %v5486 = vmul.f32 %v5434, 1.442695
        %v5487 = vpow.pop %v5486
        %v5488 = vmul.f32 %v5435, 1.442695
        %v5489 = vpow.pop %v5488
        %v5490 = vmul.f32 %v5436, 1.442695
        %v5491 = vpow.pop %v5490
        %v5492 = vmul.f32 %v5437, 1.442695
        %v5493 = vpow.pop %v5492
        %v5494 = vmul.f32 %v5438, 1.442695
        %v5495 = vpow.pop %v5494
        %v5496 = vmul.f32 %v5439, 1.442695
        %v5497 = vpow.pop %v5496
        %v5498 = vmul.f32 %v5440, 1.442695
        %v5499 = vpow.pop %v5498
        %v5500 = vmul.f32 %v5441, 1.442695
        %v5501 = vpow.pop %v5500
        %v5502 = vmul.f32 %v5442, 1.442695
        %v5503 = vpow.pop %v5502
        %v5504 = vmul.f32 %v5443, 1.442695
        %v5505 = vpow.pop %v5504
        %v5506 = vmul.f32 %v5444, 1.442695
        %v5507 = vpow.pop %v5506
        %v5508 = vmul.f32 %v5445, 1.442695
        %v5509 = vpow.pop %v5508
        %v5510 = vmul.f32 %v5446, 1.442695
        %v5511 = vpow.pop %v5510
        %v5512 = vmul.f32 %v5447, 1.442695
        %v5513 = vpow.pop %v5512
        %v5514 = vmul.f32 %v5448, 1.442695
        %v5515 = vpow.pop %v5514
        %v5516 = vmul.f32 %v5449, 1.442695
        %v5517 = vpow.pop %v5516
        %v5518 = vmul.f32 %v5450, 1.442695
        %v5519 = vpow.pop %v5518
        %v5520 = vmul.f32 %v5451, 1.442695
        %v5521 = vpow.pop %v5520
        %v5522 = vmul.f32 %v5452, 1.442695
        %v5523 = vpow.pop %v5522
        %v5524 = vmul.f32 %v5453, 1.442695
        %v5525 = vpow.pop %v5524
        %v5526 = vmul.f32 %v5454, 1.442695
        %v5527 = vpow.pop %v5526
        %v5528 = vmul.f32 %v5455, 1.442695
        %v5529 = vpow.pop %v5528
        %v5530 = vmul.f32 %v5456, 1.442695
        %v5531 = vpow.pop %v5530
        %v5532 = vmul.f32 %v5457, 1.442695
        %v5533 = vpow.pop %v5532
        %v5534 = vmul.f32 %v5458, 1.442695
        %v5535 = vpow.pop %v5534
        %v5536 = vmul.f32 %v5459, 1.442695
        %v5537 = vpow.pop %v5536
        %v5538 = vmul.f32 %v5460, 1.442695
        %v5539 = vpow.pop %v5538
        %v5540 = vmul.f32 %v5461, 1.442695
        %v5541 = vpow.pop %v5540
        %v5542 = vmul.f32 %v5462, 1.442695
        %v5543 = vpow.pop %v5542
        %v5544 = vmul.f32 %v5463, 1.442695
        %v5545 = vpow.pop %v5544
        %v5546 = vmul.f32 %v5464, 1.442695
        %v5547 = vpow.pop %v5546
        %v5548 = vmul.f32 %v5465, 1.442695
        %v5549 = vpow.pop %v5548
        %v5550 = vmul.f32 %v5466, 1.442695
        %v5551 = vpow.pop %v5550
        %v5552 = vmul.f32 %v5467, 1.442695
        %v5553 = vpow.pop %v5552
        %v5554 = vmul.f32 %v5468, 1.442695
        %v5555 = vpow.pop %v5554
        %v5556 = vmul.f32 %v5469, 1.442695
        %v5557 = vpow.pop %v5556
        %v5558 = vmul.f32 %v5470, 1.442695
        %v5559 = vpow.pop %v5558
        %v5560 = vmul.f32 %v5471, 1.442695
        %v5561 = vpow.pop %v5560
        %v5562 = vmul.f32 %v5472, 1.442695
        %v5563 = vpow.pop %v5562
        %v5564 = vmul.f32 %v5473, 1.442695
        %v5565 = vpow.pop %v5564
        %v5566 = vmul.f32 %v5474, 1.442695
        %v5567 = vpow.pop %v5566
        %v5568 = vmul.f32 %v5475, 1.442695
        %v5569 = vpow.pop %v5568
        %v5570 = vmul.f32 %v5476, 1.442695
        %v5571 = vpow.pop %v5570
        %v5572 = vmul.f32 %v5477, 1.442695
        %v5573 = vpow.pop %v5572
        %v5574 = vadd.f32 %v5479, %v5481
        %v5575 = vadd.f32 %v5574, %v5483
        %v5576 = vadd.f32 %v5575, %v5485
        %5577 = vadd.xlane.f32.xlu0 %v5576
        %v5578 = vpop.xlane.xlu0 %5577
        %v5579 = vadd.f32 %v5487, %v5489
        %v5580 = vadd.f32 %v5579, %v5491
        %v5581 = vadd.f32 %v5580, %v5493
        %5582 = vadd.xlane.f32.xlu0 %v5581
        %v5583 = vpop.xlane.xlu0 %5582
        %v5584 = vadd.f32 %v5495, %v5497
        %v5585 = vadd.f32 %v5584, %v5499
        %v5586 = vadd.f32 %v5585, %v5501
        %5587 = vadd.xlane.f32.xlu0 %v5586
        %v5588 = vpop.xlane.xlu0 %5587
        %v5589 = vadd.f32 %v5503, %v5505
        %v5590 = vadd.f32 %v5589, %v5507
        %v5591 = vadd.f32 %v5590, %v5509
        %5592 = vadd.xlane.f32.xlu0 %v5591
        %v5593 = vpop.xlane.xlu0 %5592
        %v5594 = vadd.f32 %v5511, %v5513
        %v5595 = vadd.f32 %v5594, %v5515
        %v5596 = vadd.f32 %v5595, %v5517
        %5597 = vadd.xlane.f32.xlu0 %v5596
        %v5598 = vpop.xlane.xlu0 %5597
        %v5599 = vadd.f32 %v5519, %v5521
        %v5600 = vadd.f32 %v5599, %v5523
        %v5601 = vadd.f32 %v5600, %v5525
        %5602 = vadd.xlane.f32.xlu0 %v5601
        %v5603 = vpop.xlane.xlu0 %5602
        %v5604 = vadd.f32 %v5527, %v5529
        %v5605 = vadd.f32 %v5604, %v5531
        %v5606 = vadd.f32 %v5605, %v5533
        %5607 = vadd.xlane.f32.xlu0 %v5606
        %v5608 = vpop.xlane.xlu0 %5607
        %v5609 = vadd.f32 %v5535, %v5537
        %v5610 = vadd.f32 %v5609, %v5539
        %v5611 = vadd.f32 %v5610, %v5541
        %5612 = vadd.xlane.f32.xlu0 %v5611
        %v5613 = vpop.xlane.xlu0 %5612
        %v5614 = vadd.f32 %v5543, %v5545
        %v5615 = vadd.f32 %v5614, %v5547
        %v5616 = vadd.f32 %v5615, %v5549
        %5617 = vadd.xlane.f32.xlu0 %v5616
        %v5618 = vpop.xlane.xlu0 %5617
        %v5619 = vadd.f32 %v5551, %v5553
        %v5620 = vadd.f32 %v5619, %v5555
        %v5621 = vadd.f32 %v5620, %v5557
        %5622 = vadd.xlane.f32.xlu0 %v5621
        %v5623 = vpop.xlane.xlu0 %5622
        %v5624 = vadd.f32 %v5559, %v5561
        %v5625 = vadd.f32 %v5624, %v5563
        %v5626 = vadd.f32 %v5625, %v5565
        %5627 = vadd.xlane.f32.xlu0 %v5626
        %v5628 = vpop.xlane.xlu0 %5627
        %v5629 = vadd.f32 %v5567, %v5569
        %v5630 = vadd.f32 %v5629, %v5571
        %v5631 = vadd.f32 %v5630, %v5573
        %5632 = vadd.xlane.f32.xlu0 %v5631
        %v5633 = vpop.xlane.xlu0 %5632
        %v5634 = vrcp.pop %v5578
        %v5635 = vrcp.pop %v5583
        %v5636 = vrcp.pop %v5588
        %v5637 = vrcp.pop %v5593
        %v5638 = vrcp.pop %v5598
        %v5639 = vrcp.pop %v5603
        %v5640 = vrcp.pop %v5608
        %v5641 = vrcp.pop %v5613
        %v5642 = vrcp.pop %v5618
        %v5643 = vrcp.pop %v5623
        %v5644 = vrcp.pop %v5628
        %v5645 = vrcp.pop %v5633
        %v5646 = vmul.f32 %v5479, %v5634
        %v5647 = vmul.f32 %v5481, %v5634
        %v5648 = vmul.f32 %v5483, %v5634
        %v5649 = vmul.f32 %v5485, %v5634
        %v5650 = vmul.f32 %v5487, %v5635
        %v5651 = vmul.f32 %v5489, %v5635
        %v5652 = vmul.f32 %v5491, %v5635
        %v5653 = vmul.f32 %v5493, %v5635
        %v5654 = vmul.f32 %v5495, %v5636
        %v5655 = vmul.f32 %v5497, %v5636
        %v5656 = vmul.f32 %v5499, %v5636
        %v5657 = vmul.f32 %v5501, %v5636
        %v5658 = vmul.f32 %v5503, %v5637
        %v5659 = vmul.f32 %v5505, %v5637
        %v5660 = vmul.f32 %v5507, %v5637
        %v5661 = vmul.f32 %v5509, %v5637
        %v5662 = vmul.f32 %v5511, %v5638
        %v5663 = vmul.f32 %v5513, %v5638
        %v5664 = vmul.f32 %v5515, %v5638
        %v5665 = vmul.f32 %v5517, %v5638
        %v5666 = vmul.f32 %v5519, %v5639
        %v5667 = vmul.f32 %v5521, %v5639
        %v5668 = vmul.f32 %v5523, %v5639
        %v5669 = vmul.f32 %v5525, %v5639
        %v5670 = vmul.f32 %v5527, %v5640
        %v5671 = vmul.f32 %v5529, %v5640
        %v5672 = vmul.f32 %v5531, %v5640
        %v5673 = vmul.f32 %v5533, %v5640
        %v5674 = vmul.f32 %v5535, %v5641
        %v5675 = vmul.f32 %v5537, %v5641
        %v5676 = vmul.f32 %v5539, %v5641
        %v5677 = vmul.f32 %v5541, %v5641
        %v5678 = vmul.f32 %v5543, %v5642
        %v5679 = vmul.f32 %v5545, %v5642
        %v5680 = vmul.f32 %v5547, %v5642
        %v5681 = vmul.f32 %v5549, %v5642
        %v5682 = vmul.f32 %v5551, %v5643
        %v5683 = vmul.f32 %v5553, %v5643
        %v5684 = vmul.f32 %v5555, %v5643
        %v5685 = vmul.f32 %v5557, %v5643
        %v5686 = vmul.f32 %v5559, %v5644
        %v5687 = vmul.f32 %v5561, %v5644
        %v5688 = vmul.f32 %v5563, %v5644
        %v5689 = vmul.f32 %v5565, %v5644
        %v5690 = vmul.f32 %v5567, %v5645
        %v5691 = vmul.f32 %v5569, %v5645
        %v5692 = vmul.f32 %v5571, %v5645
        %v5693 = vmul.f32 %v5573, %v5645
        %v5694 = vrot.slane %v5646, 4
        %v5695 = vadd.f32 %v5646, %v5694
        %v5696 = vrot.slane %v5695, 2
        %v5697 = vadd.f32 %v5695, %v5696
        %v5698 = vrot.slane %v5697, 1
        %v5699 = vadd.f32 %v5697, %v5698
        %v5700 = vrot.slane %v5647, 4
        %v5701 = vadd.f32 %v5647, %v5700
        %v5702 = vrot.slane %v5701, 2
        %v5703 = vadd.f32 %v5701, %v5702
        %v5704 = vrot.slane %v5703, 1
        %v5705 = vadd.f32 %v5703, %v5704
        %v5706 = vrot.slane %v5648, 4
        %v5707 = vadd.f32 %v5648, %v5706
        %v5708 = vrot.slane %v5707, 2
        %v5709 = vadd.f32 %v5707, %v5708
        %v5710 = vrot.slane %v5709, 1
        %v5711 = vadd.f32 %v5709, %v5710
        %v5712 = vrot.slane %v5649, 4
        %v5713 = vadd.f32 %v5649, %v5712
        %v5714 = vrot.slane %v5713, 2
        %v5715 = vadd.f32 %v5713, %v5714
        %v5716 = vrot.slane %v5715, 1
        %v5717 = vadd.f32 %v5715, %v5716
        %v5718 = vrot.slane %v5650, 4
        %v5719 = vadd.f32 %v5650, %v5718
        %v5720 = vrot.slane %v5719, 2
        %v5721 = vadd.f32 %v5719, %v5720
        %v5722 = vrot.slane %v5721, 1
        %v5723 = vadd.f32 %v5721, %v5722
        %v5724 = vrot.slane %v5651, 4
        %v5725 = vadd.f32 %v5651, %v5724
        %v5726 = vrot.slane %v5725, 2
        %v5727 = vadd.f32 %v5725, %v5726
        %v5728 = vrot.slane %v5727, 1
        %v5729 = vadd.f32 %v5727, %v5728
        %v5730 = vrot.slane %v5652, 4
        %v5731 = vadd.f32 %v5652, %v5730
        %v5732 = vrot.slane %v5731, 2
        %v5733 = vadd.f32 %v5731, %v5732
        %v5734 = vrot.slane %v5733, 1
        %v5735 = vadd.f32 %v5733, %v5734
        %v5736 = vrot.slane %v5653, 4
        %v5737 = vadd.f32 %v5653, %v5736
        %v5738 = vrot.slane %v5737, 2
        %v5739 = vadd.f32 %v5737, %v5738
        %v5740 = vrot.slane %v5739, 1
        %v5741 = vadd.f32 %v5739, %v5740
        %v5742 = vrot.slane %v5654, 4
        %v5743 = vadd.f32 %v5654, %v5742
        %v5744 = vrot.slane %v5743, 2
        %v5745 = vadd.f32 %v5743, %v5744
        %v5746 = vrot.slane %v5745, 1
        %v5747 = vadd.f32 %v5745, %v5746
        %v5748 = vrot.slane %v5655, 4
        %v5749 = vadd.f32 %v5655, %v5748
        %v5750 = vrot.slane %v5749, 2
        %v5751 = vadd.f32 %v5749, %v5750
        %v5752 = vrot.slane %v5751, 1
        %v5753 = vadd.f32 %v5751, %v5752
        %v5754 = vrot.slane %v5656, 4
        %v5755 = vadd.f32 %v5656, %v5754
        %v5756 = vrot.slane %v5755, 2
        %v5757 = vadd.f32 %v5755, %v5756
        %v5758 = vrot.slane %v5757, 1
        %v5759 = vadd.f32 %v5757, %v5758
        %v5760 = vrot.slane %v5657, 4
        %v5761 = vadd.f32 %v5657, %v5760
        %v5762 = vrot.slane %v5761, 2
        %v5763 = vadd.f32 %v5761, %v5762
        %v5764 = vrot.slane %v5763, 1
        %v5765 = vadd.f32 %v5763, %v5764
        %v5766 = vrot.slane %v5658, 4
        %v5767 = vadd.f32 %v5658, %v5766
        %v5768 = vrot.slane %v5767, 2
        %v5769 = vadd.f32 %v5767, %v5768
        %v5770 = vrot.slane %v5769, 1
        %v5771 = vadd.f32 %v5769, %v5770
        %v5772 = vrot.slane %v5659, 4
        %v5773 = vadd.f32 %v5659, %v5772
        %v5774 = vrot.slane %v5773, 2
        %v5775 = vadd.f32 %v5773, %v5774
        %v5776 = vrot.slane %v5775, 1
        %v5777 = vadd.f32 %v5775, %v5776
        %v5778 = vrot.slane %v5660, 4
        %v5779 = vadd.f32 %v5660, %v5778
        %v5780 = vrot.slane %v5779, 2
        %v5781 = vadd.f32 %v5779, %v5780
        %v5782 = vrot.slane %v5781, 1
        %v5783 = vadd.f32 %v5781, %v5782
        %v5784 = vrot.slane %v5661, 4
        %v5785 = vadd.f32 %v5661, %v5784
        %v5786 = vrot.slane %v5785, 2
        %v5787 = vadd.f32 %v5785, %v5786
        %v5788 = vrot.slane %v5787, 1
        %v5789 = vadd.f32 %v5787, %v5788
        %v5790 = vrot.slane %v5662, 4
        %v5791 = vadd.f32 %v5662, %v5790
        %v5792 = vrot.slane %v5791, 2
        %v5793 = vadd.f32 %v5791, %v5792
        %v5794 = vrot.slane %v5793, 1
        %v5795 = vadd.f32 %v5793, %v5794
        %v5796 = vrot.slane %v5663, 4
        %v5797 = vadd.f32 %v5663, %v5796
        %v5798 = vrot.slane %v5797, 2
        %v5799 = vadd.f32 %v5797, %v5798
        %v5800 = vrot.slane %v5799, 1
        %v5801 = vadd.f32 %v5799, %v5800
        %v5802 = vrot.slane %v5664, 4
        %v5803 = vadd.f32 %v5664, %v5802
        %v5804 = vrot.slane %v5803, 2
        %v5805 = vadd.f32 %v5803, %v5804
        %v5806 = vrot.slane %v5805, 1
        %v5807 = vadd.f32 %v5805, %v5806
        %v5808 = vrot.slane %v5665, 4
        %v5809 = vadd.f32 %v5665, %v5808
        %v5810 = vrot.slane %v5809, 2
        %v5811 = vadd.f32 %v5809, %v5810
        %v5812 = vrot.slane %v5811, 1
        %v5813 = vadd.f32 %v5811, %v5812
        %v5814 = vrot.slane %v5666, 4
        %v5815 = vadd.f32 %v5666, %v5814
        %v5816 = vrot.slane %v5815, 2
        %v5817 = vadd.f32 %v5815, %v5816
        %v5818 = vrot.slane %v5817, 1
        %v5819 = vadd.f32 %v5817, %v5818
        %v5820 = vrot.slane %v5667, 4
        %v5821 = vadd.f32 %v5667, %v5820
        %v5822 = vrot.slane %v5821, 2
        %v5823 = vadd.f32 %v5821, %v5822
        %v5824 = vrot.slane %v5823, 1
        %v5825 = vadd.f32 %v5823, %v5824
        %v5826 = vrot.slane %v5668, 4
        %v5827 = vadd.f32 %v5668, %v5826
        %v5828 = vrot.slane %v5827, 2
        %v5829 = vadd.f32 %v5827, %v5828
        %v5830 = vrot.slane %v5829, 1
        %v5831 = vadd.f32 %v5829, %v5830
        %v5832 = vrot.slane %v5669, 4
        %v5833 = vadd.f32 %v5669, %v5832
        %v5834 = vrot.slane %v5833, 2
        %v5835 = vadd.f32 %v5833, %v5834
        %v5836 = vrot.slane %v5835, 1
        %v5837 = vadd.f32 %v5835, %v5836
        %v5838 = vrot.slane %v5670, 4
        %v5839 = vadd.f32 %v5670, %v5838
        %v5840 = vrot.slane %v5839, 2
        %v5841 = vadd.f32 %v5839, %v5840
        %v5842 = vrot.slane %v5841, 1
        %v5843 = vadd.f32 %v5841, %v5842
        %v5844 = vrot.slane %v5671, 4
        %v5845 = vadd.f32 %v5671, %v5844
        %v5846 = vrot.slane %v5845, 2
        %v5847 = vadd.f32 %v5845, %v5846
        %v5848 = vrot.slane %v5847, 1
        %v5849 = vadd.f32 %v5847, %v5848
        %v5850 = vrot.slane %v5672, 4
        %v5851 = vadd.f32 %v5672, %v5850
        %v5852 = vrot.slane %v5851, 2
        %v5853 = vadd.f32 %v5851, %v5852
        %v5854 = vrot.slane %v5853, 1
        %v5855 = vadd.f32 %v5853, %v5854
        %v5856 = vrot.slane %v5673, 4
        %v5857 = vadd.f32 %v5673, %v5856
        %v5858 = vrot.slane %v5857, 2
        %v5859 = vadd.f32 %v5857, %v5858
        %v5860 = vrot.slane %v5859, 1
        %v5861 = vadd.f32 %v5859, %v5860
        %v5862 = vrot.slane %v5674, 4
        %v5863 = vadd.f32 %v5674, %v5862
        %v5864 = vrot.slane %v5863, 2
        %v5865 = vadd.f32 %v5863, %v5864
        %v5866 = vrot.slane %v5865, 1
        %v5867 = vadd.f32 %v5865, %v5866
        %v5868 = vrot.slane %v5675, 4
        %v5869 = vadd.f32 %v5675, %v5868
        %v5870 = vrot.slane %v5869, 2
        %v5871 = vadd.f32 %v5869, %v5870
        %v5872 = vrot.slane %v5871, 1
        %v5873 = vadd.f32 %v5871, %v5872
        %v5874 = vrot.slane %v5676, 4
        %v5875 = vadd.f32 %v5676, %v5874
        %v5876 = vrot.slane %v5875, 2
        %v5877 = vadd.f32 %v5875, %v5876
        %v5878 = vrot.slane %v5877, 1
        %v5879 = vadd.f32 %v5877, %v5878
        %v5880 = vrot.slane %v5677, 4
        %v5881 = vadd.f32 %v5677, %v5880
        %v5882 = vrot.slane %v5881, 2
        %v5883 = vadd.f32 %v5881, %v5882
        %v5884 = vrot.slane %v5883, 1
        %v5885 = vadd.f32 %v5883, %v5884
        %v5886 = vrot.slane %v5678, 4
        %v5887 = vadd.f32 %v5678, %v5886
        %v5888 = vrot.slane %v5887, 2
        %v5889 = vadd.f32 %v5887, %v5888
        %v5890 = vrot.slane %v5889, 1
        %v5891 = vadd.f32 %v5889, %v5890
        %v5892 = vrot.slane %v5679, 4
        %v5893 = vadd.f32 %v5679, %v5892
        %v5894 = vrot.slane %v5893, 2
        %v5895 = vadd.f32 %v5893, %v5894
        %v5896 = vrot.slane %v5895, 1
        %v5897 = vadd.f32 %v5895, %v5896
        %v5898 = vrot.slane %v5680, 4
        %v5899 = vadd.f32 %v5680, %v5898
        %v5900 = vrot.slane %v5899, 2
        %v5901 = vadd.f32 %v5899, %v5900
        %v5902 = vrot.slane %v5901, 1
        %v5903 = vadd.f32 %v5901, %v5902
        %v5904 = vrot.slane %v5681, 4
        %v5905 = vadd.f32 %v5681, %v5904
        %v5906 = vrot.slane %v5905, 2
        %v5907 = vadd.f32 %v5905, %v5906
        %v5908 = vrot.slane %v5907, 1
        %v5909 = vadd.f32 %v5907, %v5908
        %v5910 = vrot.slane %v5682, 4
        %v5911 = vadd.f32 %v5682, %v5910
        %v5912 = vrot.slane %v5911, 2
        %v5913 = vadd.f32 %v5911, %v5912
        %v5914 = vrot.slane %v5913, 1
        %v5915 = vadd.f32 %v5913, %v5914
        %v5916 = vrot.slane %v5683, 4
        %v5917 = vadd.f32 %v5683, %v5916
        %v5918 = vrot.slane %v5917, 2
        %v5919 = vadd.f32 %v5917, %v5918
        %v5920 = vrot.slane %v5919, 1
        %v5921 = vadd.f32 %v5919, %v5920
        %v5922 = vrot.slane %v5684, 4
        %v5923 = vadd.f32 %v5684, %v5922
        %v5924 = vrot.slane %v5923, 2
        %v5925 = vadd.f32 %v5923, %v5924
        %v5926 = vrot.slane %v5925, 1
        %v5927 = vadd.f32 %v5925, %v5926
        %v5928 = vrot.slane %v5685, 4
        %v5929 = vadd.f32 %v5685, %v5928
        %v5930 = vrot.slane %v5929, 2
        %v5931 = vadd.f32 %v5929, %v5930
        %v5932 = vrot.slane %v5931, 1
        %v5933 = vadd.f32 %v5931, %v5932
        %v5934 = vrot.slane %v5686, 4
        %v5935 = vadd.f32 %v5686, %v5934
        %v5936 = vrot.slane %v5935, 2
        %v5937 = vadd.f32 %v5935, %v5936
        %v5938 = vrot.slane %v5937, 1
        %v5939 = vadd.f32 %v5937, %v5938
        %v5940 = vrot.slane %v5687, 4
        %v5941 = vadd.f32 %v5687, %v5940
        %v5942 = vrot.slane %v5941, 2
        %v5943 = vadd.f32 %v5941, %v5942
        %v5944 = vrot.slane %v5943, 1
        %v5945 = vadd.f32 %v5943, %v5944
        %v5946 = vrot.slane %v5688, 4
        %v5947 = vadd.f32 %v5688, %v5946
        %v5948 = vrot.slane %v5947, 2
        %v5949 = vadd.f32 %v5947, %v5948
        %v5950 = vrot.slane %v5949, 1
        %v5951 = vadd.f32 %v5949, %v5950
        %v5952 = vrot.slane %v5689, 4
        %v5953 = vadd.f32 %v5689, %v5952
        %v5954 = vrot.slane %v5953, 2
        %v5955 = vadd.f32 %v5953, %v5954
        %v5956 = vrot.slane %v5955, 1
        %v5957 = vadd.f32 %v5955, %v5956
        %v5958 = vrot.slane %v5690, 4
        %v5959 = vadd.f32 %v5690, %v5958
        %v5960 = vrot.slane %v5959, 2
        %v5961 = vadd.f32 %v5959, %v5960
        %v5962 = vrot.slane %v5961, 1
        %v5963 = vadd.f32 %v5961, %v5962
        %v5964 = vrot.slane %v5691, 4
        %v5965 = vadd.f32 %v5691, %v5964
        %v5966 = vrot.slane %v5965, 2
        %v5967 = vadd.f32 %v5965, %v5966
        %v5968 = vrot.slane %v5967, 1
        %v5969 = vadd.f32 %v5967, %v5968
        %v5970 = vrot.slane %v5692, 4
        %v5971 = vadd.f32 %v5692, %v5970
        %v5972 = vrot.slane %v5971, 2
        %v5973 = vadd.f32 %v5971, %v5972
        %v5974 = vrot.slane %v5973, 1
        %v5975 = vadd.f32 %v5973, %v5974
        %v5976 = vrot.slane %v5693, 4
        %v5977 = vadd.f32 %v5693, %v5976
        %v5978 = vrot.slane %v5977, 2
        %v5979 = vadd.f32 %v5977, %v5978
        %v5980 = vrot.slane %v5979, 1
        %v5981 = vadd.f32 %v5979, %v5980
        %5982 = vmatprep.subr.bf16.mxu0 %v4429
        %5983 = vmatpush1.bf16.msra.mxu0 %v4428
        %5984 = vmatprep.subr.bf16.mxu0 %v4433
        %5985 = vmatpush1.bf16.msra.mxu0 %v4432
        %5986 = vmatprep.subr.bf16.mxu0 %v4437
        %5987 = vmatpush1.bf16.msra.mxu0 %v4436
        %5988 = vmatprep.subr.bf16.mxu0 %v4441
        %5989 = vmatpush1.bf16.msra.mxu0 %v4440
        %5990 = vmatprep.subr.bf16.mxu0 %v4445
        %5991 = vmatpush1.bf16.msra.mxu0 %v4444
        %5992 = vmatprep.subr.bf16.mxu0 %v4449
        %5993 = vmatpush1.bf16.msra.mxu0 %v4448
        %5994 = vmatprep.subr.bf16.mxu0 %v4453
        %5995 = vmatpush1.bf16.msra.mxu0 %v4452
        %5996 = vmatprep.subr.bf16.mxu0 %v4457
        %5997 = vmatpush1.bf16.msra.mxu0 %v4456
        %5998 = vmatprep.subr.bf16.mxu0 %v4461
        %5999 = vmatpush1.bf16.msra.mxu0 %v4460
        %6000 = vmatprep.subr.bf16.mxu0 %v4465
        %6001 = vmatpush1.bf16.msra.mxu0 %v4464
        %6002 = vmatprep.subr.bf16.mxu0 %v4469
        %6003 = vmatpush1.bf16.msra.mxu0 %v4468
        %6004 = vmatprep.subr.bf16.mxu0 %v4473
        %6005 = vmatpush1.bf16.msra.mxu0 %v4472
        %6006 = vmatprep.subr.bf16.mxu0 %v4477
        %6007 = vmatpush1.bf16.msra.mxu0 %v4476
        %6008 = vmatprep.subr.bf16.mxu0 %v4481
        %6009 = vmatpush1.bf16.msra.mxu0 %v4480
        %6010 = vmatprep.subr.bf16.mxu0 %v4485
        %6011 = vmatpush1.bf16.msra.mxu0 %v4484
        %6012 = vmatprep.subr.bf16.mxu0 %v4489
        %6013 = vmatpush1.bf16.msra.mxu0 %v4488
        %6014 = vmatprep.mubr.bf16.mxu0 %v2853
        %6015 = vmatmul.mubr.bf16.gmra.mrb[0].mxu0 %v2852
        %v6016 = vpop.f32.mrb[0].mxu0
        %v6017 = vadd.f32 0.0, %v6016
        %v6018 = vpop.f32.mrb[0].mxu0
        %v6019 = vadd.f32 0.0, %v6018
        %v6020 = vpop.f32.mrb[0].mxu0
        %v6021 = vadd.f32 0.0, %v6020
        %v6022 = vpop.f32.mrb[0].mxu0
        %v6023 = vadd.f32 0.0, %v6022
        %6024 = vdwg.mxu0
        %6025 = vmatprep.subr.bf16.mxu0 %v4493
        %6026 = vmatpush1.bf16.msra.mxu0 %v4492
        %6027 = vmatprep.subr.bf16.mxu0 %v4497
        %6028 = vmatpush1.bf16.msra.mxu0 %v4496
        %6029 = vmatprep.subr.bf16.mxu0 %v4501
        %6030 = vmatpush1.bf16.msra.mxu0 %v4500
        %6031 = vmatprep.subr.bf16.mxu0 %v4505
        %6032 = vmatpush1.bf16.msra.mxu0 %v4504
        %6033 = vmatprep.subr.bf16.mxu0 %v4509
        %6034 = vmatpush1.bf16.msra.mxu0 %v4508
        %6035 = vmatprep.subr.bf16.mxu0 %v4513
        %6036 = vmatpush1.bf16.msra.mxu0 %v4512
        %6037 = vmatprep.subr.bf16.mxu0 %v4517
        %6038 = vmatpush1.bf16.msra.mxu0 %v4516
        %6039 = vmatprep.subr.bf16.mxu0 %v4521
        %6040 = vmatpush1.bf16.msra.mxu0 %v4520
        %6041 = vmatprep.subr.bf16.mxu0 %v4525
        %6042 = vmatpush1.bf16.msra.mxu0 %v4524
        %6043 = vmatprep.subr.bf16.mxu0 %v4529
        %6044 = vmatpush1.bf16.msra.mxu0 %v4528
        %6045 = vmatprep.subr.bf16.mxu0 %v4533
        %6046 = vmatpush1.bf16.msra.mxu0 %v4532
        %6047 = vmatprep.subr.bf16.mxu0 %v4537
        %6048 = vmatpush1.bf16.msra.mxu0 %v4536
        %6049 = vmatprep.subr.bf16.mxu0 %v4541
        %6050 = vmatpush1.bf16.msra.mxu0 %v4540
        %6051 = vmatprep.subr.bf16.mxu0 %v4545
        %6052 = vmatpush1.bf16.msra.mxu0 %v4544
        %6053 = vmatprep.subr.bf16.mxu0 %v4549
        %6054 = vmatpush1.bf16.msra.mxu0 %v4548
        %6055 = vmatprep.subr.bf16.mxu0 %v4553
        %6056 = vmatpush1.bf16.msra.mxu0 %v4552
        %6057 = vmatprep.mubr.bf16.mxu0 %v2855
        %6058 = vmatmul.mubr.bf16.gmra.mrb[0].mxu0 %v2854
        %v6059 = vpop.f32.mrb[0].mxu0
        %v6060 = vadd.f32 %v6017, %v6059
        %v6061 = vpop.f32.mrb[0].mxu0
        %v6062 = vadd.f32 %v6019, %v6061
        %v6063 = vpop.f32.mrb[0].mxu0
        %v6064 = vadd.f32 %v6021, %v6063
        %v6065 = vpop.f32.mrb[0].mxu0
        %v6066 = vadd.f32 %v6023, %v6065
        %6067 = vdwg.mxu0
        %6068 = vmatprep.subr.bf16.mxu0 %v4557
        %6069 = vmatpush1.bf16.msra.mxu0 %v4556
        %6070 = vmatprep.subr.bf16.mxu0 %v4561
        %6071 = vmatpush1.bf16.msra.mxu0 %v4560
        %6072 = vmatprep.subr.bf16.mxu0 %v4565
        %6073 = vmatpush1.bf16.msra.mxu0 %v4564
        %6074 = vmatprep.subr.bf16.mxu0 %v4569
        %6075 = vmatpush1.bf16.msra.mxu0 %v4568
        %6076 = vmatprep.subr.bf16.mxu0 %v4573
        %6077 = vmatpush1.bf16.msra.mxu0 %v4572
        %6078 = vmatprep.subr.bf16.mxu0 %v4577
        %6079 = vmatpush1.bf16.msra.mxu0 %v4576
        %6080 = vmatprep.subr.bf16.mxu0 %v4581
        %6081 = vmatpush1.bf16.msra.mxu0 %v4580
        %6082 = vmatprep.subr.bf16.mxu0 %v4585
        %6083 = vmatpush1.bf16.msra.mxu0 %v4584
        %6084 = vmatprep.subr.bf16.mxu0 %v4589
        %6085 = vmatpush1.bf16.msra.mxu0 %v4588
        %6086 = vmatprep.subr.bf16.mxu0 %v4593
        %6087 = vmatpush1.bf16.msra.mxu0 %v4592
        %6088 = vmatprep.subr.bf16.mxu0 %v4597
        %6089 = vmatpush1.bf16.msra.mxu0 %v4596
        %6090 = vmatprep.subr.bf16.mxu0 %v4601
        %6091 = vmatpush1.bf16.msra.mxu0 %v4600
        %6092 = vmatprep.subr.bf16.mxu0 %v4605
        %6093 = vmatpush1.bf16.msra.mxu0 %v4604
        %6094 = vmatprep.subr.bf16.mxu0 %v4609
        %6095 = vmatpush1.bf16.msra.mxu0 %v4608
        %6096 = vmatprep.subr.bf16.mxu0 %v4613
        %6097 = vmatpush1.bf16.msra.mxu0 %v4612
        %6098 = vmatprep.subr.bf16.mxu0 %v4617
        %6099 = vmatpush1.bf16.msra.mxu0 %v4616
        %6100 = vmatprep.mubr.bf16.mxu0 %v2857
        %6101 = vmatmul.mubr.bf16.gmra.mrb[0].mxu0 %v2856
        %v6102 = vpop.f32.mrb[0].mxu0
        %v6103 = vadd.f32 %v6060, %v6102
        %v6104 = vpop.f32.mrb[0].mxu0
        %v6105 = vadd.f32 %v6062, %v6104
        %v6106 = vpop.f32.mrb[0].mxu0
        %v6107 = vadd.f32 %v6064, %v6106
        %v6108 = vpop.f32.mrb[0].mxu0
        %v6109 = vadd.f32 %v6066, %v6108
        %6110 = vdwg.mxu0
        %6111 = vmatprep.subr.bf16.mxu0 %v4431
        %6112 = vmatpush1.bf16.msra.mxu0 %v4430
        %6113 = vmatprep.subr.bf16.mxu0 %v4435
        %6114 = vmatpush1.bf16.msra.mxu0 %v4434
        %6115 = vmatprep.subr.bf16.mxu0 %v4439
        %6116 = vmatpush1.bf16.msra.mxu0 %v4438
        %6117 = vmatprep.subr.bf16.mxu0 %v4443
        %6118 = vmatpush1.bf16.msra.mxu0 %v4442
        %6119 = vmatprep.subr.bf16.mxu0 %v4447
        %6120 = vmatpush1.bf16.msra.mxu0 %v4446
        %6121 = vmatprep.subr.bf16.mxu0 %v4451
        %6122 = vmatpush1.bf16.msra.mxu0 %v4450
        %6123 = vmatprep.subr.bf16.mxu0 %v4455
        %6124 = vmatpush1.bf16.msra.mxu0 %v4454
        %6125 = vmatprep.subr.bf16.mxu0 %v4459
        %6126 = vmatpush1.bf16.msra.mxu0 %v4458
        %6127 = vmatprep.subr.bf16.mxu0 %v4463
        %6128 = vmatpush1.bf16.msra.mxu0 %v4462
        %6129 = vmatprep.subr.bf16.mxu0 %v4467
        %6130 = vmatpush1.bf16.msra.mxu0 %v4466
        %6131 = vmatprep.subr.bf16.mxu0 %v4471
        %6132 = vmatpush1.bf16.msra.mxu0 %v4470
        %6133 = vmatprep.subr.bf16.mxu0 %v4475
        %6134 = vmatpush1.bf16.msra.mxu0 %v4474
        %6135 = vmatprep.subr.bf16.mxu0 %v4479
        %6136 = vmatpush1.bf16.msra.mxu0 %v4478
        %6137 = vmatprep.subr.bf16.mxu0 %v4483
        %6138 = vmatpush1.bf16.msra.mxu0 %v4482
        %6139 = vmatprep.subr.bf16.mxu0 %v4487
        %6140 = vmatpush1.bf16.msra.mxu0 %v4486
        %6141 = vmatprep.subr.bf16.mxu0 %v4491
        %6142 = vmatpush1.bf16.msra.mxu0 %v4490
        %6143 = vmatprep.mubr.bf16.mxu0 %v2853
        %6144 = vmatmul.mubr.bf16.gmra.mrb[0].mxu0 %v2852
        %v6145 = vpop.f32.mrb[0].mxu0
        %v6146 = vadd.f32 0.0, %v6145
        %v6147 = vpop.f32.mrb[0].mxu0
        %v6148 = vadd.f32 0.0, %v6147
        %v6149 = vpop.f32.mrb[0].mxu0
        %v6150 = vadd.f32 0.0, %v6149
        %v6151 = vpop.f32.mrb[0].mxu0
        %v6152 = vadd.f32 0.0, %v6151
        %6153 = vdwg.mxu0
        %6154 = vmatprep.subr.bf16.mxu0 %v4495
        %6155 = vmatpush1.bf16.msra.mxu0 %v4494
        %6156 = vmatprep.subr.bf16.mxu0 %v4499
        %6157 = vmatpush1.bf16.msra.mxu0 %v4498
        %6158 = vmatprep.subr.bf16.mxu0 %v4503
        %6159 = vmatpush1.bf16.msra.mxu0 %v4502
        %6160 = vmatprep.subr.bf16.mxu0 %v4507
        %6161 = vmatpush1.bf16.msra.mxu0 %v4506
        %6162 = vmatprep.subr.bf16.mxu0 %v4511
        %6163 = vmatpush1.bf16.msra.mxu0 %v4510
        %6164 = vmatprep.subr.bf16.mxu0 %v4515
        %6165 = vmatpush1.bf16.msra.mxu0 %v4514
        %6166 = vmatprep.subr.bf16.mxu0 %v4519
        %6167 = vmatpush1.bf16.msra.mxu0 %v4518
        %6168 = vmatprep.subr.bf16.mxu0 %v4523
        %6169 = vmatpush1.bf16.msra.mxu0 %v4522
        %6170 = vmatprep.subr.bf16.mxu0 %v4527
        %6171 = vmatpush1.bf16.msra.mxu0 %v4526
        %6172 = vmatprep.subr.bf16.mxu0 %v4531
        %6173 = vmatpush1.bf16.msra.mxu0 %v4530
        %6174 = vmatprep.subr.bf16.mxu0 %v4535
        %6175 = vmatpush1.bf16.msra.mxu0 %v4534
        %6176 = vmatprep.subr.bf16.mxu0 %v4539
        %6177 = vmatpush1.bf16.msra.mxu0 %v4538
        %6178 = vmatprep.subr.bf16.mxu0 %v4543
        %6179 = vmatpush1.bf16.msra.mxu0 %v4542
        %6180 = vmatprep.subr.bf16.mxu0 %v4547
        %6181 = vmatpush1.bf16.msra.mxu0 %v4546
        %6182 = vmatprep.subr.bf16.mxu0 %v4551
        %6183 = vmatpush1.bf16.msra.mxu0 %v4550
        %6184 = vmatprep.subr.bf16.mxu0 %v4555
        %6185 = vmatpush1.bf16.msra.mxu0 %v4554
        %6186 = vmatprep.mubr.bf16.mxu0 %v2855
        %6187 = vmatmul.mubr.bf16.gmra.mrb[0].mxu0 %v2854
        %v6188 = vpop.f32.mrb[0].mxu0
        %v6189 = vadd.f32 %v6146, %v6188
        %v6190 = vpop.f32.mrb[0].mxu0
        %v6191 = vadd.f32 %v6148, %v6190
        %v6192 = vpop.f32.mrb[0].mxu0
        %v6193 = vadd.f32 %v6150, %v6192
        %v6194 = vpop.f32.mrb[0].mxu0
        %v6195 = vadd.f32 %v6152, %v6194
        %6196 = vdwg.mxu0
        %6197 = vmatprep.subr.bf16.mxu0 %v4559
        %6198 = vmatpush1.bf16.msra.mxu0 %v4558
        %6199 = vmatprep.subr.bf16.mxu0 %v4563
        %6200 = vmatpush1.bf16.msra.mxu0 %v4562
        %6201 = vmatprep.subr.bf16.mxu0 %v4567
        %6202 = vmatpush1.bf16.msra.mxu0 %v4566
        %6203 = vmatprep.subr.bf16.mxu0 %v4571
        %6204 = vmatpush1.bf16.msra.mxu0 %v4570
        %6205 = vmatprep.subr.bf16.mxu0 %v4575
        %6206 = vmatpush1.bf16.msra.mxu0 %v4574
        %6207 = vmatprep.subr.bf16.mxu0 %v4579
        %6208 = vmatpush1.bf16.msra.mxu0 %v4578
        %6209 = vmatprep.subr.bf16.mxu0 %v4583
        %6210 = vmatpush1.bf16.msra.mxu0 %v4582
        %6211 = vmatprep.subr.bf16.mxu0 %v4587
        %6212 = vmatpush1.bf16.msra.mxu0 %v4586
        %6213 = vmatprep.subr.bf16.mxu0 %v4591
        %6214 = vmatpush1.bf16.msra.mxu0 %v4590
        %6215 = vmatprep.subr.bf16.mxu0 %v4595
        %6216 = vmatpush1.bf16.msra.mxu0 %v4594
        %6217 = vmatprep.subr.bf16.mxu0 %v4599
        %6218 = vmatpush1.bf16.msra.mxu0 %v4598
        %6219 = vmatprep.subr.bf16.mxu0 %v4603
        %6220 = vmatpush1.bf16.msra.mxu0 %v4602
        %6221 = vmatprep.subr.bf16.mxu0 %v4607
        %6222 = vmatpush1.bf16.msra.mxu0 %v4606
        %6223 = vmatprep.subr.bf16.mxu0 %v4611
        %6224 = vmatpush1.bf16.msra.mxu0 %v4610
        %6225 = vmatprep.subr.bf16.mxu0 %v4615
        %6226 = vmatpush1.bf16.msra.mxu0 %v4614
        %6227 = vmatprep.subr.bf16.mxu0 %v4619
        %6228 = vmatpush1.bf16.msra.mxu0 %v4618
        %6229 = vmatprep.mubr.bf16.mxu0 %v2857
        %6230 = vmatmul.mubr.bf16.gmra.mrb[0].mxu0 %v2856
        %v6231 = vpop.f32.mrb[0].mxu0
        %v6232 = vadd.f32 %v6189, %v6231
        %v6233 = vpop.f32.mrb[0].mxu0
        %v6234 = vadd.f32 %v6191, %v6233
        %v6235 = vpop.f32.mrb[0].mxu0
        %v6236 = vadd.f32 %v6193, %v6235
        %v6237 = vpop.f32.mrb[0].mxu0
        %v6238 = vadd.f32 %v6195, %v6237
        %6239 = vdwg.mxu0
        %v6248 = vrot.slane %v6103, 1
        %v6249 = vrot.slane %v6105, 1
        %v6250 = vrot.slane %v6232, 1
        %v6251 = vrot.slane %v6234, 1
        %v6252 = vrot.slane %v6103, 2
        %v6253 = vrot.slane %v6105, 2
        %v6254 = vrot.slane %v6232, 2
        %v6255 = vrot.slane %v6234, 2
        %v6256 = vrot.slane %v6103, 3
        %v6257 = vrot.slane %v6105, 3
        %v6258 = vrot.slane %v6232, 3
        %v6259 = vrot.slane %v6234, 3
        %v6260 = vrot.slane %v6103, 4
        %v6261 = vrot.slane %v6105, 4
        %v6262 = vrot.slane %v6232, 4
        %v6263 = vrot.slane %v6234, 4
        %v6264 = vrot.slane %v6103, 5
        %v6265 = vrot.slane %v6105, 5
        %v6266 = vrot.slane %v6232, 5
        %v6267 = vrot.slane %v6234, 5
        %v6268 = vrot.slane %v6103, 6
        %v6269 = vrot.slane %v6105, 6
        %v6270 = vrot.slane %v6232, 6
        %v6271 = vrot.slane %v6234, 6
        %v6272 = vrot.slane %v6103, 7
        %v6273 = vrot.slane %v6105, 7
        %v6274 = vrot.slane %v6232, 7
        %v6275 = vrot.slane %v6234, 7
        %v6276 = vrot.slane %v6107, 1
        %v6277 = vrot.slane %v6109, 1
        %v6278 = vrot.slane %v6236, 1
        %v6279 = vrot.slane %v6238, 1
        %v6280 = vrot.slane %v6107, 2
        %v6281 = vrot.slane %v6109, 2
        %v6282 = vrot.slane %v6236, 2
        %v6283 = vrot.slane %v6238, 2
        %v6284 = vrot.slane %v6107, 3
        %v6285 = vrot.slane %v6109, 3
        %v6286 = vrot.slane %v6236, 3
        %v6287 = vrot.slane %v6238, 3
        %v6336 = vmul.f32 %v5699, %v6103
        %v6337 = vmul.f32 %v5705, %v6105
        %v6338 = vmul.f32 %v5711, %v6232
        %v6339 = vmul.f32 %v5717, %v6234
        %v6340 = vmul.f32 %v5723, %v6248
        %v6341 = vmul.f32 %v5729, %v6249
        %v6342 = vmul.f32 %v5735, %v6250
        %v6343 = vmul.f32 %v5741, %v6251
        %v6344 = vmul.f32 %v5747, %v6252
        %v6345 = vmul.f32 %v5753, %v6253
        %v6346 = vmul.f32 %v5759, %v6254
        %v6347 = vmul.f32 %v5765, %v6255
        %v6348 = vmul.f32 %v5771, %v6256
        %v6349 = vmul.f32 %v5777, %v6257
        %v6350 = vmul.f32 %v5783, %v6258
        %v6351 = vmul.f32 %v5789, %v6259
        %v6352 = vmul.f32 %v5795, %v6260
        %v6353 = vmul.f32 %v5801, %v6261
        %v6354 = vmul.f32 %v5807, %v6262
        %v6355 = vmul.f32 %v5813, %v6263
        %v6356 = vmul.f32 %v5819, %v6264
        %v6357 = vmul.f32 %v5825, %v6265
        %v6358 = vmul.f32 %v5831, %v6266
        %v6359 = vmul.f32 %v5837, %v6267
        %v6360 = vmul.f32 %v5843, %v6268
        %v6361 = vmul.f32 %v5849, %v6269
        %v6362 = vmul.f32 %v5855, %v6270
        %v6363 = vmul.f32 %v5861, %v6271
        %v6364 = vmul.f32 %v5867, %v6272
        %v6365 = vmul.f32 %v5873, %v6273
        %v6366 = vmul.f32 %v5879, %v6274
        %v6367 = vmul.f32 %v5885, %v6275
        %v6368 = vmul.f32 %v5891, %v6107
        %v6369 = vmul.f32 %v5897, %v6109
        %v6370 = vmul.f32 %v5903, %v6236
        %v6371 = vmul.f32 %v5909, %v6238
        %v6372 = vmul.f32 %v5915, %v6276
        %v6373 = vmul.f32 %v5921, %v6277
        %v6374 = vmul.f32 %v5927, %v6278
        %v6375 = vmul.f32 %v5933, %v6279
        %v6376 = vmul.f32 %v5939, %v6280
        %v6377 = vmul.f32 %v5945, %v6281
        %v6378 = vmul.f32 %v5951, %v6282
        %v6379 = vmul.f32 %v5957, %v6283
        %v6380 = vmul.f32 %v5963, %v6284
        %v6381 = vmul.f32 %v5969, %v6285
        %v6382 = vmul.f32 %v5975, %v6286
        %v6383 = vmul.f32 %v5981, %v6287
        %v6432 = vrot.slane %v6340, 7
        %v6433 = vsel %vm3315, %v6432, %v6336
        %v6434 = vrot.slane %v6344, 6
        %v6435 = vsel %vm3318, %v6434, %v6433
        %v6436 = vrot.slane %v6348, 5
        %v6437 = vsel %vm3321, %v6436, %v6435
        %v6438 = vrot.slane %v6352, 4
        %v6439 = vsel %vm3324, %v6438, %v6437
        %v6440 = vrot.slane %v6356, 3
        %v6441 = vsel %vm3327, %v6440, %v6439
        %v6442 = vrot.slane %v6360, 2
        %v6443 = vsel %vm3330, %v6442, %v6441
        %v6444 = vrot.slane %v6364, 1
        %v6445 = vsel %vm3333, %v6444, %v6443
        %v6446 = vrot.slane %v6341, 7
        %v6447 = vsel %vm3315, %v6446, %v6337
        %v6448 = vrot.slane %v6345, 6
        %v6449 = vsel %vm3318, %v6448, %v6447
        %v6450 = vrot.slane %v6349, 5
        %v6451 = vsel %vm3321, %v6450, %v6449
        %v6452 = vrot.slane %v6353, 4
        %v6453 = vsel %vm3324, %v6452, %v6451
        %v6454 = vrot.slane %v6357, 3
        %v6455 = vsel %vm3327, %v6454, %v6453
        %v6456 = vrot.slane %v6361, 2
        %v6457 = vsel %vm3330, %v6456, %v6455
        %v6458 = vrot.slane %v6365, 1
        %v6459 = vsel %vm3333, %v6458, %v6457
        %v6460 = vrot.slane %v6342, 7
        %v6461 = vsel %vm3315, %v6460, %v6338
        %v6462 = vrot.slane %v6346, 6
        %v6463 = vsel %vm3318, %v6462, %v6461
        %v6464 = vrot.slane %v6350, 5
        %v6465 = vsel %vm3321, %v6464, %v6463
        %v6466 = vrot.slane %v6354, 4
        %v6467 = vsel %vm3324, %v6466, %v6465
        %v6468 = vrot.slane %v6358, 3
        %v6469 = vsel %vm3327, %v6468, %v6467
        %v6470 = vrot.slane %v6362, 2
        %v6471 = vsel %vm3330, %v6470, %v6469
        %v6472 = vrot.slane %v6366, 1
        %v6473 = vsel %vm3333, %v6472, %v6471
        %v6474 = vrot.slane %v6343, 7
        %v6475 = vsel %vm3315, %v6474, %v6339
        %v6476 = vrot.slane %v6347, 6
        %v6477 = vsel %vm3318, %v6476, %v6475
        %v6478 = vrot.slane %v6351, 5
        %v6479 = vsel %vm3321, %v6478, %v6477
        %v6480 = vrot.slane %v6355, 4
        %v6481 = vsel %vm3324, %v6480, %v6479
        %v6482 = vrot.slane %v6359, 3
        %v6483 = vsel %vm3327, %v6482, %v6481
        %v6484 = vrot.slane %v6363, 2
        %v6485 = vsel %vm3330, %v6484, %v6483
        %v6486 = vrot.slane %v6367, 1
        %v6487 = vsel %vm3333, %v6486, %v6485
        %v6488 = vrot.slane %v6372, 7
        %v6489 = vsel %vm3315, %v6488, %v6368
        %v6490 = vrot.slane %v6376, 6
        %v6491 = vsel %vm3318, %v6490, %v6489
        %v6492 = vrot.slane %v6380, 5
        %v6493 = vsel %vm3321, %v6492, %v6491
        %v6494 = vrot.slane %v6373, 7
        %v6495 = vsel %vm3315, %v6494, %v6369
        %v6496 = vrot.slane %v6377, 6
        %v6497 = vsel %vm3318, %v6496, %v6495
        %v6498 = vrot.slane %v6381, 5
        %v6499 = vsel %vm3321, %v6498, %v6497
        %v6500 = vrot.slane %v6374, 7
        %v6501 = vsel %vm3315, %v6500, %v6370
        %v6502 = vrot.slane %v6378, 6
        %v6503 = vsel %vm3318, %v6502, %v6501
        %v6504 = vrot.slane %v6382, 5
        %v6505 = vsel %vm3321, %v6504, %v6503
        %v6506 = vrot.slane %v6375, 7
        %v6507 = vsel %vm3315, %v6506, %v6371
        %v6508 = vrot.slane %v6379, 6
        %v6509 = vsel %vm3318, %v6508, %v6507
        %v6510 = vrot.slane %v6383, 5
        %v6511 = vsel %vm3321, %v6510, %v6509
        %v6520 = vadd.f32 %v6445, %v6459
        %v6521 = vadd.f32 %v6520, %v6473
        %v6522 = vadd.f32 %v6521, %v6487
        %v6523 = vsel %vm3412, %v6493, 0.0
        %v6524 = vadd.f32 %v6522, %v6523
        %v6525 = vsel %vm3412, %v6499, 0.0
        %v6526 = vadd.f32 %v6524, %v6525
        %v6527 = vsel %vm3412, %v6505, 0.0
        %v6528 = vadd.f32 %v6526, %v6527
        %v6529 = vsel %vm3412, %v6511, 0.0
        %v6530 = vadd.f32 %v6528, %v6529
        %6531 = vadd.xlane.f32.xlu0 %v6530
        %v6532 = vpop.xlane.xlu0 %6531
        %v6533 = vrot.slane %v6532, 4
        %v6534 = vadd.f32 %v6532, %v6533
        %v6535 = vrot.slane %v6534, 2
        %v6536 = vadd.f32 %v6534, %v6535
        %v6537 = vrot.slane %v6536, 1
        %v6538 = vadd.f32 %v6536, %v6537
        %s6539 = vtos %v6538
        %s6540 = sadd.f32 %s6539, %s295
        %s6541 = sxor.u32 %s6540, 2147483648
        %v6542 = vstv %s6541
        %v6543 = vmul.f32 %v6542, 1.442695
        %v6544 = vpow.pop %v6543
        %s6545 = vtos %v6544
        %s6546 = sadd.f32 %s6545, 1.0
        %v6547 = vstv %s6546
        %v6548 = vrcp.pop %v6547
        %s6549 = vtos %v6548
        %v6550 = vstv %s6549
        %s6551 = scalar_lea.vmem %s284, 8 [#allocation10]
        %6552 = vst [vmem:[%s6551] sm:$0xff] %v6550
        %s6553 = sand.u32 %s127, 1
        %s6554 = scalar_lea.sflag [#allocation4], %s6553
        %s6555 = sand.u32 %s127, 1
        %s6556 = smul.addr %s6555, 16
        %s6557 = scalar_lea.vmem [#allocation10], %s6556
        // Predicated region
        $region53: #{tpu_custom_call.1} parent=35 // pred_check
          %p6558 = pneg %p137
        $region54: #{tpu_custom_call.1} parent=35 // pred_check_branch
          %6560 = sbr.rel (%p6558) target = $region56
        $region55: #{tpu_custom_call.1} parent=35 // pred_region
          %s6561 = smul.u32 2, %s25
          %s6563 = ssub.s32 256, 256
          %6564 = vsyncadd %s6554, %s6563
          %s6565 = smul.addr %s6561, 128
          %s6566 = scalar_lea.hbm %s4, %s6565
          %s6567 = sshll.u32 %s6557, 4
          %s6568 = int_to_ptr.vmem [resolvable:$true] %s6567
          %6573 = dma.vmem_to_hbm [thread:$0]  %s6568, 256, %s6566, %s6554, 128, 128, 8
        $region56: #{tpu_custom_call.1} parent=35 // pred_fallthru
          _
      $region36: #{tpu_custom_call.1} parent=5 // pred_fallthru
        _
      %p6574 = scmp.le.s32.totalorder 2, %s20
      // Predicated region
      $region57: #{tpu_custom_call.1} parent=5 // pred_check
        %p6575 = pneg %p6574
      $region58: #{tpu_custom_call.1} parent=5 // pred_check_branch
        %6577 = sbr.rel (%p6575) target = $region60
      $region59: #{tpu_custom_call.1} parent=5 // pred_region
        %s6578 = ssub.s32 %s20, 2
        // Predicated region
        $region61: #{tpu_custom_call.1} parent=59 // pred_check
          %p6579 = pneg %p143
        $region62: #{tpu_custom_call.1} parent=59 // pred_check_branch
          %6581 = sbr.rel (%p6579) target = $region64
        $region63: #{tpu_custom_call.1} parent=59 // pred_region
          %s6582 = sand.u32 %s128, 1
          %s6583 = scalar_lea.sflag [#allocation4], %s6582
          %s6584 = sand.u32 %s128, 1
          %s6585 = smul.addr %s6584, 16
          %s6586 = scalar_lea.vmem [#allocation10], %s6585
          %6587 = dma.done %s6583, 256
        $region64: #{tpu_custom_call.1} parent=59 // pred_fallthru
          _
      $region60: #{tpu_custom_call.1} parent=5 // pred_fallthru
        _
    $region6: #{tpu_custom_call.1} parent=1 // loop_footer
      %s24 = sadd.s32 1, %s20
    $region7: #{tpu_custom_call.1} parent=1 // loop_footer_branch
      %19 = sbr.rel target = $region3
    $region8: #{tpu_custom_call.1} parent=1 // loop_exit
      _
    %6588 = vsyncpa [#allocation3], 1
    %s6589 = scalar_lea.sflag [#allocation3], 1
    %6590 = vsyncpa %s6589, 1
    %6591 = vsyncpa [#allocation6], 1
    %s6592 = scalar_lea.sflag [#allocation6], 1
    %6593 = vsyncpa %s6592, 1
    %6594 = vsyncpa [#allocation9], 1
    %6595 = vsyncpa [#allocation4], 1
    %s6596 = scalar_lea.sflag [#allocation4], 1
    %6597 = vsyncpa %s6596, 1

</llo_original>
